<compile_context>
chip_gen: v5e
topology: v5e:2x2
jax: 0.10.0
libtpu: 0.0.40
codegen_flags: <defaults>
</compile_context>

<pallas_src>
import jax
import jax.numpy as jnp
from jax.experimental import pallas as pl
from jax.experimental.pallas import tpu as pltpu

_NPIX = 784            # 28*28 pixels per image, lane axis inside the kernel
_NPATCH = 196          # 14*14 patches
_KQ = 755              # max anchor lane (56*13 + 2*13 = 754) + 1
_NH = 128              # padded hidden / output lane width


# ----------------------------- Pallas kernel --------------------------------
def hybrid_kernel(x_ref, wb_ref, w1_ref, b1_ref, w2_ref, b2_ref, out_ref):
    # x_ref : (TB, 784) VMEM bf16 -- raw flattened images (lane = 28*ir + ic)
    # wb_ref: (1, 784)  VMEM f32  -- per-lane trainable RX angle qw[2*(ir%2)+(ic%2)]
    # w1_ref: (755, 128) VMEM bf16 -- clayer_1 rows scattered onto anchor lanes, N padded
    # b1_ref: (1, 128)  VMEM f32
    # w2_ref: (128, 128) VMEM bf16 -- fc4 weight, zero padded
    # b2_ref: (1, 128)  VMEM f32
    # out_ref:(TB, 128) VMEM bf16 -- lane-dense output; cols 10..127 are zero

    x = x_ref[...].astype(jnp.float32)              # (TB, 784), f32 math for cos
    c = jnp.cos(x + wb_ref[...])                    # one transcendental per pixel
    a = 1.0 - c                                     # = 2*sin^2(theta/2)

    # Patch (r, c): components 0..3 live at lanes L0, L0+1, L0+28, L0+29 with
    # anchor L0 = 56*r + 2*c.  Align them with static (unaligned) lane slices;
    # only anchor lanes carry nonzero rows in w1_ref, the rest is ignored.
    a0 = a[:, 0:_KQ]
    a1 = a[:, 1:1 + _KQ]
    a2 = a[:, 28:28 + _KQ]
    c3 = c[:, 29:29 + _KQ]

    # <Z_3> = cos(t3) * (1 - 0.25*(1-cos t0)*(1-cos t1)*(1-cos t2))
    q = c3 * (1.0 - 0.25 * (a0 * a1 * a2))          # (TB, 755) f32, valid at anchors

    # clayer_1 (Linear 196->30, padded to 128 lanes), bf16 MXU, f32 accumulate, + ReLU
    h = jnp.dot(q.astype(jnp.bfloat16), w1_ref[...],
                preferred_element_type=jnp.float32) + b1_ref[...]
    h = jnp.maximum(h, 0.0)

    # drop3: Dropout(0.5) -> identity (inference semantics)
    # TODO(synk): training-mode dropout (pltpu.prng_seed/prng_random_bits mask + 2x scale).

    # fc4 (Linear 30->10, padded to 128 lanes), lane-dense bf16 store
    out = jnp.dot(h.astype(jnp.bfloat16), w2_ref[...],
                  preferred_element_type=jnp.float32) + b2_ref[...]
    out_ref[...] = out.astype(out_ref.dtype)


# ------------------------------- glue / wrapper ------------------------------
def _prep_padded_weights(params):
    """Build kernel-side constants: per-lane angle offsets and padded (bf16) weights."""
    qw, w1, b1, w2, b2 = (params["qw"], params["w1"], params["b1"],
                          params["w2"], params["b2"])
    # lane L = 28*ir + ic holds patch component k = 2*(ir%2) + (ic%2)
    lane = jnp.arange(_NPIX)
    comp = 2 * ((lane // 28) % 2) + (lane % 2)
    wb = qw[comp].reshape(1, _NPIX).astype(jnp.float32)

    # scatter clayer_1 rows onto anchor lanes 56*r + 2*c; zero-pad N 30 -> 128.
    # NOTE: padded rows/cols must stay EXACTLY zero (they neutralize junk lanes).
    p = jnp.arange(_NPATCH)
    anchor = 56 * (p // 14) + 2 * (p % 14)                       # in [0, 754]
    w1_big = jnp.zeros((_KQ, _NH), jnp.bfloat16).at[anchor, :30].set(
        w1.astype(jnp.bfloat16))
    b1_big = jnp.zeros((1, _NH), jnp.float32).at[:, :30].set(b1)
    w2_big = jnp.zeros((_NH, _NH), jnp.bfloat16).at[:30, :10].set(
        w2.astype(jnp.bfloat16))
    b2_big = jnp.zeros((1, _NH), jnp.float32).at[:, :10].set(b2)
    return wb, w1_big, b1_big, w2_big, b2_big


def _select_tiling():
    """Per-chip batch tile and scoped-VMEM limit.

    v5e/v6e (128 MiB VMEM): TB=1024, 64 MiB limit (per-step overhead amortized).
    v7x (64 MiB per TensorCore): TB=512, 48 MiB limit.
    """
    try:
        vmem = pltpu.get_tpu_info().vmem_capacity_bytes
    except Exception:
        vmem = 64 * 1024 * 1024
    if vmem >= 96 * 1024 * 1024:
        return 1024, 64 * 1024 * 1024
    return 512, 48 * 1024 * 1024


def _build_call(tb, b_pad, vmem_limit, single_buffer_consts):
    def const_spec(shape):
        if single_buffer_consts:
            # grid-invariant operands: one buffer is enough (they are never re-DMA'd)
            return pl.BlockSpec(shape, lambda i: (0, 0), pipeline_mode=pl.Buffered(1))
        return pl.BlockSpec(shape, lambda i: (0, 0))

    return pl.pallas_call(
        hybrid_kernel,
        out_shape=jax.ShapeDtypeStruct((b_pad, _NH), jnp.bfloat16),
        grid_spec=pltpu.PrefetchScalarGridSpec(
            num_scalar_prefetch=0,
            grid=(pl.cdiv(b_pad, tb),),
            in_specs=[
                pl.BlockSpec((tb, _NPIX), lambda i: (i, 0)),     # x tile (bf16)
                const_spec((1, _NPIX)),                          # wb   (resident)
                const_spec((_KQ, _NH)),                          # w1   (resident, bf16)
                const_spec((1, _NH)),                            # b1   (resident)
                const_spec((_NH, _NH)),                          # w2   (resident, bf16)
                const_spec((1, _NH)),                            # b2   (resident)
            ],
            out_specs=pl.BlockSpec((tb, _NH), lambda i: (i, 0)),
        ),
        compiler_params=pltpu.CompilerParams(
            dimension_semantics=("parallel",),                   # megacore split on v7x
            vmem_limit_bytes=vmem_limit,
        ),
    )


def hybrid_model_forward(x, params, tb_max=None):
    """x: (B, 784) flattened 28x28 images. Returns (B, 10) float32 logits."""
    b = x.shape[0]
    b_pad = ((b + 7) // 8) * 8                     # keep sublane dim a multiple of 8

    # Consume x as bf16 at the HBM boundary (ideally it already arrives bf16;
    # MNIST pixels are 8-bit at the source so nothing is lost).
    if x.dtype != jnp.bfloat16:
        x = x.astype(jnp.bfloat16)
    if b_pad != b:
        x = jnp.pad(x, ((0, b_pad - b), (0, 0)))

    if tb_max is None:
        tb_max, vmem_limit = _select_tiling()
    else:
        vmem_limit = 48 * 1024 * 1024 if tb_max <= 512 else 64 * 1024 * 1024
    tb = min(tb_max, b_pad)
    # v7x megacore: the "parallel" axis only helps if there is >=1 block per core;
    # split the batch into at least 2 tiles whenever there are enough rows.
    if b_pad >= 16 and b_pad <= tb:
        tb = ((b_pad // 2 + 7) // 8) * 8

    consts = _prep_padded_weights(params)

    try:
        out = _build_call(tb, b_pad, vmem_limit, single_buffer_consts=True)(x, *consts)
    except Exception:
        # pipeline_mode=pl.Buffered(1) unsupported on this jax version -> default specs
        out = _build_call(tb, b_pad, vmem_limit, single_buffer_consts=False)(x, *consts)

    # Under jit this slice fuses into the consumer; standalone it is one small copy.
    return out[:b, :10].astype(jnp.float32)


def init_params(key):
    k_qw, k_w1, k_b1, k_w2, k_b2 = jax.random.split(key, 5)
    # qlayer weights: one layer of 4 RX angles, uniform in [0, 2*pi)
    qw = jax.random.uniform(k_qw, (4,), jnp.float32, 0.0, 2.0 * jnp.pi)
    # clayer_1: Linear(196, 30), torch default init U(-1/sqrt(196), 1/sqrt(196))
    lim1 = 1.0 / jnp.sqrt(196.0)
    w1 = jax.random.uniform(k_w1, (196, 30), jnp.float32, -lim1, lim1)
    b1 = jax.random.uniform(k_b1, (1, 30), jnp.float32, -lim1, lim1)
    # fc4: Linear(30, 10), torch default init U(-1/sqrt(30), 1/sqrt(30))
    lim2 = 1.0 / jnp.sqrt(30.0)
    w2 = jax.random.uniform(k_w2, (30, 10), jnp.float32, -lim2, lim2)
    b2 = jax.random.uniform(k_b2, (1, 10), jnp.float32, -lim2, lim2)
    return {"qw": qw, "w1": w1, "b1": b1, "w2": w2, "b2": b2}


# Pure-JAX f32 reference with the explicit `filtering` patch extraction and the
# sin^2 form of the circuit, to cross-check the closed form and the in-kernel
# lane arithmetic.
def filtering_jax(x):
    """Torch `filtering`: (B, 784) -> (B, 14, 14, 4) 2x2 patches."""
    b = x.shape[0]
    p = x.reshape(b, 28, 28).reshape(b, 14, 2, 14, 2)
    p = jnp.swapaxes(p, 2, 3)                       # (B, 14, 14, 2, 2)
    return p.reshape(b, 14, 14, 4)


def reference_forward(x, params):
    b = x.shape[0]
    patches = filtering_jax(x).reshape(b, 196, 4)
    t = patches + params["qw"][None, None, :]
    p111 = jnp.prod(jnp.sin(t[..., :3] * 0.5) ** 2, axis=-1)
    q_out = jnp.cos(t[..., 3]) * (1.0 - 2.0 * p111)           # (B, 196)
    h = jnp.maximum(q_out @ params["w1"] + params["b1"], 0.0)
    return h @ params["w2"] + params["b2"]


if __name__ == "__main__":
    key = jax.random.PRNGKey(0)
    k_x, k_p = jax.random.split(key)
    B = 2
    x = jax.random.uniform(k_x, (B, 784), jnp.float32)        # MNIST-like, flattened 28x28
    params = init_params(k_p)

    out = hybrid_model_forward(x, params)
    out = jax.block_until_ready(out)

    ref = reference_forward(x, params)
    assert out.shape == (B, 10)
    # bf16 input / matmuls / output vs f32 reference -> loosened tolerance
    # (structural bugs would show up as O(0.3+) errors; bf16 noise is ~1e-2).
    assert jnp.allclose(out, ref, atol=1e-1, rtol=1e-1), "mismatch vs pure-JAX reference"

    print("KERNEL_OK")
</pallas_src>

<mosaic_0001>
module attributes {stable_mosaic.version = 11 : i64} {
  func.func @hybrid_kernel(%arg0: i32, %arg1: memref<8x784xbf16, #tpu.memory_space<vmem>>, %arg2: memref<1x784xf32, #tpu.memory_space<vmem>>, %arg3: memref<755x128xbf16, #tpu.memory_space<vmem>>, %arg4: memref<1x128xf32, #tpu.memory_space<vmem>>, %arg5: memref<128x128xbf16, #tpu.memory_space<vmem>>, %arg6: memref<1x128xf32, #tpu.memory_space<vmem>>, %arg7: memref<8x128xbf16, #tpu.memory_space<vmem>>) attributes {dimension_semantics = [#tpu.dimension_semantics<parallel>], iteration_bounds = array<i64: 1>, scalar_prefetch = 0 : i64, scratch_operands = 0 : i64, tpu.core_type = #tpu.core_type<tc>, window_params = [{transform_indices = @transform_0, window_bounds = array<i64: 8, 784>}, {pipeline_mode = #tpu.pipeline_mode<synchronous>, transform_indices = @transform_1, window_bounds = array<i64: 1, 784>}, {pipeline_mode = #tpu.pipeline_mode<synchronous>, transform_indices = @transform_2, window_bounds = array<i64: 755, 128>}, {pipeline_mode = #tpu.pipeline_mode<synchronous>, transform_indices = @transform_3, window_bounds = array<i64: 1, 128>}, {pipeline_mode = #tpu.pipeline_mode<synchronous>, transform_indices = @transform_4, window_bounds = array<i64: 128, 128>}, {pipeline_mode = #tpu.pipeline_mode<synchronous>, transform_indices = @transform_5, window_bounds = array<i64: 1, 128>}, {transform_indices = @transform_6, window_bounds = array<i64: 8, 128>}]} {
    %c0 = arith.constant 0 : index
    %c0_0 = arith.constant 0 : index
    %0 = vector.load %arg1[%c0, %c0_0] : memref<8x784xbf16, #tpu.memory_space<vmem>>, vector<8x784xbf16>
    %1 = arith.extf %0 : vector<8x784xbf16> to vector<8x784xf32>
    %c0_1 = arith.constant 0 : index
    %c0_2 = arith.constant 0 : index
    %2 = vector.load %arg2[%c0_1, %c0_2] : memref<1x784xf32, #tpu.memory_space<vmem>>, vector<1x784xf32>
    %3 = vector.broadcast %2 : vector<1x784xf32> to vector<8x784xf32>
    %4 = arith.addf %1, %3 : vector<8x784xf32>
    %5 = math.cos %4 : vector<8x784xf32>
    %cst = arith.constant 1.000000e+00 : f32
    %6 = vector.broadcast %cst : f32 to vector<8x784xf32>
    %7 = arith.subf %6, %5 : vector<8x784xf32>
    %8 = vector.extract_strided_slice %7 {offsets = [0, 0], sizes = [8, 755], strides = [1, 1]} : vector<8x784xf32> to vector<8x755xf32>
    %9 = vector.extract_strided_slice %7 {offsets = [0, 1], sizes = [8, 755], strides = [1, 1]} : vector<8x784xf32> to vector<8x755xf32>
    %10 = vector.extract_strided_slice %7 {offsets = [0, 28], sizes = [8, 755], strides = [1, 1]} : vector<8x784xf32> to vector<8x755xf32>
    %11 = vector.extract_strided_slice %5 {offsets = [0, 29], sizes = [8, 755], strides = [1, 1]} : vector<8x784xf32> to vector<8x755xf32>
    %12 = arith.mulf %8, %9 : vector<8x755xf32>
    %13 = arith.mulf %12, %10 : vector<8x755xf32>
    %cst_3 = arith.constant 2.500000e-01 : f32
    %14 = vector.broadcast %cst_3 : f32 to vector<8x755xf32>
    %15 = arith.mulf %14, %13 : vector<8x755xf32>
    %cst_4 = arith.constant 1.000000e+00 : f32
    %16 = vector.broadcast %cst_4 : f32 to vector<8x755xf32>
    %17 = arith.subf %16, %15 : vector<8x755xf32>
    %18 = arith.mulf %11, %17 : vector<8x755xf32>
    %19 = arith.truncf %18 : vector<8x755xf32> to vector<8x755xbf16>
    %c0_5 = arith.constant 0 : index
    %c0_6 = arith.constant 0 : index
    %20 = vector.load %arg3[%c0_5, %c0_6] : memref<755x128xbf16, #tpu.memory_space<vmem>>, vector<755x128xbf16>
    %cst_7 = arith.constant dense<0.000000e+00> : vector<8x128xf32>
    %21 = tpu.matmul %19, %20, %cst_7 {dimension_numbers = #tpu.dot_dimension_numbers<[1], [0], [0], [1], [0, 0, 1, 1], [], []>} : vector<8x755xbf16>, vector<755x128xbf16>, vector<8x128xf32> -> vector<8x128xf32>
    %c0_8 = arith.constant 0 : index
    %c0_9 = arith.constant 0 : index
    %22 = vector.load %arg4[%c0_8, %c0_9] : memref<1x128xf32, #tpu.memory_space<vmem>>, vector<1x128xf32>
    %23 = vector.broadcast %22 : vector<1x128xf32> to vector<8x128xf32>
    %24 = arith.addf %21, %23 : vector<8x128xf32>
    %cst_10 = arith.constant 0.000000e+00 : f32
    %25 = vector.broadcast %cst_10 : f32 to vector<8x128xf32>
    %26 = arith.maximumf %24, %25 : vector<8x128xf32>
    %27 = arith.truncf %26 : vector<8x128xf32> to vector<8x128xbf16>
    %c0_11 = arith.constant 0 : index
    %c0_12 = arith.constant 0 : index
    %28 = vector.load %arg5[%c0_11, %c0_12] : memref<128x128xbf16, #tpu.memory_space<vmem>>, vector<128x128xbf16>
    %cst_13 = arith.constant dense<0.000000e+00> : vector<8x128xf32>
    %29 = tpu.matmul %27, %28, %cst_13 {dimension_numbers = #tpu.dot_dimension_numbers<[1], [0], [0], [1], [0, 0, 1, 1], [], []>} : vector<8x128xbf16>, vector<128x128xbf16>, vector<8x128xf32> -> vector<8x128xf32>
    %c0_14 = arith.constant 0 : index
    %c0_15 = arith.constant 0 : index
    %30 = vector.load %arg6[%c0_14, %c0_15] : memref<1x128xf32, #tpu.memory_space<vmem>>, vector<1x128xf32>
    %31 = vector.broadcast %30 : vector<1x128xf32> to vector<8x128xf32>
    %32 = arith.addf %29, %31 : vector<8x128xf32>
    %33 = arith.truncf %32 : vector<8x128xf32> to vector<8x128xbf16>
    %c0_16 = arith.constant 0 : index
    %c0_17 = arith.constant 0 : index
    %34 = vector.load %arg7[%c0_16, %c0_17] : memref<8x128xbf16, #tpu.memory_space<vmem>>, vector<8x128xbf16>
    tpu.vector_store %arg7[%c0_16, %c0_17], %33 {strides = array<i32>} : memref<8x128xbf16, #tpu.memory_space<vmem>>, vector<8x128xbf16>,
    return
  }
  func.func @transform_0(%arg0: i32) -> (i32, i32) {
    %c0_i32 = arith.constant 0 : i32
    %c0_i32_0 = arith.constant 0 : i32
    return %arg0, %c0_i32 : i32, i32
  }
  func.func @transform_1(%arg0: i32) -> (i32, i32) {
    %c0_i32 = arith.constant 0 : i32
    %c0_i32_0 = arith.constant 0 : i32
    %c0_i32_1 = arith.constant 0 : i32
    return %c0_i32, %c0_i32_0 : i32, i32
  }
  func.func @transform_2(%arg0: i32) -> (i32, i32) {
    %c0_i32 = arith.constant 0 : i32
    %c0_i32_0 = arith.constant 0 : i32
    %c0_i32_1 = arith.constant 0 : i32
    return %c0_i32, %c0_i32_0 : i32, i32
  }
  func.func @transform_3(%arg0: i32) -> (i32, i32) {
    %c0_i32 = arith.constant 0 : i32
    %c0_i32_0 = arith.constant 0 : i32
    %c0_i32_1 = arith.constant 0 : i32
    return %c0_i32, %c0_i32_0 : i32, i32
  }
  func.func @transform_4(%arg0: i32) -> (i32, i32) {
    %c0_i32 = arith.constant 0 : i32
    %c0_i32_0 = arith.constant 0 : i32
    %c0_i32_1 = arith.constant 0 : i32
    return %c0_i32, %c0_i32_0 : i32, i32
  }
  func.func @transform_5(%arg0: i32) -> (i32, i32) {
    %c0_i32 = arith.constant 0 : i32
    %c0_i32_0 = arith.constant 0 : i32
    %c0_i32_1 = arith.constant 0 : i32
    return %c0_i32, %c0_i32_0 : i32, i32
  }
  func.func @transform_6(%arg0: i32) -> (i32, i32) {
    %c0_i32 = arith.constant 0 : i32
    %c0_i32_0 = arith.constant 0 : i32
    return %arg0, %c0_i32 : i32, i32
  }
}

module attributes {stable_mosaic.version = 11 : i64} {
  func.func @hybrid_kernel(%arg0: i32, %arg1: memref<8x784xbf16, #tpu.memory_space<vmem>>, %arg2: memref<1x784xf32, #tpu.memory_space<vmem>>, %arg3: memref<755x128xbf16, #tpu.memory_space<vmem>>, %arg4: memref<1x128xf32, #tpu.memory_space<vmem>>, %arg5: memref<128x128xbf16, #tpu.memory_space<vmem>>, %arg6: memref<1x128xf32, #tpu.memory_space<vmem>>, %arg7: memref<8x128xbf16, #tpu.memory_space<vmem>>) attributes {dimension_semantics = [#tpu.dimension_semantics<parallel>], iteration_bounds = array<i64: 1>, scalar_prefetch = 0 : i64, scratch_operands = 0 : i64, tpu.core_type = #tpu.core_type<tc>, window_params = [{transform_indices = @transform_0, window_bounds = array<i64: 8, 784>}, {pipeline_mode = #tpu.pipeline_mode<synchronous>, transform_indices = @transform_1, window_bounds = array<i64: 1, 784>}, {pipeline_mode = #tpu.pipeline_mode<synchronous>, transform_indices = @transform_2, window_bounds = array<i64: 755, 128>}, {pipeline_mode = #tpu.pipeline_mode<synchronous>, transform_indices = @transform_3, window_bounds = array<i64: 1, 128>}, {pipeline_mode = #tpu.pipeline_mode<synchronous>, transform_indices = @transform_4, window_bounds = array<i64: 128, 128>}, {pipeline_mode = #tpu.pipeline_mode<synchronous>, transform_indices = @transform_5, window_bounds = array<i64: 1, 128>}, {transform_indices = @transform_6, window_bounds = array<i64: 8, 128>}]} {
    %c0 = arith.constant 0 : index
    %c0_0 = arith.constant 0 : index
    %0 = vector.load %arg1[%c0, %c0_0] : memref<8x784xbf16, #tpu.memory_space<vmem>>, vector<8x784xbf16>
    %1 = arith.extf %0 : vector<8x784xbf16> to vector<8x784xf32>
    %c0_1 = arith.constant 0 : index
    %c0_2 = arith.constant 0 : index
    %2 = vector.load %arg2[%c0_1, %c0_2] : memref<1x784xf32, #tpu.memory_space<vmem>>, vector<1x784xf32>
    %3 = vector.broadcast %2 : vector<1x784xf32> to vector<8x784xf32>
    %4 = arith.addf %1, %3 : vector<8x784xf32>
    %5 = math.cos %4 : vector<8x784xf32>
    %cst = arith.constant 1.000000e+00 : f32
    %6 = vector.broadcast %cst : f32 to vector<8x784xf32>
    %7 = arith.subf %6, %5 : vector<8x784xf32>
    %8 = vector.extract_strided_slice %7 {offsets = [0, 0], sizes = [8, 755], strides = [1, 1]} : vector<8x784xf32> to vector<8x755xf32>
    %9 = vector.extract_strided_slice %7 {offsets = [0, 1], sizes = [8, 755], strides = [1, 1]} : vector<8x784xf32> to vector<8x755xf32>
    %10 = vector.extract_strided_slice %7 {offsets = [0, 28], sizes = [8, 755], strides = [1, 1]} : vector<8x784xf32> to vector<8x755xf32>
    %11 = vector.extract_strided_slice %5 {offsets = [0, 29], sizes = [8, 755], strides = [1, 1]} : vector<8x784xf32> to vector<8x755xf32>
    %12 = arith.mulf %8, %9 : vector<8x755xf32>
    %13 = arith.mulf %12, %10 : vector<8x755xf32>
    %cst_3 = arith.constant 2.500000e-01 : f32
    %14 = vector.broadcast %cst_3 : f32 to vector<8x755xf32>
    %15 = arith.mulf %14, %13 : vector<8x755xf32>
    %cst_4 = arith.constant 1.000000e+00 : f32
    %16 = vector.broadcast %cst_4 : f32 to vector<8x755xf32>
    %17 = arith.subf %16, %15 : vector<8x755xf32>
    %18 = arith.mulf %11, %17 : vector<8x755xf32>
    %19 = arith.truncf %18 : vector<8x755xf32> to vector<8x755xbf16>
    %c0_5 = arith.constant 0 : index
    %c0_6 = arith.constant 0 : index
    %20 = vector.load %arg3[%c0_5, %c0_6] : memref<755x128xbf16, #tpu.memory_space<vmem>>, vector<755x128xbf16>
    %cst_7 = arith.constant dense<0.000000e+00> : vector<8x128xf32>
    %21 = tpu.matmul %19, %20, %cst_7 {dimension_numbers = #tpu.dot_dimension_numbers<[1], [0], [0], [1], [0, 0, 1, 1], [], []>} : vector<8x755xbf16>, vector<755x128xbf16>, vector<8x128xf32> -> vector<8x128xf32>
    %c0_8 = arith.constant 0 : index
    %c0_9 = arith.constant 0 : index
    %22 = vector.load %arg4[%c0_8, %c0_9] : memref<1x128xf32, #tpu.memory_space<vmem>>, vector<1x128xf32>
    %23 = vector.broadcast %22 : vector<1x128xf32> to vector<8x128xf32>
    %24 = arith.addf %21, %23 : vector<8x128xf32>
    %cst_10 = arith.constant 0.000000e+00 : f32
    %25 = vector.broadcast %cst_10 : f32 to vector<8x128xf32>
    %26 = arith.maximumf %24, %25 : vector<8x128xf32>
    %27 = arith.truncf %26 : vector<8x128xf32> to vector<8x128xbf16>
    %c0_11 = arith.constant 0 : index
    %c0_12 = arith.constant 0 : index
    %28 = vector.load %arg5[%c0_11, %c0_12] : memref<128x128xbf16, #tpu.memory_space<vmem>>, vector<128x128xbf16>
    %cst_13 = arith.constant dense<0.000000e+00> : vector<8x128xf32>
    %29 = tpu.matmul %27, %28, %cst_13 {dimension_numbers = #tpu.dot_dimension_numbers<[1], [0], [0], [1], [0, 0, 1, 1], [], []>} : vector<8x128xbf16>, vector<128x128xbf16>, vector<8x128xf32> -> vector<8x128xf32>
    %c0_14 = arith.constant 0 : index
    %c0_15 = arith.constant 0 : index
    %30 = vector.load %arg6[%c0_14, %c0_15] : memref<1x128xf32, #tpu.memory_space<vmem>>, vector<1x128xf32>
    %31 = vector.broadcast %30 : vector<1x128xf32> to vector<8x128xf32>
    %32 = arith.addf %29, %31 : vector<8x128xf32>
    %33 = arith.truncf %32 : vector<8x128xf32> to vector<8x128xbf16>
    %c0_16 = arith.constant 0 : index
    %c0_17 = arith.constant 0 : index
    %34 = vector.load %arg7[%c0_16, %c0_17] : memref<8x128xbf16, #tpu.memory_space<vmem>>, vector<8x128xbf16>
    tpu.vector_store %arg7[%c0_16, %c0_17], %33 {strides = array<i32>} : memref<8x128xbf16, #tpu.memory_space<vmem>>, vector<8x128xbf16>,
    return
  }
  func.func @transform_0(%arg0: i32) -> (i32, i32) {
    %c0_i32 = arith.constant 0 : i32
    %c0_i32_0 = arith.constant 0 : i32
    return %arg0, %c0_i32 : i32, i32
  }
  func.func @transform_1(%arg0: i32) -> (i32, i32) {
    %c0_i32 = arith.constant 0 : i32
    %c0_i32_0 = arith.constant 0 : i32
    %c0_i32_1 = arith.constant 0 : i32
    return %c0_i32, %c0_i32_0 : i32, i32
  }
  func.func @transform_2(%arg0: i32) -> (i32, i32) {
    %c0_i32 = arith.constant 0 : i32
    %c0_i32_0 = arith.constant 0 : i32
    %c0_i32_1 = arith.constant 0 : i32
    return %c0_i32, %c0_i32_0 : i32, i32
  }
  func.func @transform_3(%arg0: i32) -> (i32, i32) {
    %c0_i32 = arith.constant 0 : i32
    %c0_i32_0 = arith.constant 0 : i32
    %c0_i32_1 = arith.constant 0 : i32
    return %c0_i32, %c0_i32_0 : i32, i32
  }
  func.func @transform_4(%arg0: i32) -> (i32, i32) {
    %c0_i32 = arith.constant 0 : i32
    %c0_i32_0 = arith.constant 0 : i32
    %c0_i32_1 = arith.constant 0 : i32
    return %c0_i32, %c0_i32_0 : i32, i32
  }
  func.func @transform_5(%arg0: i32) -> (i32, i32) {
    %c0_i32 = arith.constant 0 : i32
    %c0_i32_0 = arith.constant 0 : i32
    %c0_i32_1 = arith.constant 0 : i32
    return %c0_i32, %c0_i32_0 : i32, i32
  }
  func.func @transform_6(%arg0: i32) -> (i32, i32) {
    %c0_i32 = arith.constant 0 : i32
    %c0_i32_0 = arith.constant 0 : i32
    return %arg0, %c0_i32 : i32, i32
  }
}

</mosaic_0001>

<llo_original>
// kernel: tpu_custom_call.1
$region0: #{tpu_custom_call.1}
  #allocation0 [shape = 'u32[]', space=smem, size = 0x4, offset = 0x4, fixed_abs, tag = 'smem constant byte address 0x4 - core index']
  #allocation1 [shape = 'u32[72,128]{1,0:T(1,128)}', space=vmem, size = 0x9000, scoped, tag = 'internal scratch']
  %s0 = inlined_call_operand.hbm [shape: bf16[8,784], index: 0, kind: input, shape index: {}]
  %s1 = inlined_call_operand.hbm [shape: f32[1,784], index: 1, kind: input, shape index: {}]
  %s2 = inlined_call_operand.hbm [shape: bf16[755,128], index: 2, kind: input, shape index: {}]
  %s3 = inlined_call_operand.vmem [shape: f32[1,128], index: 3, kind: input, shape index: {}]
  %s4 = inlined_call_operand.hbm [shape: bf16[128,128], index: 4, kind: input, shape index: {}]
  %s5 = inlined_call_operand.vmem [shape: f32[1,128], index: 5, kind: input, shape index: {}]
  %s6 = inlined_call_operand.hbm [shape: bf16[8,128], index: 6, kind: output, shape index: {}]
  %s7 = sld [smem:[#allocation0]]
  $region50: #{tpu_custom_call.1} parent=0
    _
  %s9 = ssub.s32 1, %s7
  %s10 = scalar_select 0, %s9, %s7
  $region1: #{tpu_custom_call.1} parent=0
    #allocation2 [shape = 'u8[14336]{0}', space=vmem, size = 0x3800, scoped, tag = 'input window, operand 0, single buffered']
    #allocation3 [shape = 's32[1]{0}', space=sflag, size = 0x4, scoped, tag = 'scoped memory for tpu_custom_call.1']
    #allocation4 [shape = 's32[1]{0}', space=sflag, size = 0x4, scoped, tag = 'scoped memory for tpu_custom_call.1']
    #allocation5 [shape = 'u8[3584]{0}', space=vmem, size = 0x1000, scoped, tag = 'input window, operand 1, single buffered']
    #allocation6 [shape = 's32[1]{0}', space=sflag, size = 0x4, scoped, tag = 'scoped memory for tpu_custom_call.1']
    #allocation7 [shape = 'u8[194560]{0}', space=vmem, size = 0x2f800, scoped, tag = 'input window, operand 2, single buffered']
    #allocation8 [shape = 'u8[32768]{0}', space=vmem, size = 0x8000, scoped, tag = 'input window, operand 4, single buffered']
    #allocation9 [shape = 's32[1]{0}', space=sflag, size = 0x4, scoped, tag = 'scoped memory for tpu_custom_call.1']
    #allocation10 [shape = 'u8[2048]{0}', space=vmem, size = 0x800, scoped, tag = 'output window, operand 0, single buffered']
    %11 = vsyncpa [#allocation3], 0
    %12 = vsyncpa [#allocation6], 0
    %13 = vsyncpa [#allocation9], 0
    %14 = vsyncpa [#allocation4], 0
    // Predicated region
    $region2: #{tpu_custom_call.1} parent=1 // pred_check
      _
    $region3: #{tpu_custom_call.1} parent=1 // pred_check_branch
      %16 = sbr.rel (0) target = $region5
    $region4: #{tpu_custom_call.1} parent=1 // pred_region
      %18 = vsyncadd [#allocation3], 0
      %s20 = sshll.u32 %s0, 4
      %s21 = int_to_ptr.hbm [resolvable:$true] %s20
      %s22 = sshll.u32 [#allocation2], 4
      %s23 = int_to_ptr.vmem [resolvable:$true] %s22
      %25 = dma.hbm_to_vmem [thread:$0]  %s21, 448, %s23, [#allocation3]
    $region5: #{tpu_custom_call.1} parent=1 // pred_fallthru
      _
    // Predicated region
    $region6: #{tpu_custom_call.1} parent=1 // pred_check
      _
    $region7: #{tpu_custom_call.1} parent=1 // pred_check_branch
      %27 = sbr.rel (0) target = $region9
    $region8: #{tpu_custom_call.1} parent=1 // pred_region
      %29 = vsyncadd [#allocation6], 0
      %s31 = sshll.u32 %s1, 4
      %s32 = int_to_ptr.hbm [resolvable:$true] %s31
      %s33 = sshll.u32 [#allocation5], 4
      %s34 = int_to_ptr.vmem [resolvable:$true] %s33
      %36 = dma.hbm_to_vmem [thread:$0]  %s32, 112, %s34, [#allocation6]
    $region9: #{tpu_custom_call.1} parent=1 // pred_fallthru
      _
    // Predicated region
    $region10: #{tpu_custom_call.1} parent=1 // pred_check
      _
    $region11: #{tpu_custom_call.1} parent=1 // pred_check_branch
      %38 = sbr.rel (0) target = $region13
    $region12: #{tpu_custom_call.1} parent=1 // pred_region
      %40 = vsyncadd [#allocation6], 0
      %s41 = sshll.u32 %s2, 4
      %s42 = int_to_ptr.hbm [resolvable:$true] %s41
      %s43 = sshll.u32 [#allocation7], 4
      %s44 = int_to_ptr.vmem [resolvable:$true] %s43
      %49 = dma.hbm_to_vmem [thread:$0]  %s42, 6080, %s44, [#allocation6], 64, 64, 4
    $region13: #{tpu_custom_call.1} parent=1 // pred_fallthru
      _
    // Predicated region
    $region14: #{tpu_custom_call.1} parent=1 // pred_check
      _
    $region15: #{tpu_custom_call.1} parent=1 // pred_check_branch
      %51 = sbr.rel (0) target = $region17
    $region16: #{tpu_custom_call.1} parent=1 // pred_region
      _
    $region17: #{tpu_custom_call.1} parent=1 // pred_fallthru
      _
    // Predicated region
    $region18: #{tpu_custom_call.1} parent=1 // pred_check
      _
    $region19: #{tpu_custom_call.1} parent=1 // pred_check_branch
      %53 = sbr.rel (0) target = $region21
    $region20: #{tpu_custom_call.1} parent=1 // pred_region
      %55 = vsyncadd [#allocation9], 0
      %s56 = sshll.u32 %s4, 4
      %s57 = int_to_ptr.hbm [resolvable:$true] %s56
      %s58 = sshll.u32 [#allocation8], 4
      %s59 = int_to_ptr.vmem [resolvable:$true] %s58
      %64 = dma.hbm_to_vmem [thread:$0]  %s57, 1024, %s59, [#allocation9], 64, 64, 4
    $region21: #{tpu_custom_call.1} parent=1 // pred_fallthru
      _
    // Predicated region
    $region22: #{tpu_custom_call.1} parent=1 // pred_check
      _
    $region23: #{tpu_custom_call.1} parent=1 // pred_check_branch
      %66 = sbr.rel (0) target = $region25
    $region24: #{tpu_custom_call.1} parent=1 // pred_region
      _
    $region25: #{tpu_custom_call.1} parent=1 // pred_fallthru
      _
    // Predicated region
    $region26: #{tpu_custom_call.1} parent=1 // pred_check
      _
    $region27: #{tpu_custom_call.1} parent=1 // pred_check_branch
      %68 = sbr.rel (0) target = $region29
    $region28: #{tpu_custom_call.1} parent=1 // pred_region
      %70 = dma.done [#allocation3], 448
    $region29: #{tpu_custom_call.1} parent=1 // pred_fallthru
      _
    // Predicated region
    $region30: #{tpu_custom_call.1} parent=1 // pred_check
      _
    $region31: #{tpu_custom_call.1} parent=1 // pred_check_branch
      %72 = sbr.rel (0) target = $region33
    $region32: #{tpu_custom_call.1} parent=1 // pred_region
      %74 = dma.done [#allocation6], 112
    $region33: #{tpu_custom_call.1} parent=1 // pred_fallthru
      _
    // Predicated region
    $region34: #{tpu_custom_call.1} parent=1 // pred_check
      _
    $region35: #{tpu_custom_call.1} parent=1 // pred_check_branch
      %76 = sbr.rel (0) target = $region37
    $region36: #{tpu_custom_call.1} parent=1 // pred_region
      %78 = dma.done [#allocation6], 6080
    $region37: #{tpu_custom_call.1} parent=1 // pred_fallthru
      _
    // Predicated region
    $region38: #{tpu_custom_call.1} parent=1 // pred_check
      _
    $region39: #{tpu_custom_call.1} parent=1 // pred_check_branch
      %80 = sbr.rel (0) target = $region41
    $region40: #{tpu_custom_call.1} parent=1 // pred_region
      %82 = dma.done [#allocation9], 1024
    $region41: #{tpu_custom_call.1} parent=1 // pred_fallthru
      _
    %v83 = vld [vmem:[#allocation2] sm:$0xff]
    %v84 = vld [vmem:[#allocation2 + $0x8] sm:$0xff]
    %v85 = vld [vmem:[#allocation2 + $0x10] sm:$0xff]
    %v86 = vld [vmem:[#allocation2 + $0x18] sm:$0xf]
    %v87 = vunpack.c.l.bf16 %v83
    %v88 = vunpack.c.h.bf16 %v83
    %v89 = vunpack.c.l.bf16 %v84
    %v90 = vunpack.c.h.bf16 %v84
    %v91 = vunpack.c.l.bf16 %v85
    %v92 = vunpack.c.h.bf16 %v85
    %v93 = vunpack.c.l.bf16 %v86
    %v94 = vld [vmem:[#allocation5] sm:$0x7f]
    %v96 = vperm.slane %v94, 0
    %v97 = vperm.slane %v94, 1
    %v98 = vperm.slane %v94, 2
    %v99 = vperm.slane %v94, 3
    %v100 = vperm.slane %v94, 4
    %v101 = vperm.slane %v94, 5
    %v102 = vperm.slane %v94, 6
    %v110 = vadd.f32 %v87, %v96
    %v111 = vadd.f32 %v88, %v97
    %v112 = vadd.f32 %v89, %v98
    %v113 = vadd.f32 %v90, %v99
    %v114 = vadd.f32 %v91, %v100
    %v115 = vadd.f32 %v92, %v101
    %v116 = vadd.f32 %v93, %v102
    %v117 = vand.u32 2147483647, %v110
    %vm118 = vcmp.le.f32.partialorder %v117, 0.7853982
    %vm119 = vcmp.lt.s32.totalorder %v110, 0
    %v120 = vand.u32 %v110, 2139095040
    %v121 = vshrl.u32 %v120, 23
    %v122 = vsub.s32 %v121, 127
    %v123 = vand.u32 2147483647, %v110
    %v124 = vand.u32 %v123, 8388607
    %v125 = vor.u32 %v124, 8388608
    %v126 = vsub.s32 0, %v125
    %v127 = vadd.s32 %v122, 1
    %vm128 = vcmp.gt.s32.totalorder %v127, 0
    %v129 = vsel %vm128, %v127, 0
    %v130 = vshrl.u32 %v129, 5
    %v131 = vand.u32 %v129, 31
    %v132 = vsub.s32 32, %v131
    %v133 = vshrl.u32 683565275, %v132
    %v134 = vshll.u32 683565275, %v131
    %v135 = vshrl.u32 2475754826, %v132
    %v136 = vor.u32 %v134, %v135
    %v137 = vshll.u32 2475754826, %v131
    %v138 = vshrl.u32 2131351028, %v132
    %v139 = vor.u32 %v137, %v138
    %v140 = vshll.u32 2131351028, %v131
    %v141 = vshrl.u32 2102212464, %v132
    %v142 = vor.u32 %v140, %v141
    %v143 = vshll.u32 2102212464, %v131
    %v144 = vshrl.u32 920167782, %v132
    %v145 = vor.u32 %v143, %v144
    %v146 = vshll.u32 920167782, %v131
    %v147 = vshrl.u32 1326507024, %v132
    %v148 = vor.u32 %v146, %v147
    %vm149 = vcmp.lt.s32.totalorder %v130, 1
    %vm150 = vcmp.lt.s32.totalorder %v130, 2
    %vm151 = vcmp.lt.s32.totalorder %v130, 3
    %vm152 = vcmp.lt.s32.totalorder %v130, 4
    %v153 = vsel %vm149, %v133, %v136
    %v154 = vsel %vm152, %v142, 2102212464
    %v155 = vsel %vm151, %v139, %v154
    %v156 = vsel %vm150, %v153, %v155
    %v157 = vsel %vm149, %v136, %v139
    %v158 = vsel %vm152, %v145, 920167782
    %v159 = vsel %vm151, %v142, %v158
    %v160 = vsel %vm150, %v157, %v159
    %v161 = vsel %vm149, %v139, %v142
    %v162 = vsel %vm152, %v148, 1326507024
    %v163 = vsel %vm151, %v145, %v162
    %v164 = vsel %vm150, %v161, %v163
    %v165 = vshll.u32 %v125, 8
    %v166 = vand.u32 %v165, 65535
    %v167 = vshrl.u32 %v165, 16
    %v168 = vand.u32 %v164, 65535
    %v169 = vshrl.u32 %v164, 16
    %v170 = vmul.u32 %v166, %v168
    %v171 = vmul.u32 %v166, %v169
    %v172 = vmul.u32 %v167, %v168
    %v173 = vmul.u32 %v167, %v169
    %v174 = vshll.u32 %v171, 16
    %v175 = vshrl.u32 %v171, 16
    %v176 = vshll.u32 %v172, 16
    %v177 = vshrl.u32 %v172, 16
    %vm178 = vc.u32 %v170, %v174
    %v179 = vsel %vm178, 1, 0
    %v180 = vadd.s32 %v170, %v174
    %v181 = vadd.s32 %v173, %v179
    %vm182 = vc.u32 %v180, %v176
    %v183 = vsel %vm182, 1, 0
    %v184 = vadd.s32 %v180, %v176
    %v185 = vadd.s32 %v181, %v183
    %v186 = vadd.s32 %v185, %v175
    %v187 = vadd.s32 %v186, %v177
    %v188 = vand.u32 %v165, 65535
    %v189 = vshrl.u32 %v165, 16
    %v190 = vand.u32 %v160, 65535
    %v191 = vshrl.u32 %v160, 16
    %v192 = vmul.u32 %v188, %v190
    %v193 = vmul.u32 %v188, %v191
    %v194 = vmul.u32 %v189, %v190
    %v195 = vmul.u32 %v189, %v191
    %v196 = vshll.u32 %v193, 16
    %v197 = vshrl.u32 %v193, 16
    %v198 = vshll.u32 %v194, 16
    %v199 = vshrl.u32 %v194, 16
    %vm200 = vc.u32 %v192, %v196
    %v201 = vsel %vm200, 1, 0
    %v202 = vadd.s32 %v192, %v196
    %v203 = vadd.s32 %v195, %v201
    %vm204 = vc.u32 %v202, %v198
    %v205 = vsel %vm204, 1, 0
    %v206 = vadd.s32 %v202, %v198
    %v207 = vadd.s32 %v203, %v205
    %v208 = vadd.s32 %v207, %v197
    %v209 = vadd.s32 %v208, %v199
    %v210 = vmul.u32 %v165, %v156
    %v211 = vadd.s32 %v187, %v206
    %vm212 = vc.u32 %v187, %v206
    %v213 = vadd.s32 %v209, 1
    %v214 = vsel %vm212, %v213, %v209
    %v215 = vadd.s32 %v210, %v214
    %v216 = vadd.s32 %v215, 536870912
    %v217 = vshrl.u32 %v216, 30
    %v218 = vshll.u32 %v217, 30
    %v219 = vsub.s32 %v215, %v218
    %vm220 = vcmp.lt.s32.totalorder %v219, 0
    %v221 = vsub.s32 0, %v219
    %v222 = vsel %vm220, %v221, %v219
    %v223 = vclz %v222
    %v224 = vsub.s32 %v223, 2
    %vm225 = vcmp.gt.s32.totalorder 0, %v224
    %v226 = vsel %vm225, 0, %v224
    %v227 = vsub.s32 32, %v226
    %v228 = vshll.u32 %v219, %v226
    %v229 = vshrl.u32 %v211, %v227
    %v230 = vor.u32 %v228, %v229
    %v231 = vsub.s32 4294967266, %v226
    %v232 = vadd.s32 %v231, 127
    %v233 = vshll.u32 %v232, 23
    %v234 = vor.u32 4788187, %v233
    %v235 = vand.u32 2147483647, %v234
    %v237 = vcvt.s32.f32 %v230
    %v238 = vmul.f32 %v237, %v235
    %v239 = vxor.u32 %v238, 2147483648
    %v240 = vsel %vm119, %v239, %v238
    %v241 = vsub.s32 4, %v217
    %v242 = vsel %vm119, %v241, %v217
    %v243 = vsel %vm118, %v110, %v240
    %v244 = vsel %vm118, 0, %v242
    %v245 = vmul.f32 %v243, %v243
    %v246 = vmul.f32 %v245, -0.001358992
    %v247 = vadd.f32 %v246, 0.041655596
    %v248 = vmul.f32 %v245, %v247
    %v249 = vadd.f32 %v248, -0.4999988
    %v250 = vmul.f32 %v245, %v249
    %v251 = vadd.f32 1.0, %v250
    %v252 = vmul.f32 %v243, %v243
    %v253 = vmul.f32 %v252, -0.00019511016
    %v254 = vadd.f32 %v253, 0.008332121
    %v255 = vmul.f32 %v252, %v254
    %v256 = vadd.f32 %v255, -0.16666654
    %v257 = vmul.f32 %v252, %v256
    %v258 = vadd.f32 %v257, 1.0
    %v259 = vmul.f32 %v258, %v243
    %vm260 = vweird.f32 %v110
    %v261 = vand.u32 %v244, 3
    %vm262 = vcmp.lt.s32.totalorder %v261, 2
    %vm263 = vcmp.eq.s32.totalorder %v261, 0
    %v264 = vxor.u32 %v259, 2147483648
    %v265 = vsel %vm263, %v251, %v264
    %vm266 = vcmp.eq.s32.totalorder %v261, 2
    %v267 = vxor.u32 %v251, 2147483648
    %v268 = vsel %vm266, %v267, %v259
    %v269 = vsel %vm262, %v265, %v268
    %v270 = vsel %vm260, nan, %v269
    %v271 = vand.u32 2147483647, %v111
    %vm272 = vcmp.le.f32.partialorder %v271, 0.7853982
    %vm273 = vcmp.lt.s32.totalorder %v111, 0
    %v274 = vand.u32 %v111, 2139095040
    %v275 = vshrl.u32 %v274, 23
    %v276 = vsub.s32 %v275, 127
    %v277 = vand.u32 2147483647, %v111
    %v278 = vand.u32 %v277, 8388607
    %v279 = vor.u32 %v278, 8388608
    %v280 = vsub.s32 0, %v279
    %v281 = vadd.s32 %v276, 1
    %vm282 = vcmp.gt.s32.totalorder %v281, 0
    %v283 = vsel %vm282, %v281, 0
    %v284 = vshrl.u32 %v283, 5
    %v285 = vand.u32 %v283, 31
    %v286 = vsub.s32 32, %v285
    %v287 = vshrl.u32 683565275, %v286
    %v288 = vshll.u32 683565275, %v285
    %v289 = vshrl.u32 2475754826, %v286
    %v290 = vor.u32 %v288, %v289
    %v291 = vshll.u32 2475754826, %v285
    %v292 = vshrl.u32 2131351028, %v286
    %v293 = vor.u32 %v291, %v292
    %v294 = vshll.u32 2131351028, %v285
    %v295 = vshrl.u32 2102212464, %v286
    %v296 = vor.u32 %v294, %v295
    %v297 = vshll.u32 2102212464, %v285
    %v298 = vshrl.u32 920167782, %v286
    %v299 = vor.u32 %v297, %v298
    %v300 = vshll.u32 920167782, %v285
    %v301 = vshrl.u32 1326507024, %v286
    %v302 = vor.u32 %v300, %v301
    %vm303 = vcmp.lt.s32.totalorder %v284, 1
    %vm304 = vcmp.lt.s32.totalorder %v284, 2
    %vm305 = vcmp.lt.s32.totalorder %v284, 3
    %vm306 = vcmp.lt.s32.totalorder %v284, 4
    %v307 = vsel %vm303, %v287, %v290
    %v308 = vsel %vm306, %v296, 2102212464
    %v309 = vsel %vm305, %v293, %v308
    %v310 = vsel %vm304, %v307, %v309
    %v311 = vsel %vm303, %v290, %v293
    %v312 = vsel %vm306, %v299, 920167782
    %v313 = vsel %vm305, %v296, %v312
    %v314 = vsel %vm304, %v311, %v313
    %v315 = vsel %vm303, %v293, %v296
    %v316 = vsel %vm306, %v302, 1326507024
    %v317 = vsel %vm305, %v299, %v316
    %v318 = vsel %vm304, %v315, %v317
    %v319 = vshll.u32 %v279, 8
    %v320 = vand.u32 %v319, 65535
    %v321 = vshrl.u32 %v319, 16
    %v322 = vand.u32 %v318, 65535
    %v323 = vshrl.u32 %v318, 16
    %v324 = vmul.u32 %v320, %v322
    %v325 = vmul.u32 %v320, %v323
    %v326 = vmul.u32 %v321, %v322
    %v327 = vmul.u32 %v321, %v323
    %v328 = vshll.u32 %v325, 16
    %v329 = vshrl.u32 %v325, 16
    %v330 = vshll.u32 %v326, 16
    %v331 = vshrl.u32 %v326, 16
    %vm332 = vc.u32 %v324, %v328
    %v333 = vsel %vm332, 1, 0
    %v334 = vadd.s32 %v324, %v328
    %v335 = vadd.s32 %v327, %v333
    %vm336 = vc.u32 %v334, %v330
    %v337 = vsel %vm336, 1, 0
    %v338 = vadd.s32 %v334, %v330
    %v339 = vadd.s32 %v335, %v337
    %v340 = vadd.s32 %v339, %v329
    %v341 = vadd.s32 %v340, %v331
    %v342 = vand.u32 %v319, 65535
    %v343 = vshrl.u32 %v319, 16
    %v344 = vand.u32 %v314, 65535
    %v345 = vshrl.u32 %v314, 16
    %v346 = vmul.u32 %v342, %v344
    %v347 = vmul.u32 %v342, %v345
    %v348 = vmul.u32 %v343, %v344
    %v349 = vmul.u32 %v343, %v345
    %v350 = vshll.u32 %v347, 16
    %v351 = vshrl.u32 %v347, 16
    %v352 = vshll.u32 %v348, 16
    %v353 = vshrl.u32 %v348, 16
    %vm354 = vc.u32 %v346, %v350
    %v355 = vsel %vm354, 1, 0
    %v356 = vadd.s32 %v346, %v350
    %v357 = vadd.s32 %v349, %v355
    %vm358 = vc.u32 %v356, %v352
    %v359 = vsel %vm358, 1, 0
    %v360 = vadd.s32 %v356, %v352
    %v361 = vadd.s32 %v357, %v359
    %v362 = vadd.s32 %v361, %v351
    %v363 = vadd.s32 %v362, %v353
    %v364 = vmul.u32 %v319, %v310
    %v365 = vadd.s32 %v341, %v360
    %vm366 = vc.u32 %v341, %v360
    %v367 = vadd.s32 %v363, 1
    %v368 = vsel %vm366, %v367, %v363
    %v369 = vadd.s32 %v364, %v368
    %v370 = vadd.s32 %v369, 536870912
    %v371 = vshrl.u32 %v370, 30
    %v372 = vshll.u32 %v371, 30
    %v373 = vsub.s32 %v369, %v372
    %vm374 = vcmp.lt.s32.totalorder %v373, 0
    %v375 = vsub.s32 0, %v373
    %v376 = vsel %vm374, %v375, %v373
    %v377 = vclz %v376
    %v378 = vsub.s32 %v377, 2
    %vm379 = vcmp.gt.s32.totalorder 0, %v378
    %v380 = vsel %vm379, 0, %v378
    %v381 = vsub.s32 32, %v380
    %v382 = vshll.u32 %v373, %v380
    %v383 = vshrl.u32 %v365, %v381
    %v384 = vor.u32 %v382, %v383
    %v385 = vsub.s32 4294967266, %v380
    %v386 = vadd.s32 %v385, 127
    %v387 = vshll.u32 %v386, 23
    %v388 = vor.u32 4788187, %v387
    %v389 = vand.u32 2147483647, %v388
    %v391 = vcvt.s32.f32 %v384
    %v392 = vmul.f32 %v391, %v389
    %v393 = vxor.u32 %v392, 2147483648
    %v394 = vsel %vm273, %v393, %v392
    %v395 = vsub.s32 4, %v371
    %v396 = vsel %vm273, %v395, %v371
    %v397 = vsel %vm272, %v111, %v394
    %v398 = vsel %vm272, 0, %v396
    %v399 = vmul.f32 %v397, %v397
    %v400 = vmul.f32 %v399, -0.001358992
    %v401 = vadd.f32 %v400, 0.041655596
    %v402 = vmul.f32 %v399, %v401
    %v403 = vadd.f32 %v402, -0.4999988
    %v404 = vmul.f32 %v399, %v403
    %v405 = vadd.f32 1.0, %v404
    %v406 = vmul.f32 %v397, %v397
    %v407 = vmul.f32 %v406, -0.00019511016
    %v408 = vadd.f32 %v407, 0.008332121
    %v409 = vmul.f32 %v406, %v408
    %v410 = vadd.f32 %v409, -0.16666654
    %v411 = vmul.f32 %v406, %v410
    %v412 = vadd.f32 %v411, 1.0
    %v413 = vmul.f32 %v412, %v397
    %vm414 = vweird.f32 %v111
    %v415 = vand.u32 %v398, 3
    %vm416 = vcmp.lt.s32.totalorder %v415, 2
    %vm417 = vcmp.eq.s32.totalorder %v415, 0
    %v418 = vxor.u32 %v413, 2147483648
    %v419 = vsel %vm417, %v405, %v418
    %vm420 = vcmp.eq.s32.totalorder %v415, 2
    %v421 = vxor.u32 %v405, 2147483648
    %v422 = vsel %vm420, %v421, %v413
    %v423 = vsel %vm416, %v419, %v422
    %v424 = vsel %vm414, nan, %v423
    %v425 = vand.u32 2147483647, %v112
    %vm426 = vcmp.le.f32.partialorder %v425, 0.7853982
    %vm427 = vcmp.lt.s32.totalorder %v112, 0
    %v428 = vand.u32 %v112, 2139095040
    %v429 = vshrl.u32 %v428, 23
    %v430 = vsub.s32 %v429, 127
    %v431 = vand.u32 2147483647, %v112
    %v432 = vand.u32 %v431, 8388607
    %v433 = vor.u32 %v432, 8388608
    %v434 = vsub.s32 0, %v433
    %v435 = vadd.s32 %v430, 1
    %vm436 = vcmp.gt.s32.totalorder %v435, 0
    %v437 = vsel %vm436, %v435, 0
    %v438 = vshrl.u32 %v437, 5
    %v439 = vand.u32 %v437, 31
    %v440 = vsub.s32 32, %v439
    %v441 = vshrl.u32 683565275, %v440
    %v442 = vshll.u32 683565275, %v439
    %v443 = vshrl.u32 2475754826, %v440
    %v444 = vor.u32 %v442, %v443
    %v445 = vshll.u32 2475754826, %v439
    %v446 = vshrl.u32 2131351028, %v440
    %v447 = vor.u32 %v445, %v446
    %v448 = vshll.u32 2131351028, %v439
    %v449 = vshrl.u32 2102212464, %v440
    %v450 = vor.u32 %v448, %v449
    %v451 = vshll.u32 2102212464, %v439
    %v452 = vshrl.u32 920167782, %v440
    %v453 = vor.u32 %v451, %v452
    %v454 = vshll.u32 920167782, %v439
    %v455 = vshrl.u32 1326507024, %v440
    %v456 = vor.u32 %v454, %v455
    %vm457 = vcmp.lt.s32.totalorder %v438, 1
    %vm458 = vcmp.lt.s32.totalorder %v438, 2
    %vm459 = vcmp.lt.s32.totalorder %v438, 3
    %vm460 = vcmp.lt.s32.totalorder %v438, 4
    %v461 = vsel %vm457, %v441, %v444
    %v462 = vsel %vm460, %v450, 2102212464
    %v463 = vsel %vm459, %v447, %v462
    %v464 = vsel %vm458, %v461, %v463
    %v465 = vsel %vm457, %v444, %v447
    %v466 = vsel %vm460, %v453, 920167782
    %v467 = vsel %vm459, %v450, %v466
    %v468 = vsel %vm458, %v465, %v467
    %v469 = vsel %vm457, %v447, %v450
    %v470 = vsel %vm460, %v456, 1326507024
    %v471 = vsel %vm459, %v453, %v470
    %v472 = vsel %vm458, %v469, %v471
    %v473 = vshll.u32 %v433, 8
    %v474 = vand.u32 %v473, 65535
    %v475 = vshrl.u32 %v473, 16
    %v476 = vand.u32 %v472, 65535
    %v477 = vshrl.u32 %v472, 16
    %v478 = vmul.u32 %v474, %v476
    %v479 = vmul.u32 %v474, %v477
    %v480 = vmul.u32 %v475, %v476
    %v481 = vmul.u32 %v475, %v477
    %v482 = vshll.u32 %v479, 16
    %v483 = vshrl.u32 %v479, 16
    %v484 = vshll.u32 %v480, 16
    %v485 = vshrl.u32 %v480, 16
    %vm486 = vc.u32 %v478, %v482
    %v487 = vsel %vm486, 1, 0
    %v488 = vadd.s32 %v478, %v482
    %v489 = vadd.s32 %v481, %v487
    %vm490 = vc.u32 %v488, %v484
    %v491 = vsel %vm490, 1, 0
    %v492 = vadd.s32 %v488, %v484
    %v493 = vadd.s32 %v489, %v491
    %v494 = vadd.s32 %v493, %v483
    %v495 = vadd.s32 %v494, %v485
    %v496 = vand.u32 %v473, 65535
    %v497 = vshrl.u32 %v473, 16
    %v498 = vand.u32 %v468, 65535
    %v499 = vshrl.u32 %v468, 16
    %v500 = vmul.u32 %v496, %v498
    %v501 = vmul.u32 %v496, %v499
    %v502 = vmul.u32 %v497, %v498
    %v503 = vmul.u32 %v497, %v499
    %v504 = vshll.u32 %v501, 16
    %v505 = vshrl.u32 %v501, 16
    %v506 = vshll.u32 %v502, 16
    %v507 = vshrl.u32 %v502, 16
    %vm508 = vc.u32 %v500, %v504
    %v509 = vsel %vm508, 1, 0
    %v510 = vadd.s32 %v500, %v504
    %v511 = vadd.s32 %v503, %v509
    %vm512 = vc.u32 %v510, %v506
    %v513 = vsel %vm512, 1, 0
    %v514 = vadd.s32 %v510, %v506
    %v515 = vadd.s32 %v511, %v513
    %v516 = vadd.s32 %v515, %v505
    %v517 = vadd.s32 %v516, %v507
    %v518 = vmul.u32 %v473, %v464
    %v519 = vadd.s32 %v495, %v514
    %vm520 = vc.u32 %v495, %v514
    %v521 = vadd.s32 %v517, 1
    %v522 = vsel %vm520, %v521, %v517
    %v523 = vadd.s32 %v518, %v522
    %v524 = vadd.s32 %v523, 536870912
    %v525 = vshrl.u32 %v524, 30
    %v526 = vshll.u32 %v525, 30
    %v527 = vsub.s32 %v523, %v526
    %vm528 = vcmp.lt.s32.totalorder %v527, 0
    %v529 = vsub.s32 0, %v527
    %v530 = vsel %vm528, %v529, %v527
    %v531 = vclz %v530
    %v532 = vsub.s32 %v531, 2
    %vm533 = vcmp.gt.s32.totalorder 0, %v532
    %v534 = vsel %vm533, 0, %v532
    %v535 = vsub.s32 32, %v534
    %v536 = vshll.u32 %v527, %v534
    %v537 = vshrl.u32 %v519, %v535
    %v538 = vor.u32 %v536, %v537
    %v539 = vsub.s32 4294967266, %v534
    %v540 = vadd.s32 %v539, 127
    %v541 = vshll.u32 %v540, 23
    %v542 = vor.u32 4788187, %v541
    %v543 = vand.u32 2147483647, %v542
    %v545 = vcvt.s32.f32 %v538
    %v546 = vmul.f32 %v545, %v543
    %v547 = vxor.u32 %v546, 2147483648
    %v548 = vsel %vm427, %v547, %v546
    %v549 = vsub.s32 4, %v525
    %v550 = vsel %vm427, %v549, %v525
    %v551 = vsel %vm426, %v112, %v548
    %v552 = vsel %vm426, 0, %v550
    %v553 = vmul.f32 %v551, %v551
    %v554 = vmul.f32 %v553, -0.001358992
    %v555 = vadd.f32 %v554, 0.041655596
    %v556 = vmul.f32 %v553, %v555
    %v557 = vadd.f32 %v556, -0.4999988
    %v558 = vmul.f32 %v553, %v557
    %v559 = vadd.f32 1.0, %v558
    %v560 = vmul.f32 %v551, %v551
    %v561 = vmul.f32 %v560, -0.00019511016
    %v562 = vadd.f32 %v561, 0.008332121
    %v563 = vmul.f32 %v560, %v562
    %v564 = vadd.f32 %v563, -0.16666654
    %v565 = vmul.f32 %v560, %v564
    %v566 = vadd.f32 %v565, 1.0
    %v567 = vmul.f32 %v566, %v551
    %vm568 = vweird.f32 %v112
    %v569 = vand.u32 %v552, 3
    %vm570 = vcmp.lt.s32.totalorder %v569, 2
    %vm571 = vcmp.eq.s32.totalorder %v569, 0
    %v572 = vxor.u32 %v567, 2147483648
    %v573 = vsel %vm571, %v559, %v572
    %vm574 = vcmp.eq.s32.totalorder %v569, 2
    %v575 = vxor.u32 %v559, 2147483648
    %v576 = vsel %vm574, %v575, %v567
    %v577 = vsel %vm570, %v573, %v576
    %v578 = vsel %vm568, nan, %v577
    %v579 = vand.u32 2147483647, %v113
    %vm580 = vcmp.le.f32.partialorder %v579, 0.7853982
    %vm581 = vcmp.lt.s32.totalorder %v113, 0
    %v582 = vand.u32 %v113, 2139095040
    %v583 = vshrl.u32 %v582, 23
    %v584 = vsub.s32 %v583, 127
    %v585 = vand.u32 2147483647, %v113
    %v586 = vand.u32 %v585, 8388607
    %v587 = vor.u32 %v586, 8388608
    %v588 = vsub.s32 0, %v587
    %v589 = vadd.s32 %v584, 1
    %vm590 = vcmp.gt.s32.totalorder %v589, 0
    %v591 = vsel %vm590, %v589, 0
    %v592 = vshrl.u32 %v591, 5
    %v593 = vand.u32 %v591, 31
    %v594 = vsub.s32 32, %v593
    %v595 = vshrl.u32 683565275, %v594
    %v596 = vshll.u32 683565275, %v593
    %v597 = vshrl.u32 2475754826, %v594
    %v598 = vor.u32 %v596, %v597
    %v599 = vshll.u32 2475754826, %v593
    %v600 = vshrl.u32 2131351028, %v594
    %v601 = vor.u32 %v599, %v600
    %v602 = vshll.u32 2131351028, %v593
    %v603 = vshrl.u32 2102212464, %v594
    %v604 = vor.u32 %v602, %v603
    %v605 = vshll.u32 2102212464, %v593
    %v606 = vshrl.u32 920167782, %v594
    %v607 = vor.u32 %v605, %v606
    %v608 = vshll.u32 920167782, %v593
    %v609 = vshrl.u32 1326507024, %v594
    %v610 = vor.u32 %v608, %v609
    %vm611 = vcmp.lt.s32.totalorder %v592, 1
    %vm612 = vcmp.lt.s32.totalorder %v592, 2
    %vm613 = vcmp.lt.s32.totalorder %v592, 3
    %vm614 = vcmp.lt.s32.totalorder %v592, 4
    %v615 = vsel %vm611, %v595, %v598
    %v616 = vsel %vm614, %v604, 2102212464
    %v617 = vsel %vm613, %v601, %v616
    %v618 = vsel %vm612, %v615, %v617
    %v619 = vsel %vm611, %v598, %v601
    %v620 = vsel %vm614, %v607, 920167782
    %v621 = vsel %vm613, %v604, %v620
    %v622 = vsel %vm612, %v619, %v621
    %v623 = vsel %vm611, %v601, %v604
    %v624 = vsel %vm614, %v610, 1326507024
    %v625 = vsel %vm613, %v607, %v624
    %v626 = vsel %vm612, %v623, %v625
    %v627 = vshll.u32 %v587, 8
    %v628 = vand.u32 %v627, 65535
    %v629 = vshrl.u32 %v627, 16
    %v630 = vand.u32 %v626, 65535
    %v631 = vshrl.u32 %v626, 16
    %v632 = vmul.u32 %v628, %v630
    %v633 = vmul.u32 %v628, %v631
    %v634 = vmul.u32 %v629, %v630
    %v635 = vmul.u32 %v629, %v631
    %v636 = vshll.u32 %v633, 16
    %v637 = vshrl.u32 %v633, 16
    %v638 = vshll.u32 %v634, 16
    %v639 = vshrl.u32 %v634, 16
    %vm640 = vc.u32 %v632, %v636
    %v641 = vsel %vm640, 1, 0
    %v642 = vadd.s32 %v632, %v636
    %v643 = vadd.s32 %v635, %v641
    %vm644 = vc.u32 %v642, %v638
    %v645 = vsel %vm644, 1, 0
    %v646 = vadd.s32 %v642, %v638
    %v647 = vadd.s32 %v643, %v645
    %v648 = vadd.s32 %v647, %v637
    %v649 = vadd.s32 %v648, %v639
    %v650 = vand.u32 %v627, 65535
    %v651 = vshrl.u32 %v627, 16
    %v652 = vand.u32 %v622, 65535
    %v653 = vshrl.u32 %v622, 16
    %v654 = vmul.u32 %v650, %v652
    %v655 = vmul.u32 %v650, %v653
    %v656 = vmul.u32 %v651, %v652
    %v657 = vmul.u32 %v651, %v653
    %v658 = vshll.u32 %v655, 16
    %v659 = vshrl.u32 %v655, 16
    %v660 = vshll.u32 %v656, 16
    %v661 = vshrl.u32 %v656, 16
    %vm662 = vc.u32 %v654, %v658
    %v663 = vsel %vm662, 1, 0
    %v664 = vadd.s32 %v654, %v658
    %v665 = vadd.s32 %v657, %v663
    %vm666 = vc.u32 %v664, %v660
    %v667 = vsel %vm666, 1, 0
    %v668 = vadd.s32 %v664, %v660
    %v669 = vadd.s32 %v665, %v667
    %v670 = vadd.s32 %v669, %v659
    %v671 = vadd.s32 %v670, %v661
    %v672 = vmul.u32 %v627, %v618
    %v673 = vadd.s32 %v649, %v668
    %vm674 = vc.u32 %v649, %v668
    %v675 = vadd.s32 %v671, 1
    %v676 = vsel %vm674, %v675, %v671
    %v677 = vadd.s32 %v672, %v676
    %v678 = vadd.s32 %v677, 536870912
    %v679 = vshrl.u32 %v678, 30
    %v680 = vshll.u32 %v679, 30
    %v681 = vsub.s32 %v677, %v680
    %vm682 = vcmp.lt.s32.totalorder %v681, 0
    %v683 = vsub.s32 0, %v681
    %v684 = vsel %vm682, %v683, %v681
    %v685 = vclz %v684
    %v686 = vsub.s32 %v685, 2
    %vm687 = vcmp.gt.s32.totalorder 0, %v686
    %v688 = vsel %vm687, 0, %v686
    %v689 = vsub.s32 32, %v688
    %v690 = vshll.u32 %v681, %v688
    %v691 = vshrl.u32 %v673, %v689
    %v692 = vor.u32 %v690, %v691
    %v693 = vsub.s32 4294967266, %v688
    %v694 = vadd.s32 %v693, 127
    %v695 = vshll.u32 %v694, 23
    %v696 = vor.u32 4788187, %v695
    %v697 = vand.u32 2147483647, %v696
    %v699 = vcvt.s32.f32 %v692
    %v700 = vmul.f32 %v699, %v697
    %v701 = vxor.u32 %v700, 2147483648
    %v702 = vsel %vm581, %v701, %v700
    %v703 = vsub.s32 4, %v679
    %v704 = vsel %vm581, %v703, %v679
    %v705 = vsel %vm580, %v113, %v702
    %v706 = vsel %vm580, 0, %v704
    %v707 = vmul.f32 %v705, %v705
    %v708 = vmul.f32 %v707, -0.001358992
    %v709 = vadd.f32 %v708, 0.041655596
    %v710 = vmul.f32 %v707, %v709
    %v711 = vadd.f32 %v710, -0.4999988
    %v712 = vmul.f32 %v707, %v711
    %v713 = vadd.f32 1.0, %v712
    %v714 = vmul.f32 %v705, %v705
    %v715 = vmul.f32 %v714, -0.00019511016
    %v716 = vadd.f32 %v715, 0.008332121
    %v717 = vmul.f32 %v714, %v716
    %v718 = vadd.f32 %v717, -0.16666654
    %v719 = vmul.f32 %v714, %v718
    %v720 = vadd.f32 %v719, 1.0
    %v721 = vmul.f32 %v720, %v705
    %vm722 = vweird.f32 %v113
    %v723 = vand.u32 %v706, 3
    %vm724 = vcmp.lt.s32.totalorder %v723, 2
    %vm725 = vcmp.eq.s32.totalorder %v723, 0
    %v726 = vxor.u32 %v721, 2147483648
    %v727 = vsel %vm725, %v713, %v726
    %vm728 = vcmp.eq.s32.totalorder %v723, 2
    %v729 = vxor.u32 %v713, 2147483648
    %v730 = vsel %vm728, %v729, %v721
    %v731 = vsel %vm724, %v727, %v730
    %v732 = vsel %vm722, nan, %v731
    %v733 = vand.u32 2147483647, %v114
    %vm734 = vcmp.le.f32.partialorder %v733, 0.7853982
    %vm735 = vcmp.lt.s32.totalorder %v114, 0
    %v736 = vand.u32 %v114, 2139095040
    %v737 = vshrl.u32 %v736, 23
    %v738 = vsub.s32 %v737, 127
    %v739 = vand.u32 2147483647, %v114
    %v740 = vand.u32 %v739, 8388607
    %v741 = vor.u32 %v740, 8388608
    %v742 = vsub.s32 0, %v741
    %v743 = vadd.s32 %v738, 1
    %vm744 = vcmp.gt.s32.totalorder %v743, 0
    %v745 = vsel %vm744, %v743, 0
    %v746 = vshrl.u32 %v745, 5
    %v747 = vand.u32 %v745, 31
    %v748 = vsub.s32 32, %v747
    %v749 = vshrl.u32 683565275, %v748
    %v750 = vshll.u32 683565275, %v747
    %v751 = vshrl.u32 2475754826, %v748
    %v752 = vor.u32 %v750, %v751
    %v753 = vshll.u32 2475754826, %v747
    %v754 = vshrl.u32 2131351028, %v748
    %v755 = vor.u32 %v753, %v754
    %v756 = vshll.u32 2131351028, %v747
    %v757 = vshrl.u32 2102212464, %v748
    %v758 = vor.u32 %v756, %v757
    %v759 = vshll.u32 2102212464, %v747
    %v760 = vshrl.u32 920167782, %v748
    %v761 = vor.u32 %v759, %v760
    %v762 = vshll.u32 920167782, %v747
    %v763 = vshrl.u32 1326507024, %v748
    %v764 = vor.u32 %v762, %v763
    %vm765 = vcmp.lt.s32.totalorder %v746, 1
    %vm766 = vcmp.lt.s32.totalorder %v746, 2
    %vm767 = vcmp.lt.s32.totalorder %v746, 3
    %vm768 = vcmp.lt.s32.totalorder %v746, 4
    %v769 = vsel %vm765, %v749, %v752
    %v770 = vsel %vm768, %v758, 2102212464
    %v771 = vsel %vm767, %v755, %v770
    %v772 = vsel %vm766, %v769, %v771
    %v773 = vsel %vm765, %v752, %v755
    %v774 = vsel %vm768, %v761, 920167782
    %v775 = vsel %vm767, %v758, %v774
    %v776 = vsel %vm766, %v773, %v775
    %v777 = vsel %vm765, %v755, %v758
    %v778 = vsel %vm768, %v764, 1326507024
    %v779 = vsel %vm767, %v761, %v778
    %v780 = vsel %vm766, %v777, %v779
    %v781 = vshll.u32 %v741, 8
    %v782 = vand.u32 %v781, 65535
    %v783 = vshrl.u32 %v781, 16
    %v784 = vand.u32 %v780, 65535
    %v785 = vshrl.u32 %v780, 16
    %v786 = vmul.u32 %v782, %v784
    %v787 = vmul.u32 %v782, %v785
    %v788 = vmul.u32 %v783, %v784
    %v789 = vmul.u32 %v783, %v785
    %v790 = vshll.u32 %v787, 16
    %v791 = vshrl.u32 %v787, 16
    %v792 = vshll.u32 %v788, 16
    %v793 = vshrl.u32 %v788, 16
    %vm794 = vc.u32 %v786, %v790
    %v795 = vsel %vm794, 1, 0
    %v796 = vadd.s32 %v786, %v790
    %v797 = vadd.s32 %v789, %v795
    %vm798 = vc.u32 %v796, %v792
    %v799 = vsel %vm798, 1, 0
    %v800 = vadd.s32 %v796, %v792
    %v801 = vadd.s32 %v797, %v799
    %v802 = vadd.s32 %v801, %v791
    %v803 = vadd.s32 %v802, %v793
    %v804 = vand.u32 %v781, 65535
    %v805 = vshrl.u32 %v781, 16
    %v806 = vand.u32 %v776, 65535
    %v807 = vshrl.u32 %v776, 16
    %v808 = vmul.u32 %v804, %v806
    %v809 = vmul.u32 %v804, %v807
    %v810 = vmul.u32 %v805, %v806
    %v811 = vmul.u32 %v805, %v807
    %v812 = vshll.u32 %v809, 16
    %v813 = vshrl.u32 %v809, 16
    %v814 = vshll.u32 %v810, 16
    %v815 = vshrl.u32 %v810, 16
    %vm816 = vc.u32 %v808, %v812
    %v817 = vsel %vm816, 1, 0
    %v818 = vadd.s32 %v808, %v812
    %v819 = vadd.s32 %v811, %v817
    %vm820 = vc.u32 %v818, %v814
    %v821 = vsel %vm820, 1, 0
    %v822 = vadd.s32 %v818, %v814
    %v823 = vadd.s32 %v819, %v821
    %v824 = vadd.s32 %v823, %v813
    %v825 = vadd.s32 %v824, %v815
    %v826 = vmul.u32 %v781, %v772
    %v827 = vadd.s32 %v803, %v822
    %vm828 = vc.u32 %v803, %v822
    %v829 = vadd.s32 %v825, 1
    %v830 = vsel %vm828, %v829, %v825
    %v831 = vadd.s32 %v826, %v830
    %v832 = vadd.s32 %v831, 536870912
    %v833 = vshrl.u32 %v832, 30
    %v834 = vshll.u32 %v833, 30
    %v835 = vsub.s32 %v831, %v834
    %vm836 = vcmp.lt.s32.totalorder %v835, 0
    %v837 = vsub.s32 0, %v835
    %v838 = vsel %vm836, %v837, %v835
    %v839 = vclz %v838
    %v840 = vsub.s32 %v839, 2
    %vm841 = vcmp.gt.s32.totalorder 0, %v840
    %v842 = vsel %vm841, 0, %v840
    %v843 = vsub.s32 32, %v842
    %v844 = vshll.u32 %v835, %v842
    %v845 = vshrl.u32 %v827, %v843
    %v846 = vor.u32 %v844, %v845
    %v847 = vsub.s32 4294967266, %v842
    %v848 = vadd.s32 %v847, 127
    %v849 = vshll.u32 %v848, 23
    %v850 = vor.u32 4788187, %v849
    %v851 = vand.u32 2147483647, %v850
    %v853 = vcvt.s32.f32 %v846
    %v854 = vmul.f32 %v853, %v851
    %v855 = vxor.u32 %v854, 2147483648
    %v856 = vsel %vm735, %v855, %v854
    %v857 = vsub.s32 4, %v833
    %v858 = vsel %vm735, %v857, %v833
    %v859 = vsel %vm734, %v114, %v856
    %v860 = vsel %vm734, 0, %v858
    %v861 = vmul.f32 %v859, %v859
    %v862 = vmul.f32 %v861, -0.001358992
    %v863 = vadd.f32 %v862, 0.041655596
    %v864 = vmul.f32 %v861, %v863
    %v865 = vadd.f32 %v864, -0.4999988
    %v866 = vmul.f32 %v861, %v865
    %v867 = vadd.f32 1.0, %v866
    %v868 = vmul.f32 %v859, %v859
    %v869 = vmul.f32 %v868, -0.00019511016
    %v870 = vadd.f32 %v869, 0.008332121
    %v871 = vmul.f32 %v868, %v870
    %v872 = vadd.f32 %v871, -0.16666654
    %v873 = vmul.f32 %v868, %v872
    %v874 = vadd.f32 %v873, 1.0
    %v875 = vmul.f32 %v874, %v859
    %vm876 = vweird.f32 %v114
    %v877 = vand.u32 %v860, 3
    %vm878 = vcmp.lt.s32.totalorder %v877, 2
    %vm879 = vcmp.eq.s32.totalorder %v877, 0
    %v880 = vxor.u32 %v875, 2147483648
    %v881 = vsel %vm879, %v867, %v880
    %vm882 = vcmp.eq.s32.totalorder %v877, 2
    %v883 = vxor.u32 %v867, 2147483648
    %v884 = vsel %vm882, %v883, %v875
    %v885 = vsel %vm878, %v881, %v884
    %v886 = vsel %vm876, nan, %v885
    %v887 = vand.u32 2147483647, %v115
    %vm888 = vcmp.le.f32.partialorder %v887, 0.7853982
    %vm889 = vcmp.lt.s32.totalorder %v115, 0
    %v890 = vand.u32 %v115, 2139095040
    %v891 = vshrl.u32 %v890, 23
    %v892 = vsub.s32 %v891, 127
    %v893 = vand.u32 2147483647, %v115
    %v894 = vand.u32 %v893, 8388607
    %v895 = vor.u32 %v894, 8388608
    %v896 = vsub.s32 0, %v895
    %v897 = vadd.s32 %v892, 1
    %vm898 = vcmp.gt.s32.totalorder %v897, 0
    %v899 = vsel %vm898, %v897, 0
    %v900 = vshrl.u32 %v899, 5
    %v901 = vand.u32 %v899, 31
    %v902 = vsub.s32 32, %v901
    %v903 = vshrl.u32 683565275, %v902
    %v904 = vshll.u32 683565275, %v901
    %v905 = vshrl.u32 2475754826, %v902
    %v906 = vor.u32 %v904, %v905
    %v907 = vshll.u32 2475754826, %v901
    %v908 = vshrl.u32 2131351028, %v902
    %v909 = vor.u32 %v907, %v908
    %v910 = vshll.u32 2131351028, %v901
    %v911 = vshrl.u32 2102212464, %v902
    %v912 = vor.u32 %v910, %v911
    %v913 = vshll.u32 2102212464, %v901
    %v914 = vshrl.u32 920167782, %v902
    %v915 = vor.u32 %v913, %v914
    %v916 = vshll.u32 920167782, %v901
    %v917 = vshrl.u32 1326507024, %v902
    %v918 = vor.u32 %v916, %v917
    %vm919 = vcmp.lt.s32.totalorder %v900, 1
    %vm920 = vcmp.lt.s32.totalorder %v900, 2
    %vm921 = vcmp.lt.s32.totalorder %v900, 3
    %vm922 = vcmp.lt.s32.totalorder %v900, 4
    %v923 = vsel %vm919, %v903, %v906
    %v924 = vsel %vm922, %v912, 2102212464
    %v925 = vsel %vm921, %v909, %v924
    %v926 = vsel %vm920, %v923, %v925
    %v927 = vsel %vm919, %v906, %v909
    %v928 = vsel %vm922, %v915, 920167782
    %v929 = vsel %vm921, %v912, %v928
    %v930 = vsel %vm920, %v927, %v929
    %v931 = vsel %vm919, %v909, %v912
    %v932 = vsel %vm922, %v918, 1326507024
    %v933 = vsel %vm921, %v915, %v932
    %v934 = vsel %vm920, %v931, %v933
    %v935 = vshll.u32 %v895, 8
    %v936 = vand.u32 %v935, 65535
    %v937 = vshrl.u32 %v935, 16
    %v938 = vand.u32 %v934, 65535
    %v939 = vshrl.u32 %v934, 16
    %v940 = vmul.u32 %v936, %v938
    %v941 = vmul.u32 %v936, %v939
    %v942 = vmul.u32 %v937, %v938
    %v943 = vmul.u32 %v937, %v939
    %v944 = vshll.u32 %v941, 16
    %v945 = vshrl.u32 %v941, 16
    %v946 = vshll.u32 %v942, 16
    %v947 = vshrl.u32 %v942, 16
    %vm948 = vc.u32 %v940, %v944
    %v949 = vsel %vm948, 1, 0
    %v950 = vadd.s32 %v940, %v944
    %v951 = vadd.s32 %v943, %v949
    %vm952 = vc.u32 %v950, %v946
    %v953 = vsel %vm952, 1, 0
    %v954 = vadd.s32 %v950, %v946
    %v955 = vadd.s32 %v951, %v953
    %v956 = vadd.s32 %v955, %v945
    %v957 = vadd.s32 %v956, %v947
    %v958 = vand.u32 %v935, 65535
    %v959 = vshrl.u32 %v935, 16
    %v960 = vand.u32 %v930, 65535
    %v961 = vshrl.u32 %v930, 16
    %v962 = vmul.u32 %v958, %v960
    %v963 = vmul.u32 %v958, %v961
    %v964 = vmul.u32 %v959, %v960
    %v965 = vmul.u32 %v959, %v961
    %v966 = vshll.u32 %v963, 16
    %v967 = vshrl.u32 %v963, 16
    %v968 = vshll.u32 %v964, 16
    %v969 = vshrl.u32 %v964, 16
    %vm970 = vc.u32 %v962, %v966
    %v971 = vsel %vm970, 1, 0
    %v972 = vadd.s32 %v962, %v966
    %v973 = vadd.s32 %v965, %v971
    %vm974 = vc.u32 %v972, %v968
    %v975 = vsel %vm974, 1, 0
    %v976 = vadd.s32 %v972, %v968
    %v977 = vadd.s32 %v973, %v975
    %v978 = vadd.s32 %v977, %v967
    %v979 = vadd.s32 %v978, %v969
    %v980 = vmul.u32 %v935, %v926
    %v981 = vadd.s32 %v957, %v976
    %vm982 = vc.u32 %v957, %v976
    %v983 = vadd.s32 %v979, 1
    %v984 = vsel %vm982, %v983, %v979
    %v985 = vadd.s32 %v980, %v984
    %v986 = vadd.s32 %v985, 536870912
    %v987 = vshrl.u32 %v986, 30
    %v988 = vshll.u32 %v987, 30
    %v989 = vsub.s32 %v985, %v988
    %vm990 = vcmp.lt.s32.totalorder %v989, 0
    %v991 = vsub.s32 0, %v989
    %v992 = vsel %vm990, %v991, %v989
    %v993 = vclz %v992
    %v994 = vsub.s32 %v993, 2
    %vm995 = vcmp.gt.s32.totalorder 0, %v994
    %v996 = vsel %vm995, 0, %v994
    %v997 = vsub.s32 32, %v996
    %v998 = vshll.u32 %v989, %v996
    %v999 = vshrl.u32 %v981, %v997
    %v1000 = vor.u32 %v998, %v999
    %v1001 = vsub.s32 4294967266, %v996
    %v1002 = vadd.s32 %v1001, 127
    %v1003 = vshll.u32 %v1002, 23
    %v1004 = vor.u32 4788187, %v1003
    %v1005 = vand.u32 2147483647, %v1004
    %v1007 = vcvt.s32.f32 %v1000
    %v1008 = vmul.f32 %v1007, %v1005
    %v1009 = vxor.u32 %v1008, 2147483648
    %v1010 = vsel %vm889, %v1009, %v1008
    %v1011 = vsub.s32 4, %v987
    %v1012 = vsel %vm889, %v1011, %v987
    %v1013 = vsel %vm888, %v115, %v1010
    %v1014 = vsel %vm888, 0, %v1012
    %v1015 = vmul.f32 %v1013, %v1013
    %v1016 = vmul.f32 %v1015, -0.001358992
    %v1017 = vadd.f32 %v1016, 0.041655596
    %v1018 = vmul.f32 %v1015, %v1017
    %v1019 = vadd.f32 %v1018, -0.4999988
    %v1020 = vmul.f32 %v1015, %v1019
    %v1021 = vadd.f32 1.0, %v1020
    %v1022 = vmul.f32 %v1013, %v1013
    %v1023 = vmul.f32 %v1022, -0.00019511016
    %v1024 = vadd.f32 %v1023, 0.008332121
    %v1025 = vmul.f32 %v1022, %v1024
    %v1026 = vadd.f32 %v1025, -0.16666654
    %v1027 = vmul.f32 %v1022, %v1026
    %v1028 = vadd.f32 %v1027, 1.0
    %v1029 = vmul.f32 %v1028, %v1013
    %vm1030 = vweird.f32 %v115
    %v1031 = vand.u32 %v1014, 3
    %vm1032 = vcmp.lt.s32.totalorder %v1031, 2
    %vm1033 = vcmp.eq.s32.totalorder %v1031, 0
    %v1034 = vxor.u32 %v1029, 2147483648
    %v1035 = vsel %vm1033, %v1021, %v1034
    %vm1036 = vcmp.eq.s32.totalorder %v1031, 2
    %v1037 = vxor.u32 %v1021, 2147483648
    %v1038 = vsel %vm1036, %v1037, %v1029
    %v1039 = vsel %vm1032, %v1035, %v1038
    %v1040 = vsel %vm1030, nan, %v1039
    %v1041 = vand.u32 2147483647, %v116
    %vm1042 = vcmp.le.f32.partialorder %v1041, 0.7853982
    %vm1043 = vcmp.lt.s32.totalorder %v116, 0
    %v1044 = vand.u32 %v116, 2139095040
    %v1045 = vshrl.u32 %v1044, 23
    %v1046 = vsub.s32 %v1045, 127
    %v1047 = vand.u32 2147483647, %v116
    %v1048 = vand.u32 %v1047, 8388607
    %v1049 = vor.u32 %v1048, 8388608
    %v1050 = vsub.s32 0, %v1049
    %v1051 = vadd.s32 %v1046, 1
    %vm1052 = vcmp.gt.s32.totalorder %v1051, 0
    %v1053 = vsel %vm1052, %v1051, 0
    %v1054 = vshrl.u32 %v1053, 5
    %v1055 = vand.u32 %v1053, 31
    %v1056 = vsub.s32 32, %v1055
    %v1057 = vshrl.u32 683565275, %v1056
    %v1058 = vshll.u32 683565275, %v1055
    %v1059 = vshrl.u32 2475754826, %v1056
    %v1060 = vor.u32 %v1058, %v1059
    %v1061 = vshll.u32 2475754826, %v1055
    %v1062 = vshrl.u32 2131351028, %v1056
    %v1063 = vor.u32 %v1061, %v1062
    %v1064 = vshll.u32 2131351028, %v1055
    %v1065 = vshrl.u32 2102212464, %v1056
    %v1066 = vor.u32 %v1064, %v1065
    %v1067 = vshll.u32 2102212464, %v1055
    %v1068 = vshrl.u32 920167782, %v1056
    %v1069 = vor.u32 %v1067, %v1068
    %v1070 = vshll.u32 920167782, %v1055
    %v1071 = vshrl.u32 1326507024, %v1056
    %v1072 = vor.u32 %v1070, %v1071
    %vm1073 = vcmp.lt.s32.totalorder %v1054, 1
    %vm1074 = vcmp.lt.s32.totalorder %v1054, 2
    %vm1075 = vcmp.lt.s32.totalorder %v1054, 3
    %vm1076 = vcmp.lt.s32.totalorder %v1054, 4
    %v1077 = vsel %vm1073, %v1057, %v1060
    %v1078 = vsel %vm1076, %v1066, 2102212464
    %v1079 = vsel %vm1075, %v1063, %v1078
    %v1080 = vsel %vm1074, %v1077, %v1079
    %v1081 = vsel %vm1073, %v1060, %v1063
    %v1082 = vsel %vm1076, %v1069, 920167782
    %v1083 = vsel %vm1075, %v1066, %v1082
    %v1084 = vsel %vm1074, %v1081, %v1083
    %v1085 = vsel %vm1073, %v1063, %v1066
    %v1086 = vsel %vm1076, %v1072, 1326507024
    %v1087 = vsel %vm1075, %v1069, %v1086
    %v1088 = vsel %vm1074, %v1085, %v1087
    %v1089 = vshll.u32 %v1049, 8
    %v1090 = vand.u32 %v1089, 65535
    %v1091 = vshrl.u32 %v1089, 16
    %v1092 = vand.u32 %v1088, 65535
    %v1093 = vshrl.u32 %v1088, 16
    %v1094 = vmul.u32 %v1090, %v1092
    %v1095 = vmul.u32 %v1090, %v1093
    %v1096 = vmul.u32 %v1091, %v1092
    %v1097 = vmul.u32 %v1091, %v1093
    %v1098 = vshll.u32 %v1095, 16
    %v1099 = vshrl.u32 %v1095, 16
    %v1100 = vshll.u32 %v1096, 16
    %v1101 = vshrl.u32 %v1096, 16
    %vm1102 = vc.u32 %v1094, %v1098
    %v1103 = vsel %vm1102, 1, 0
    %v1104 = vadd.s32 %v1094, %v1098
    %v1105 = vadd.s32 %v1097, %v1103
    %vm1106 = vc.u32 %v1104, %v1100
    %v1107 = vsel %vm1106, 1, 0
    %v1108 = vadd.s32 %v1104, %v1100
    %v1109 = vadd.s32 %v1105, %v1107
    %v1110 = vadd.s32 %v1109, %v1099
    %v1111 = vadd.s32 %v1110, %v1101
    %v1112 = vand.u32 %v1089, 65535
    %v1113 = vshrl.u32 %v1089, 16
    %v1114 = vand.u32 %v1084, 65535
    %v1115 = vshrl.u32 %v1084, 16
    %v1116 = vmul.u32 %v1112, %v1114
    %v1117 = vmul.u32 %v1112, %v1115
    %v1118 = vmul.u32 %v1113, %v1114
    %v1119 = vmul.u32 %v1113, %v1115
    %v1120 = vshll.u32 %v1117, 16
    %v1121 = vshrl.u32 %v1117, 16
    %v1122 = vshll.u32 %v1118, 16
    %v1123 = vshrl.u32 %v1118, 16
    %vm1124 = vc.u32 %v1116, %v1120
    %v1125 = vsel %vm1124, 1, 0
    %v1126 = vadd.s32 %v1116, %v1120
    %v1127 = vadd.s32 %v1119, %v1125
    %vm1128 = vc.u32 %v1126, %v1122
    %v1129 = vsel %vm1128, 1, 0
    %v1130 = vadd.s32 %v1126, %v1122
    %v1131 = vadd.s32 %v1127, %v1129
    %v1132 = vadd.s32 %v1131, %v1121
    %v1133 = vadd.s32 %v1132, %v1123
    %v1134 = vmul.u32 %v1089, %v1080
    %v1135 = vadd.s32 %v1111, %v1130
    %vm1136 = vc.u32 %v1111, %v1130
    %v1137 = vadd.s32 %v1133, 1
    %v1138 = vsel %vm1136, %v1137, %v1133
    %v1139 = vadd.s32 %v1134, %v1138
    %v1140 = vadd.s32 %v1139, 536870912
    %v1141 = vshrl.u32 %v1140, 30
    %v1142 = vshll.u32 %v1141, 30
    %v1143 = vsub.s32 %v1139, %v1142
    %vm1144 = vcmp.lt.s32.totalorder %v1143, 0
    %v1145 = vsub.s32 0, %v1143
    %v1146 = vsel %vm1144, %v1145, %v1143
    %v1147 = vclz %v1146
    %v1148 = vsub.s32 %v1147, 2
    %vm1149 = vcmp.gt.s32.totalorder 0, %v1148
    %v1150 = vsel %vm1149, 0, %v1148
    %v1151 = vsub.s32 32, %v1150
    %v1152 = vshll.u32 %v1143, %v1150
    %v1153 = vshrl.u32 %v1135, %v1151
    %v1154 = vor.u32 %v1152, %v1153
    %v1155 = vsub.s32 4294967266, %v1150
    %v1156 = vadd.s32 %v1155, 127
    %v1157 = vshll.u32 %v1156, 23
    %v1158 = vor.u32 4788187, %v1157
    %v1159 = vand.u32 2147483647, %v1158
    %v1161 = vcvt.s32.f32 %v1154
    %v1162 = vmul.f32 %v1161, %v1159
    %v1163 = vxor.u32 %v1162, 2147483648
    %v1164 = vsel %vm1043, %v1163, %v1162
    %v1165 = vsub.s32 4, %v1141
    %v1166 = vsel %vm1043, %v1165, %v1141
    %v1167 = vsel %vm1042, %v116, %v1164
    %v1168 = vsel %vm1042, 0, %v1166
    %v1169 = vmul.f32 %v1167, %v1167
    %v1170 = vmul.f32 %v1169, -0.001358992
    %v1171 = vadd.f32 %v1170, 0.041655596
    %v1172 = vmul.f32 %v1169, %v1171
    %v1173 = vadd.f32 %v1172, -0.4999988
    %v1174 = vmul.f32 %v1169, %v1173
    %v1175 = vadd.f32 1.0, %v1174
    %v1176 = vmul.f32 %v1167, %v1167
    %v1177 = vmul.f32 %v1176, -0.00019511016
    %v1178 = vadd.f32 %v1177, 0.008332121
    %v1179 = vmul.f32 %v1176, %v1178
    %v1180 = vadd.f32 %v1179, -0.16666654
    %v1181 = vmul.f32 %v1176, %v1180
    %v1182 = vadd.f32 %v1181, 1.0
    %v1183 = vmul.f32 %v1182, %v1167
    %vm1184 = vweird.f32 %v116
    %v1185 = vand.u32 %v1168, 3
    %vm1186 = vcmp.lt.s32.totalorder %v1185, 2
    %vm1187 = vcmp.eq.s32.totalorder %v1185, 0
    %v1188 = vxor.u32 %v1183, 2147483648
    %v1189 = vsel %vm1187, %v1175, %v1188
    %vm1190 = vcmp.eq.s32.totalorder %v1185, 2
    %v1191 = vxor.u32 %v1175, 2147483648
    %v1192 = vsel %vm1190, %v1191, %v1183
    %v1193 = vsel %vm1186, %v1189, %v1192
    %v1194 = vsel %vm1184, nan, %v1193
    %v1195 = vsub.f32 1.0, %v270
    %v1196 = vsub.f32 1.0, %v424
    %v1197 = vsub.f32 1.0, %v578
    %v1198 = vsub.f32 1.0, %v732
    %v1199 = vsub.f32 1.0, %v886
    %v1200 = vsub.f32 1.0, %v1040
    %v1201 = vsub.f32 1.0, %v1194
    %1208 = vrot.lane.b32.xlu0 %v1195, 127
    %v1209 = vpop.permute.xlu0 %1208
    %1210 = vrot.lane.b32.xlu0 %v1196, 127
    %v1211 = vpop.permute.xlu0 %1210
    %1212 = vrot.lane.b32.xlu0 %v1197, 127
    %v1213 = vpop.permute.xlu0 %1212
    %1214 = vrot.lane.b32.xlu0 %v1198, 127
    %v1215 = vpop.permute.xlu0 %1214
    %1216 = vrot.lane.b32.xlu0 %v1199, 127
    %v1217 = vpop.permute.xlu0 %1216
    %1218 = vrot.lane.b32.xlu0 %v1200, 127
    %v1219 = vpop.permute.xlu0 %1218
    %vm1220 = vcmask 1039360
    %v1221 = vsel %vm1220, %v1209, %v1211
    %v1222 = vsel %vm1220, %v1211, %v1213
    %v1223 = vsel %vm1220, %v1213, %v1215
    %v1224 = vsel %vm1220, %v1215, %v1217
    %v1225 = vsel %vm1220, %v1217, %v1219
    %v1232 = vmul.f32 %v1195, %v1221
    %v1233 = vmul.f32 %v1196, %v1222
    %v1234 = vmul.f32 %v1197, %v1223
    %v1235 = vmul.f32 %v1198, %v1224
    %v1236 = vmul.f32 %v1199, %v1225
    %v1237 = vmul.f32 %v1200, %v1219
    %1239 = vrot.lane.b32.xlu0 %v1195, 100
    %v1240 = vpop.permute.xlu0 %1239
    %1241 = vrot.lane.b32.xlu0 %v1196, 100
    %v1242 = vpop.permute.xlu0 %1241
    %1243 = vrot.lane.b32.xlu0 %v1197, 100
    %v1244 = vpop.permute.xlu0 %1243
    %1245 = vrot.lane.b32.xlu0 %v1198, 100
    %v1246 = vpop.permute.xlu0 %1245
    %1247 = vrot.lane.b32.xlu0 %v1199, 100
    %v1248 = vpop.permute.xlu0 %1247
    %1249 = vrot.lane.b32.xlu0 %v1200, 100
    %v1250 = vpop.permute.xlu0 %1249
    %1251 = vrot.lane.b32.xlu0 %v1201, 100
    %v1252 = vpop.permute.xlu0 %1251
    %vm1253 = vcmask 818176
    %v1254 = vsel %vm1253, %v1240, %v1242
    %v1255 = vsel %vm1253, %v1242, %v1244
    %v1256 = vsel %vm1253, %v1244, %v1246
    %v1257 = vsel %vm1253, %v1246, %v1248
    %v1258 = vsel %vm1253, %v1248, %v1250
    %v1259 = vsel %vm1253, %v1250, %v1252
    %v1266 = vmul.f32 %v1232, %v1254
    %v1267 = vmul.f32 %v1233, %v1255
    %v1268 = vmul.f32 %v1234, %v1256
    %v1269 = vmul.f32 %v1235, %v1257
    %v1270 = vmul.f32 %v1236, %v1258
    %v1271 = vmul.f32 %v1237, %v1259
    %v1272 = vmul.f32 %v1266, 0.25
    %v1273 = vmul.f32 %v1267, 0.25
    %v1274 = vmul.f32 %v1268, 0.25
    %v1275 = vmul.f32 %v1269, 0.25
    %v1276 = vmul.f32 %v1270, 0.25
    %v1277 = vmul.f32 %v1271, 0.25
    %v1278 = vsub.f32 1.0, %v1272
    %v1279 = vsub.f32 1.0, %v1273
    %v1280 = vsub.f32 1.0, %v1274
    %v1281 = vsub.f32 1.0, %v1275
    %v1282 = vsub.f32 1.0, %v1276
    %v1283 = vsub.f32 1.0, %v1277
    %1290 = vrot.lane.b32.xlu0 %v1278, 29
    %v1291 = vpop.permute.xlu0 %1290
    %1292 = vrot.lane.b32.xlu0 %v1279, 29
    %v1293 = vpop.permute.xlu0 %1292
    %1294 = vrot.lane.b32.xlu0 %v1280, 29
    %v1295 = vpop.permute.xlu0 %1294
    %1296 = vrot.lane.b32.xlu0 %v1281, 29
    %v1297 = vpop.permute.xlu0 %1296
    %1298 = vrot.lane.b32.xlu0 %v1282, 29
    %v1299 = vpop.permute.xlu0 %1298
    %1300 = vrot.lane.b32.xlu0 %v1283, 29
    %v1301 = vpop.permute.xlu0 %1300
    %vm1302 = vcmask 236544
    %v1303 = vsel %vm1302, %v1291, %v1293
    %v1304 = vsel %vm1302, %v1293, %v1295
    %v1305 = vsel %vm1302, %v1295, %v1297
    %v1306 = vsel %vm1302, %v1297, %v1299
    %v1307 = vsel %vm1302, %v1299, %v1301
    %v1315 = vmul.f32 %v270, %v1291
    %v1316 = vmul.f32 %v424, %v1303
    %v1317 = vmul.f32 %v578, %v1304
    %v1318 = vmul.f32 %v732, %v1305
    %v1319 = vmul.f32 %v886, %v1306
    %v1320 = vmul.f32 %v1040, %v1307
    %v1321 = vmul.f32 %v1194, %v1301
    %v1322 = vpack.c.bf16 %v1315, %v1315
    %v1323 = vpack.c.bf16 %v1316, %v1316
    %v1324 = vpack.c.bf16 %v1317, %v1317
    %v1325 = vpack.c.bf16 %v1318, %v1318
    %v1326 = vpack.c.bf16 %v1319, %v1319
    %v1327 = vpack.c.bf16 %v1320, %v1320
    %v1328 = vpack.c.bf16 %v1321, %v1321
    %v1329 = vld [vmem:[#allocation7] sm:$0xf]
    %v1330 = vld [vmem:[#allocation7 + $0x4] sm:$0xf]
    %v1331 = vld [vmem:[#allocation7 + $0x8] sm:$0xf]
    %v1332 = vld [vmem:[#allocation7 + $0xc] sm:$0xf]
    %v1333 = vld [vmem:[#allocation7 + $0x10] sm:$0xf]
    %v1334 = vld [vmem:[#allocation7 + $0x14] sm:$0xf]
    %v1335 = vld [vmem:[#allocation7 + $0x18] sm:$0xf]
    %v1336 = vld [vmem:[#allocation7 + $0x1c] sm:$0xf]
    %v1337 = vld [vmem:[#allocation7 + $0x20] sm:$0xf]
    %v1338 = vld [vmem:[#allocation7 + $0x24] sm:$0xf]
    %v1339 = vld [vmem:[#allocation7 + $0x28] sm:$0xf]
    %v1340 = vld [vmem:[#allocation7 + $0x2c] sm:$0xf]
    %v1341 = vld [vmem:[#allocation7 + $0x30] sm:$0xf]
    %v1342 = vld [vmem:[#allocation7 + $0x34] sm:$0xf]
    %v1343 = vld [vmem:[#allocation7 + $0x38] sm:$0xf]
    %v1344 = vld [vmem:[#allocation7 + $0x3c] sm:$0xf]
    %v1345 = vld [vmem:[#allocation7 + $0x40] sm:$0xf]
    %v1346 = vld [vmem:[#allocation7 + $0x44] sm:$0xf]
    %v1347 = vld [vmem:[#allocation7 + $0x48] sm:$0xf]
    %v1348 = vld [vmem:[#allocation7 + $0x4c] sm:$0xf]
    %v1349 = vld [vmem:[#allocation7 + $0x50] sm:$0xf]
    %v1350 = vld [vmem:[#allocation7 + $0x54] sm:$0xf]
    %v1351 = vld [vmem:[#allocation7 + $0x58] sm:$0xf]
    %v1352 = vld [vmem:[#allocation7 + $0x5c] sm:$0xf]
    %v1353 = vld [vmem:[#allocation7 + $0x60] sm:$0xf]
    %v1354 = vld [vmem:[#allocation7 + $0x64] sm:$0xf]
    %v1355 = vld [vmem:[#allocation7 + $0x68] sm:$0xf]
    %v1356 = vld [vmem:[#allocation7 + $0x6c] sm:$0xf]
    %v1357 = vld [vmem:[#allocation7 + $0x70] sm:$0xf]
    %v1358 = vld [vmem:[#allocation7 + $0x74] sm:$0xf]
    %v1359 = vld [vmem:[#allocation7 + $0x78] sm:$0xf]
    %v1360 = vld [vmem:[#allocation7 + $0x7c] sm:$0xf]
    %v1361 = vld [vmem:[#allocation7 + $0x80] sm:$0xf]
    %v1362 = vld [vmem:[#allocation7 + $0x84] sm:$0xf]
    %v1363 = vld [vmem:[#allocation7 + $0x88] sm:$0xf]
    %v1364 = vld [vmem:[#allocation7 + $0x8c] sm:$0xf]
    %v1365 = vld [vmem:[#allocation7 + $0x90] sm:$0xf]
    %v1366 = vld [vmem:[#allocation7 + $0x94] sm:$0xf]
    %v1367 = vld [vmem:[#allocation7 + $0x98] sm:$0xf]
    %v1368 = vld [vmem:[#allocation7 + $0x9c] sm:$0xf]
    %v1369 = vld [vmem:[#allocation7 + $0xa0] sm:$0xf]
    %v1370 = vld [vmem:[#allocation7 + $0xa4] sm:$0xf]
    %v1371 = vld [vmem:[#allocation7 + $0xa8] sm:$0xf]
    %v1372 = vld [vmem:[#allocation7 + $0xac] sm:$0xf]
    %v1373 = vld [vmem:[#allocation7 + $0xb0] sm:$0xf]
    %v1374 = vld [vmem:[#allocation7 + $0xb4] sm:$0xf]
    %v1375 = vld [vmem:[#allocation7 + $0xb8] sm:$0xf]
    %v1376 = vld [vmem:[#allocation7 + $0xbc] sm:$0xf]
    %v1377 = vld [vmem:[#allocation7 + $0xc0] sm:$0xf]
    %v1378 = vld [vmem:[#allocation7 + $0xc4] sm:$0xf]
    %v1379 = vld [vmem:[#allocation7 + $0xc8] sm:$0xf]
    %v1380 = vld [vmem:[#allocation7 + $0xcc] sm:$0xf]
    %v1381 = vld [vmem:[#allocation7 + $0xd0] sm:$0xf]
    %v1382 = vld [vmem:[#allocation7 + $0xd4] sm:$0xf]
    %v1383 = vld [vmem:[#allocation7 + $0xd8] sm:$0xf]
    %v1384 = vld [vmem:[#allocation7 + $0xdc] sm:$0xf]
    %v1385 = vld [vmem:[#allocation7 + $0xe0] sm:$0xf]
    %v1386 = vld [vmem:[#allocation7 + $0xe4] sm:$0xf]
    %v1387 = vld [vmem:[#allocation7 + $0xe8] sm:$0xf]
    %v1388 = vld [vmem:[#allocation7 + $0xec] sm:$0xf]
    %v1389 = vld [vmem:[#allocation7 + $0xf0] sm:$0xf]
    %v1390 = vld [vmem:[#allocation7 + $0xf4] sm:$0xf]
    %v1391 = vld [vmem:[#allocation7 + $0xf8] sm:$0xf]
    %v1392 = vld [vmem:[#allocation7 + $0xfc] sm:$0xf]
    %v1393 = vld [vmem:[#allocation7 + $0x100] sm:$0xf]
    %v1394 = vld [vmem:[#allocation7 + $0x104] sm:$0xf]
    %v1395 = vld [vmem:[#allocation7 + $0x108] sm:$0xf]
    %v1396 = vld [vmem:[#allocation7 + $0x10c] sm:$0xf]
    %v1397 = vld [vmem:[#allocation7 + $0x110] sm:$0xf]
    %v1398 = vld [vmem:[#allocation7 + $0x114] sm:$0xf]
    %v1399 = vld [vmem:[#allocation7 + $0x118] sm:$0xf]
    %v1400 = vld [vmem:[#allocation7 + $0x11c] sm:$0xf]
    %v1401 = vld [vmem:[#allocation7 + $0x120] sm:$0xf]
    %v1402 = vld [vmem:[#allocation7 + $0x124] sm:$0xf]
    %v1403 = vld [vmem:[#allocation7 + $0x128] sm:$0xf]
    %v1404 = vld [vmem:[#allocation7 + $0x12c] sm:$0xf]
    %v1405 = vld [vmem:[#allocation7 + $0x130] sm:$0xf]
    %v1406 = vld [vmem:[#allocation7 + $0x134] sm:$0xf]
    %v1407 = vld [vmem:[#allocation7 + $0x138] sm:$0xf]
    %v1408 = vld [vmem:[#allocation7 + $0x13c] sm:$0xf]
    %v1409 = vld [vmem:[#allocation7 + $0x140] sm:$0xf]
    %v1410 = vld [vmem:[#allocation7 + $0x144] sm:$0xf]
    %v1411 = vld [vmem:[#allocation7 + $0x148] sm:$0xf]
    %v1412 = vld [vmem:[#allocation7 + $0x14c] sm:$0xf]
    %v1413 = vld [vmem:[#allocation7 + $0x150] sm:$0xf]
    %v1414 = vld [vmem:[#allocation7 + $0x154] sm:$0xf]
    %v1415 = vld [vmem:[#allocation7 + $0x158] sm:$0xf]
    %v1416 = vld [vmem:[#allocation7 + $0x15c] sm:$0xf]
    %v1417 = vld [vmem:[#allocation7 + $0x160] sm:$0xf]
    %v1418 = vld [vmem:[#allocation7 + $0x164] sm:$0xf]
    %v1419 = vld [vmem:[#allocation7 + $0x168] sm:$0xf]
    %v1420 = vld [vmem:[#allocation7 + $0x16c] sm:$0xf]
    %v1421 = vld [vmem:[#allocation7 + $0x170] sm:$0xf]
    %v1422 = vld [vmem:[#allocation7 + $0x174] sm:$0xf]
    %v1423 = vld [vmem:[#allocation7 + $0x178] sm:$0x3]
    %v1424 = vld [vmem:[%s3] sm:$0x1]
    %v1426 = vperm.slane %v1424, 0
    %1435 = vrot.lane.b32.xlu0 %v1322, 99
    %v1436 = vpop.permute.xlu0 %1435
    %1437 = vrot.lane.b32.xlu0 %v1323, 99
    %v1438 = vpop.permute.xlu0 %1437
    %1439 = vrot.lane.b32.xlu0 %v1324, 99
    %v1440 = vpop.permute.xlu0 %1439
    %1441 = vrot.lane.b32.xlu0 %v1325, 99
    %v1442 = vpop.permute.xlu0 %1441
    %1443 = vrot.lane.b32.xlu0 %v1326, 99
    %v1444 = vpop.permute.xlu0 %1443
    %1445 = vrot.lane.b32.xlu0 %v1327, 99
    %v1446 = vpop.permute.xlu0 %1445
    %1447 = vrot.lane.b32.xlu0 %v1328, 99
    %v1448 = vpop.permute.xlu0 %1447
    %vm1449 = vcmask 809984
    %v1450 = vsel %vm1449, %v1436, %v1438
    %v1451 = vsel %vm1449, %v1438, %v1440
    %v1452 = vsel %vm1449, %v1440, %v1442
    %v1453 = vsel %vm1449, %v1442, %v1444
    %v1454 = vsel %vm1449, %v1444, %v1446
    %v1455 = vsel %vm1449, %v1446, %v1448
    %v1556 = vunpack.c.l.b16 %v1329
    %v1557 = vunpack.c.l.b16 %v1330
    %v1558 = vunpack.c.l.b16 %v1331
    %v1559 = vunpack.c.l.b16 %v1332
    %v1560 = vunpack.c.l.b16 %v1333
    %v1561 = vunpack.c.l.b16 %v1334
    %v1562 = vunpack.c.l.b16 %v1335
    %v1563 = vunpack.c.l.b16 %v1336
    %v1564 = vunpack.c.l.b16 %v1337
    %v1565 = vunpack.c.l.b16 %v1338
    %v1566 = vunpack.c.l.b16 %v1339
    %v1567 = vunpack.c.l.b16 %v1340
    %v1568 = vunpack.c.l.b16 %v1341
    %v1569 = vunpack.c.l.b16 %v1342
    %v1570 = vunpack.c.l.b16 %v1343
    %v1571 = vunpack.c.l.b16 %v1344
    %v1572 = vunpack.c.l.b16 %v1345
    %v1573 = vunpack.c.l.b16 %v1346
    %v1574 = vunpack.c.l.b16 %v1347
    %v1575 = vunpack.c.l.b16 %v1348
    %v1576 = vunpack.c.l.b16 %v1349
    %v1577 = vunpack.c.l.b16 %v1350
    %v1578 = vunpack.c.l.b16 %v1351
    %v1579 = vunpack.c.l.b16 %v1352
    %v1580 = vunpack.c.l.b16 %v1353
    %v1581 = vunpack.c.l.b16 %v1354
    %v1582 = vunpack.c.l.b16 %v1355
    %v1583 = vunpack.c.l.b16 %v1356
    %v1584 = vunpack.c.l.b16 %v1357
    %v1585 = vunpack.c.l.b16 %v1358
    %v1586 = vunpack.c.l.b16 %v1359
    %v1587 = vunpack.c.l.b16 %v1360
    %v1588 = vunpack.c.l.b16 %v1361
    %v1589 = vunpack.c.l.b16 %v1362
    %v1590 = vunpack.c.l.b16 %v1363
    %v1591 = vunpack.c.l.b16 %v1364
    %v1592 = vunpack.c.l.b16 %v1365
    %v1593 = vunpack.c.l.b16 %v1366
    %v1594 = vunpack.c.l.b16 %v1367
    %v1595 = vunpack.c.l.b16 %v1368
    %v1596 = vunpack.c.l.b16 %v1369
    %v1597 = vunpack.c.l.b16 %v1370
    %v1598 = vunpack.c.l.b16 %v1371
    %v1599 = vunpack.c.l.b16 %v1372
    %v1600 = vunpack.c.l.b16 %v1373
    %v1601 = vunpack.c.l.b16 %v1374
    %v1602 = vunpack.c.l.b16 %v1375
    %v1603 = vunpack.c.l.b16 %v1376
    %v1604 = vunpack.c.l.b16 %v1377
    %v1605 = vunpack.c.l.b16 %v1378
    %v1606 = vunpack.c.l.b16 %v1379
    %v1607 = vunpack.c.l.b16 %v1380
    %v1608 = vunpack.c.l.b16 %v1381
    %v1609 = vunpack.c.l.b16 %v1382
    %v1610 = vunpack.c.l.b16 %v1383
    %v1611 = vunpack.c.l.b16 %v1384
    %v1612 = vunpack.c.l.b16 %v1385
    %v1613 = vunpack.c.l.b16 %v1386
    %v1614 = vunpack.c.l.b16 %v1387
    %v1615 = vunpack.c.l.b16 %v1388
    %v1616 = vunpack.c.l.b16 %v1389
    %v1617 = vunpack.c.l.b16 %v1390
    %v1618 = vunpack.c.l.b16 %v1391
    %v1619 = vunpack.c.l.b16 %v1392
    %v1620 = vunpack.c.l.b16 %v1393
    %v1621 = vunpack.c.l.b16 %v1394
    %v1622 = vunpack.c.l.b16 %v1395
    %v1623 = vunpack.c.l.b16 %v1396
    %v1624 = vunpack.c.l.b16 %v1397
    %v1625 = vunpack.c.l.b16 %v1398
    %v1626 = vunpack.c.l.b16 %v1399
    %v1627 = vunpack.c.l.b16 %v1400
    %v1628 = vunpack.c.l.b16 %v1401
    %v1629 = vunpack.c.l.b16 %v1402
    %v1630 = vunpack.c.l.b16 %v1403
    %v1631 = vunpack.c.l.b16 %v1404
    %v1632 = vunpack.c.l.b16 %v1405
    %v1633 = vunpack.c.l.b16 %v1406
    %v1634 = vunpack.c.l.b16 %v1407
    %v1635 = vunpack.c.l.b16 %v1408
    %v1636 = vunpack.c.l.b16 %v1409
    %v1637 = vunpack.c.l.b16 %v1410
    %v1638 = vunpack.c.l.b16 %v1411
    %v1639 = vunpack.c.l.b16 %v1412
    %v1640 = vunpack.c.l.b16 %v1413
    %v1641 = vunpack.c.l.b16 %v1414
    %v1642 = vunpack.c.l.b16 %v1415
    %v1643 = vunpack.c.l.b16 %v1416
    %v1644 = vunpack.c.l.b16 %v1417
    %v1645 = vunpack.c.l.b16 %v1418
    %v1646 = vunpack.c.l.b16 %v1419
    %v1647 = vunpack.c.l.b16 %v1420
    %v1648 = vunpack.c.l.b16 %v1421
    %v1649 = vunpack.c.l.b16 %v1422
    %v1650 = vunpack.c.l.b16 %v1423
    %v1651 = vpack.c.b16 %v1557, %v1556
    %v1652 = vpack.c.b16 %v1559, %v1558
    %v1653 = vpack.c.b16 %v1561, %v1560
    %v1654 = vpack.c.b16 %v1563, %v1562
    %v1655 = vpack.c.b16 %v1565, %v1564
    %v1656 = vpack.c.b16 %v1567, %v1566
    %v1657 = vpack.c.b16 %v1569, %v1568
    %v1658 = vpack.c.b16 %v1571, %v1570
    %v1659 = vpack.c.b16 %v1573, %v1572
    %v1660 = vpack.c.b16 %v1575, %v1574
    %v1661 = vpack.c.b16 %v1577, %v1576
    %v1662 = vpack.c.b16 %v1579, %v1578
    %v1663 = vpack.c.b16 %v1581, %v1580
    %v1664 = vpack.c.b16 %v1583, %v1582
    %v1665 = vpack.c.b16 %v1585, %v1584
    %v1666 = vpack.c.b16 %v1587, %v1586
    %v1667 = vpack.c.b16 %v1589, %v1588
    %v1668 = vpack.c.b16 %v1591, %v1590
    %v1669 = vpack.c.b16 %v1593, %v1592
    %v1670 = vpack.c.b16 %v1595, %v1594
    %v1671 = vpack.c.b16 %v1597, %v1596
    %v1672 = vpack.c.b16 %v1599, %v1598
    %v1673 = vpack.c.b16 %v1601, %v1600
    %v1674 = vpack.c.b16 %v1603, %v1602
    %v1675 = vpack.c.b16 %v1605, %v1604
    %v1676 = vpack.c.b16 %v1607, %v1606
    %v1677 = vpack.c.b16 %v1609, %v1608
    %v1678 = vpack.c.b16 %v1611, %v1610
    %v1679 = vpack.c.b16 %v1613, %v1612
    %v1680 = vpack.c.b16 %v1615, %v1614
    %v1681 = vpack.c.b16 %v1617, %v1616
    %v1682 = vpack.c.b16 %v1619, %v1618
    %v1683 = vpack.c.b16 %v1621, %v1620
    %v1684 = vpack.c.b16 %v1623, %v1622
    %v1685 = vpack.c.b16 %v1625, %v1624
    %v1686 = vpack.c.b16 %v1627, %v1626
    %v1687 = vpack.c.b16 %v1629, %v1628
    %v1688 = vpack.c.b16 %v1631, %v1630
    %v1689 = vpack.c.b16 %v1633, %v1632
    %v1690 = vpack.c.b16 %v1635, %v1634
    %v1691 = vpack.c.b16 %v1637, %v1636
    %v1692 = vpack.c.b16 %v1639, %v1638
    %v1693 = vpack.c.b16 %v1641, %v1640
    %v1694 = vpack.c.b16 %v1643, %v1642
    %v1695 = vpack.c.b16 %v1645, %v1644
    %v1696 = vpack.c.b16 %v1647, %v1646
    %v1697 = vpack.c.b16 %v1649, %v1648
    %v1698 = vpack.c.b16 %v1650, %v1650
    %vm1746 = vcmask 941056
    %v1748 = vsel %vm1746, %v1455, 0
    %vm1750 = vcmask 1040384
    %vm1751 = vcmask 1041408
    %v1752 = vsel %vm1750, 4294967295, 65535
    %v1753 = vsel %vm1751, %v1752, 0
    %v1755 = vand.u32 %v1698, %v1753
    %1757 = vmatpush.bf16.msra.mxu0 %v1658
    %1758 = vmatpush.bf16.msra.mxu0 %v1657
    %1759 = vmatpush.bf16.msra.mxu0 %v1656
    %1760 = vmatpush.bf16.msra.mxu0 %v1655
    %1761 = vmatpush.bf16.msra.mxu0 %v1654
    %1762 = vmatpush.bf16.msra.mxu0 %v1653
    %1763 = vmatpush.bf16.msra.mxu0 %v1652
    %1764 = vmatpush.bf16.msra.mxu0 %v1651
    %1765 = vmatmul.bf16.gmra.mxu0 %v1450
    %v1766 = vpop.f32.mrf.mxu0
    %v1767 = vadd.f32 %v1426, %v1766
    %v1768 = vpop.f32.mrf.mxu0
    %1769 = vdwg.mxu0
    %1770 = vmatpush.bf16.msra.mxu0 %v1666
    %1771 = vmatpush.bf16.msra.mxu0 %v1665
    %1772 = vmatpush.bf16.msra.mxu0 %v1664
    %1773 = vmatpush.bf16.msra.mxu0 %v1663
    %1774 = vmatpush.bf16.msra.mxu0 %v1662
    %1775 = vmatpush.bf16.msra.mxu0 %v1661
    %1776 = vmatpush.bf16.msra.mxu0 %v1660
    %1777 = vmatpush.bf16.msra.mxu0 %v1659
    %1778 = vmatmul.bf16.gmra.mxu0 %v1451
    %v1779 = vpop.f32.mrf.mxu0
    %v1780 = vadd.f32 %v1767, %v1779
    %v1781 = vpop.f32.mrf.mxu0
    %1782 = vdwg.mxu0
    %1783 = vmatpush.bf16.msra.mxu0 %v1674
    %1784 = vmatpush.bf16.msra.mxu0 %v1673
    %1785 = vmatpush.bf16.msra.mxu0 %v1672
    %1786 = vmatpush.bf16.msra.mxu0 %v1671
    %1787 = vmatpush.bf16.msra.mxu0 %v1670
    %1788 = vmatpush.bf16.msra.mxu0 %v1669
    %1789 = vmatpush.bf16.msra.mxu0 %v1668
    %1790 = vmatpush.bf16.msra.mxu0 %v1667
    %1791 = vmatmul.bf16.gmra.mxu0 %v1452
    %v1792 = vpop.f32.mrf.mxu0
    %v1793 = vadd.f32 %v1780, %v1792
    %v1794 = vpop.f32.mrf.mxu0
    %1795 = vdwg.mxu0
    %1796 = vmatpush.bf16.msra.mxu0 %v1682
    %1797 = vmatpush.bf16.msra.mxu0 %v1681
    %1798 = vmatpush.bf16.msra.mxu0 %v1680
    %1799 = vmatpush.bf16.msra.mxu0 %v1679
    %1800 = vmatpush.bf16.msra.mxu0 %v1678
    %1801 = vmatpush.bf16.msra.mxu0 %v1677
    %1802 = vmatpush.bf16.msra.mxu0 %v1676
    %1803 = vmatpush.bf16.msra.mxu0 %v1675
    %1804 = vmatmul.bf16.gmra.mxu0 %v1453
    %v1805 = vpop.f32.mrf.mxu0
    %v1806 = vadd.f32 %v1793, %v1805
    %v1807 = vpop.f32.mrf.mxu0
    %1808 = vdwg.mxu0
    %1809 = vmatpush.bf16.msra.mxu0 %v1690
    %1810 = vmatpush.bf16.msra.mxu0 %v1689
    %1811 = vmatpush.bf16.msra.mxu0 %v1688
    %1812 = vmatpush.bf16.msra.mxu0 %v1687
    %1813 = vmatpush.bf16.msra.mxu0 %v1686
    %1814 = vmatpush.bf16.msra.mxu0 %v1685
    %1815 = vmatpush.bf16.msra.mxu0 %v1684
    %1816 = vmatpush.bf16.msra.mxu0 %v1683
    %1817 = vmatmul.bf16.gmra.mxu0 %v1454
    %v1818 = vpop.f32.mrf.mxu0
    %v1819 = vadd.f32 %v1806, %v1818
    %v1820 = vpop.f32.mrf.mxu0
    %1821 = vdwg.mxu0
    %1822 = vmatpush.bf16.msra.mxu0 %v1755
    %1823 = vmatpush.bf16.msra.mxu0 %v1697
    %1824 = vmatpush.bf16.msra.mxu0 %v1696
    %1825 = vmatpush.bf16.msra.mxu0 %v1695
    %1826 = vmatpush.bf16.msra.mxu0 %v1694
    %1827 = vmatpush.bf16.msra.mxu0 %v1693
    %1828 = vmatpush.bf16.msra.mxu0 %v1692
    %1829 = vmatpush.bf16.msra.mxu0 %v1691
    %1830 = vmatmul.bf16.gmra.mxu0 %v1748
    %v1831 = vpop.f32.mrf.mxu0
    %v1832 = vadd.f32 %v1819, %v1831
    %v1833 = vpop.f32.mrf.mxu0
    %1834 = vdwg.mxu0
    %v1835 = vmax.f32 %v1832, 0.0
    %v1836 = vpack.c.bf16 %v1835, %v1835
    %v1837 = vld [vmem:[#allocation8] sm:$0xf]
    %v1838 = vld [vmem:[#allocation8 + $0x4] sm:$0xf]
    %v1839 = vld [vmem:[#allocation8 + $0x8] sm:$0xf]
    %v1840 = vld [vmem:[#allocation8 + $0xc] sm:$0xf]
    %v1841 = vld [vmem:[#allocation8 + $0x10] sm:$0xf]
    %v1842 = vld [vmem:[#allocation8 + $0x14] sm:$0xf]
    %v1843 = vld [vmem:[#allocation8 + $0x18] sm:$0xf]
    %v1844 = vld [vmem:[#allocation8 + $0x1c] sm:$0xf]
    %v1845 = vld [vmem:[#allocation8 + $0x20] sm:$0xf]
    %v1846 = vld [vmem:[#allocation8 + $0x24] sm:$0xf]
    %v1847 = vld [vmem:[#allocation8 + $0x28] sm:$0xf]
    %v1848 = vld [vmem:[#allocation8 + $0x2c] sm:$0xf]
    %v1849 = vld [vmem:[#allocation8 + $0x30] sm:$0xf]
    %v1850 = vld [vmem:[#allocation8 + $0x34] sm:$0xf]
    %v1851 = vld [vmem:[#allocation8 + $0x38] sm:$0xf]
    %v1852 = vld [vmem:[#allocation8 + $0x3c] sm:$0xf]
    %v1853 = vld [vmem:[%s5] sm:$0x1]
    %v1855 = vperm.slane %v1853, 0
    %v1873 = vunpack.c.l.b16 %v1837
    %v1874 = vunpack.c.l.b16 %v1838
    %v1875 = vunpack.c.l.b16 %v1839
    %v1876 = vunpack.c.l.b16 %v1840
    %v1877 = vunpack.c.l.b16 %v1841
    %v1878 = vunpack.c.l.b16 %v1842
    %v1879 = vunpack.c.l.b16 %v1843
    %v1880 = vunpack.c.l.b16 %v1844
    %v1881 = vunpack.c.l.b16 %v1845
    %v1882 = vunpack.c.l.b16 %v1846
    %v1883 = vunpack.c.l.b16 %v1847
    %v1884 = vunpack.c.l.b16 %v1848
    %v1885 = vunpack.c.l.b16 %v1849
    %v1886 = vunpack.c.l.b16 %v1850
    %v1887 = vunpack.c.l.b16 %v1851
    %v1888 = vunpack.c.l.b16 %v1852
    %v1889 = vpack.c.b16 %v1874, %v1873
    %v1890 = vpack.c.b16 %v1876, %v1875
    %v1891 = vpack.c.b16 %v1878, %v1877
    %v1892 = vpack.c.b16 %v1880, %v1879
    %v1893 = vpack.c.b16 %v1882, %v1881
    %v1894 = vpack.c.b16 %v1884, %v1883
    %v1895 = vpack.c.b16 %v1886, %v1885
    %v1896 = vpack.c.b16 %v1888, %v1887
    %1905 = vmatpush.bf16.msra.mxu0 %v1896
    %1906 = vmatpush.bf16.msra.mxu0 %v1895
    %1907 = vmatpush.bf16.msra.mxu0 %v1894
    %1908 = vmatpush.bf16.msra.mxu0 %v1893
    %1909 = vmatpush.bf16.msra.mxu0 %v1892
    %1910 = vmatpush.bf16.msra.mxu0 %v1891
    %1911 = vmatpush.bf16.msra.mxu0 %v1890
    %1912 = vmatpush.bf16.msra.mxu0 %v1889
    %1913 = vmatmul.bf16.gmra.mxu0 %v1836
    %v1914 = vpop.f32.mrf.mxu0
    %v1915 = vadd.f32 %v1855, %v1914
    %v1916 = vpop.f32.mrf.mxu0
    %1917 = vdwg.mxu0
    %v1918 = vpack.c.bf16 %v1915, %v1915
    %1919 = vst [vmem:[#allocation10] sm:$0xf] %v1918
    // Predicated region
    $region42: #{tpu_custom_call.1} parent=1 // pred_check
      _
    $region43: #{tpu_custom_call.1} parent=1 // pred_check_branch
      %1921 = sbr.rel (0) target = $region45
    $region44: #{tpu_custom_call.1} parent=1 // pred_region
      %1923 = vsyncadd [#allocation4], 0
      %s1925 = sshll.u32 [#allocation10], 4
      %s1926 = int_to_ptr.vmem [resolvable:$true] %s1925
      %s1927 = sshll.u32 %s6, 4
      %s1928 = int_to_ptr.hbm [resolvable:$true] %s1927
      %1930 = dma.vmem_to_hbm [thread:$0]  %s1926, 64, %s1928, [#allocation4]
    $region45: #{tpu_custom_call.1} parent=1 // pred_fallthru
      _
    // Predicated region
    $region46: #{tpu_custom_call.1} parent=1 // pred_check
      _
    $region47: #{tpu_custom_call.1} parent=1 // pred_check_branch
      %1932 = sbr.rel (0) target = $region49
    $region48: #{tpu_custom_call.1} parent=1 // pred_region
      %1934 = dma.done [#allocation4], 64
    $region49: #{tpu_custom_call.1} parent=1 // pred_fallthru
      _
    %1935 = vsyncpa [#allocation3], 1
    %1936 = vsyncpa [#allocation6], 1
    %1937 = vsyncpa [#allocation9], 1
    %1938 = vsyncpa [#allocation4], 1

// kernel: tpu_custom_call.1
$region0: #{tpu_custom_call.1}
  #allocation0 [shape = 'u32[]', space=smem, size = 0x4, offset = 0x4, fixed_abs, tag = 'smem constant byte address 0x4 - core index']
  #allocation1 [shape = 'u32[72,128]{1,0:T(1,128)}', space=vmem, size = 0x9000, scoped, tag = 'internal scratch']
  %s0 = inlined_call_operand.hbm [shape: bf16[8,784], index: 0, kind: input, shape index: {}]
  %s1 = inlined_call_operand.hbm [shape: f32[1,784], index: 1, kind: input, shape index: {}]
  %s2 = inlined_call_operand.hbm [shape: bf16[755,128], index: 2, kind: input, shape index: {}]
  %s3 = inlined_call_operand.vmem [shape: f32[1,128], index: 3, kind: input, shape index: {}]
  %s4 = inlined_call_operand.hbm [shape: bf16[128,128], index: 4, kind: input, shape index: {}]
  %s5 = inlined_call_operand.vmem [shape: f32[1,128], index: 5, kind: input, shape index: {}]
  %s6 = inlined_call_operand.hbm [shape: bf16[8,128], index: 6, kind: output, shape index: {}]
  %s7 = sld [smem:[#allocation0]]
  $region50: #{tpu_custom_call.1} parent=0
    _
  %s9 = ssub.s32 1, %s7
  %s10 = scalar_select 0, %s9, %s7
  $region1: #{tpu_custom_call.1} parent=0
    #allocation2 [shape = 'u8[14336]{0}', space=vmem, size = 0x3800, scoped, tag = 'input window, operand 0, single buffered']
    #allocation3 [shape = 's32[1]{0}', space=sflag, size = 0x4, scoped, tag = 'scoped memory for tpu_custom_call.1']
    #allocation4 [shape = 's32[1]{0}', space=sflag, size = 0x4, scoped, tag = 'scoped memory for tpu_custom_call.1']
    #allocation5 [shape = 'u8[3584]{0}', space=vmem, size = 0x1000, scoped, tag = 'input window, operand 1, single buffered']
    #allocation6 [shape = 's32[1]{0}', space=sflag, size = 0x4, scoped, tag = 'scoped memory for tpu_custom_call.1']
    #allocation7 [shape = 'u8[194560]{0}', space=vmem, size = 0x2f800, scoped, tag = 'input window, operand 2, single buffered']
    #allocation8 [shape = 'u8[32768]{0}', space=vmem, size = 0x8000, scoped, tag = 'input window, operand 4, single buffered']
    #allocation9 [shape = 's32[1]{0}', space=sflag, size = 0x4, scoped, tag = 'scoped memory for tpu_custom_call.1']
    #allocation10 [shape = 'u8[2048]{0}', space=vmem, size = 0x800, scoped, tag = 'output window, operand 0, single buffered']
    %11 = vsyncpa [#allocation3], 0
    %12 = vsyncpa [#allocation6], 0
    %13 = vsyncpa [#allocation9], 0
    %14 = vsyncpa [#allocation4], 0
    // Predicated region
    $region2: #{tpu_custom_call.1} parent=1 // pred_check
      _
    $region3: #{tpu_custom_call.1} parent=1 // pred_check_branch
      %16 = sbr.rel (0) target = $region5
    $region4: #{tpu_custom_call.1} parent=1 // pred_region
      %18 = vsyncadd [#allocation3], 0
      %s20 = sshll.u32 %s0, 4
      %s21 = int_to_ptr.hbm [resolvable:$true] %s20
      %s22 = sshll.u32 [#allocation2], 4
      %s23 = int_to_ptr.vmem [resolvable:$true] %s22
      %25 = dma.hbm_to_vmem [thread:$0]  %s21, 448, %s23, [#allocation3]
    $region5: #{tpu_custom_call.1} parent=1 // pred_fallthru
      _
    // Predicated region
    $region6: #{tpu_custom_call.1} parent=1 // pred_check
      _
    $region7: #{tpu_custom_call.1} parent=1 // pred_check_branch
      %27 = sbr.rel (0) target = $region9
    $region8: #{tpu_custom_call.1} parent=1 // pred_region
      %29 = vsyncadd [#allocation6], 0
      %s31 = sshll.u32 %s1, 4
      %s32 = int_to_ptr.hbm [resolvable:$true] %s31
      %s33 = sshll.u32 [#allocation5], 4
      %s34 = int_to_ptr.vmem [resolvable:$true] %s33
      %36 = dma.hbm_to_vmem [thread:$0]  %s32, 112, %s34, [#allocation6]
    $region9: #{tpu_custom_call.1} parent=1 // pred_fallthru
      _
    // Predicated region
    $region10: #{tpu_custom_call.1} parent=1 // pred_check
      _
    $region11: #{tpu_custom_call.1} parent=1 // pred_check_branch
      %38 = sbr.rel (0) target = $region13
    $region12: #{tpu_custom_call.1} parent=1 // pred_region
      %40 = vsyncadd [#allocation6], 0
      %s41 = sshll.u32 %s2, 4
      %s42 = int_to_ptr.hbm [resolvable:$true] %s41
      %s43 = sshll.u32 [#allocation7], 4
      %s44 = int_to_ptr.vmem [resolvable:$true] %s43
      %49 = dma.hbm_to_vmem [thread:$0]  %s42, 6080, %s44, [#allocation6], 64, 64, 4
    $region13: #{tpu_custom_call.1} parent=1 // pred_fallthru
      _
    // Predicated region
    $region14: #{tpu_custom_call.1} parent=1 // pred_check
      _
    $region15: #{tpu_custom_call.1} parent=1 // pred_check_branch
      %51 = sbr.rel (0) target = $region17
    $region16: #{tpu_custom_call.1} parent=1 // pred_region
      _
    $region17: #{tpu_custom_call.1} parent=1 // pred_fallthru
      _
    // Predicated region
    $region18: #{tpu_custom_call.1} parent=1 // pred_check
      _
    $region19: #{tpu_custom_call.1} parent=1 // pred_check_branch
      %53 = sbr.rel (0) target = $region21
    $region20: #{tpu_custom_call.1} parent=1 // pred_region
      %55 = vsyncadd [#allocation9], 0
      %s56 = sshll.u32 %s4, 4
      %s57 = int_to_ptr.hbm [resolvable:$true] %s56
      %s58 = sshll.u32 [#allocation8], 4
      %s59 = int_to_ptr.vmem [resolvable:$true] %s58
      %64 = dma.hbm_to_vmem [thread:$0]  %s57, 1024, %s59, [#allocation9], 64, 64, 4
    $region21: #{tpu_custom_call.1} parent=1 // pred_fallthru
      _
    // Predicated region
    $region22: #{tpu_custom_call.1} parent=1 // pred_check
      _
    $region23: #{tpu_custom_call.1} parent=1 // pred_check_branch
      %66 = sbr.rel (0) target = $region25
    $region24: #{tpu_custom_call.1} parent=1 // pred_region
      _
    $region25: #{tpu_custom_call.1} parent=1 // pred_fallthru
      _
    // Predicated region
    $region26: #{tpu_custom_call.1} parent=1 // pred_check
      _
    $region27: #{tpu_custom_call.1} parent=1 // pred_check_branch
      %68 = sbr.rel (0) target = $region29
    $region28: #{tpu_custom_call.1} parent=1 // pred_region
      %70 = dma.done [#allocation3], 448
    $region29: #{tpu_custom_call.1} parent=1 // pred_fallthru
      _
    // Predicated region
    $region30: #{tpu_custom_call.1} parent=1 // pred_check
      _
    $region31: #{tpu_custom_call.1} parent=1 // pred_check_branch
      %72 = sbr.rel (0) target = $region33
    $region32: #{tpu_custom_call.1} parent=1 // pred_region
      %74 = dma.done [#allocation6], 112
    $region33: #{tpu_custom_call.1} parent=1 // pred_fallthru
      _
    // Predicated region
    $region34: #{tpu_custom_call.1} parent=1 // pred_check
      _
    $region35: #{tpu_custom_call.1} parent=1 // pred_check_branch
      %76 = sbr.rel (0) target = $region37
    $region36: #{tpu_custom_call.1} parent=1 // pred_region
      %78 = dma.done [#allocation6], 6080
    $region37: #{tpu_custom_call.1} parent=1 // pred_fallthru
      _
    // Predicated region
    $region38: #{tpu_custom_call.1} parent=1 // pred_check
      _
    $region39: #{tpu_custom_call.1} parent=1 // pred_check_branch
      %80 = sbr.rel (0) target = $region41
    $region40: #{tpu_custom_call.1} parent=1 // pred_region
      %82 = dma.done [#allocation9], 1024
    $region41: #{tpu_custom_call.1} parent=1 // pred_fallthru
      _
    %v83 = vld [vmem:[#allocation2] sm:$0xff]
    %v84 = vld [vmem:[#allocation2 + $0x8] sm:$0xff]
    %v85 = vld [vmem:[#allocation2 + $0x10] sm:$0xff]
    %v86 = vld [vmem:[#allocation2 + $0x18] sm:$0xf]
    %v87 = vunpack.c.l.bf16 %v83
    %v88 = vunpack.c.h.bf16 %v83
    %v89 = vunpack.c.l.bf16 %v84
    %v90 = vunpack.c.h.bf16 %v84
    %v91 = vunpack.c.l.bf16 %v85
    %v92 = vunpack.c.h.bf16 %v85
    %v93 = vunpack.c.l.bf16 %v86
    %v94 = vld [vmem:[#allocation5] sm:$0x7f]
    %v96 = vperm.slane %v94, 0
    %v97 = vperm.slane %v94, 1
    %v98 = vperm.slane %v94, 2
    %v99 = vperm.slane %v94, 3
    %v100 = vperm.slane %v94, 4
    %v101 = vperm.slane %v94, 5
    %v102 = vperm.slane %v94, 6
    %v110 = vadd.f32 %v87, %v96
    %v111 = vadd.f32 %v88, %v97
    %v112 = vadd.f32 %v89, %v98
    %v113 = vadd.f32 %v90, %v99
    %v114 = vadd.f32 %v91, %v100
    %v115 = vadd.f32 %v92, %v101
    %v116 = vadd.f32 %v93, %v102
    %v117 = vand.u32 2147483647, %v110
    %vm118 = vcmp.le.f32.partialorder %v117, 0.7853982
    %vm119 = vcmp.lt.s32.totalorder %v110, 0
    %v120 = vand.u32 %v110, 2139095040
    %v121 = vshrl.u32 %v120, 23
    %v122 = vsub.s32 %v121, 127
    %v123 = vand.u32 2147483647, %v110
    %v124 = vand.u32 %v123, 8388607
    %v125 = vor.u32 %v124, 8388608
    %v126 = vsub.s32 0, %v125
    %v127 = vadd.s32 %v122, 1
    %vm128 = vcmp.gt.s32.totalorder %v127, 0
    %v129 = vsel %vm128, %v127, 0
    %v130 = vshrl.u32 %v129, 5
    %v131 = vand.u32 %v129, 31
    %v132 = vsub.s32 32, %v131
    %v133 = vshrl.u32 683565275, %v132
    %v134 = vshll.u32 683565275, %v131
    %v135 = vshrl.u32 2475754826, %v132
    %v136 = vor.u32 %v134, %v135
    %v137 = vshll.u32 2475754826, %v131
    %v138 = vshrl.u32 2131351028, %v132
    %v139 = vor.u32 %v137, %v138
    %v140 = vshll.u32 2131351028, %v131
    %v141 = vshrl.u32 2102212464, %v132
    %v142 = vor.u32 %v140, %v141
    %v143 = vshll.u32 2102212464, %v131
    %v144 = vshrl.u32 920167782, %v132
    %v145 = vor.u32 %v143, %v144
    %v146 = vshll.u32 920167782, %v131
    %v147 = vshrl.u32 1326507024, %v132
    %v148 = vor.u32 %v146, %v147
    %vm149 = vcmp.lt.s32.totalorder %v130, 1
    %vm150 = vcmp.lt.s32.totalorder %v130, 2
    %vm151 = vcmp.lt.s32.totalorder %v130, 3
    %vm152 = vcmp.lt.s32.totalorder %v130, 4
    %v153 = vsel %vm149, %v133, %v136
    %v154 = vsel %vm152, %v142, 2102212464
    %v155 = vsel %vm151, %v139, %v154
    %v156 = vsel %vm150, %v153, %v155
    %v157 = vsel %vm149, %v136, %v139
    %v158 = vsel %vm152, %v145, 920167782
    %v159 = vsel %vm151, %v142, %v158
    %v160 = vsel %vm150, %v157, %v159
    %v161 = vsel %vm149, %v139, %v142
    %v162 = vsel %vm152, %v148, 1326507024
    %v163 = vsel %vm151, %v145, %v162
    %v164 = vsel %vm150, %v161, %v163
    %v165 = vshll.u32 %v125, 8
    %v166 = vand.u32 %v165, 65535
    %v167 = vshrl.u32 %v165, 16
    %v168 = vand.u32 %v164, 65535
    %v169 = vshrl.u32 %v164, 16
    %v170 = vmul.u32 %v166, %v168
    %v171 = vmul.u32 %v166, %v169
    %v172 = vmul.u32 %v167, %v168
    %v173 = vmul.u32 %v167, %v169
    %v174 = vshll.u32 %v171, 16
    %v175 = vshrl.u32 %v171, 16
    %v176 = vshll.u32 %v172, 16
    %v177 = vshrl.u32 %v172, 16
    %vm178 = vc.u32 %v170, %v174
    %v179 = vsel %vm178, 1, 0
    %v180 = vadd.s32 %v170, %v174
    %v181 = vadd.s32 %v173, %v179
    %vm182 = vc.u32 %v180, %v176
    %v183 = vsel %vm182, 1, 0
    %v184 = vadd.s32 %v180, %v176
    %v185 = vadd.s32 %v181, %v183
    %v186 = vadd.s32 %v185, %v175
    %v187 = vadd.s32 %v186, %v177
    %v188 = vand.u32 %v165, 65535
    %v189 = vshrl.u32 %v165, 16
    %v190 = vand.u32 %v160, 65535
    %v191 = vshrl.u32 %v160, 16
    %v192 = vmul.u32 %v188, %v190
    %v193 = vmul.u32 %v188, %v191
    %v194 = vmul.u32 %v189, %v190
    %v195 = vmul.u32 %v189, %v191
    %v196 = vshll.u32 %v193, 16
    %v197 = vshrl.u32 %v193, 16
    %v198 = vshll.u32 %v194, 16
    %v199 = vshrl.u32 %v194, 16
    %vm200 = vc.u32 %v192, %v196
    %v201 = vsel %vm200, 1, 0
    %v202 = vadd.s32 %v192, %v196
    %v203 = vadd.s32 %v195, %v201
    %vm204 = vc.u32 %v202, %v198
    %v205 = vsel %vm204, 1, 0
    %v206 = vadd.s32 %v202, %v198
    %v207 = vadd.s32 %v203, %v205
    %v208 = vadd.s32 %v207, %v197
    %v209 = vadd.s32 %v208, %v199
    %v210 = vmul.u32 %v165, %v156
    %v211 = vadd.s32 %v187, %v206
    %vm212 = vc.u32 %v187, %v206
    %v213 = vadd.s32 %v209, 1
    %v214 = vsel %vm212, %v213, %v209
    %v215 = vadd.s32 %v210, %v214
    %v216 = vadd.s32 %v215, 536870912
    %v217 = vshrl.u32 %v216, 30
    %v218 = vshll.u32 %v217, 30
    %v219 = vsub.s32 %v215, %v218
    %vm220 = vcmp.lt.s32.totalorder %v219, 0
    %v221 = vsub.s32 0, %v219
    %v222 = vsel %vm220, %v221, %v219
    %v223 = vclz %v222
    %v224 = vsub.s32 %v223, 2
    %vm225 = vcmp.gt.s32.totalorder 0, %v224
    %v226 = vsel %vm225, 0, %v224
    %v227 = vsub.s32 32, %v226
    %v228 = vshll.u32 %v219, %v226
    %v229 = vshrl.u32 %v211, %v227
    %v230 = vor.u32 %v228, %v229
    %v231 = vsub.s32 4294967266, %v226
    %v232 = vadd.s32 %v231, 127
    %v233 = vshll.u32 %v232, 23
    %v234 = vor.u32 4788187, %v233
    %v235 = vand.u32 2147483647, %v234
    %v237 = vcvt.s32.f32 %v230
    %v238 = vmul.f32 %v237, %v235
    %v239 = vxor.u32 %v238, 2147483648
    %v240 = vsel %vm119, %v239, %v238
    %v241 = vsub.s32 4, %v217
    %v242 = vsel %vm119, %v241, %v217
    %v243 = vsel %vm118, %v110, %v240
    %v244 = vsel %vm118, 0, %v242
    %v245 = vmul.f32 %v243, %v243
    %v246 = vmul.f32 %v245, -0.001358992
    %v247 = vadd.f32 %v246, 0.041655596
    %v248 = vmul.f32 %v245, %v247
    %v249 = vadd.f32 %v248, -0.4999988
    %v250 = vmul.f32 %v245, %v249
    %v251 = vadd.f32 1.0, %v250
    %v252 = vmul.f32 %v243, %v243
    %v253 = vmul.f32 %v252, -0.00019511016
    %v254 = vadd.f32 %v253, 0.008332121
    %v255 = vmul.f32 %v252, %v254
    %v256 = vadd.f32 %v255, -0.16666654
    %v257 = vmul.f32 %v252, %v256
    %v258 = vadd.f32 %v257, 1.0
    %v259 = vmul.f32 %v258, %v243
    %vm260 = vweird.f32 %v110
    %v261 = vand.u32 %v244, 3
    %vm262 = vcmp.lt.s32.totalorder %v261, 2
    %vm263 = vcmp.eq.s32.totalorder %v261, 0
    %v264 = vxor.u32 %v259, 2147483648
    %v265 = vsel %vm263, %v251, %v264
    %vm266 = vcmp.eq.s32.totalorder %v261, 2
    %v267 = vxor.u32 %v251, 2147483648
    %v268 = vsel %vm266, %v267, %v259
    %v269 = vsel %vm262, %v265, %v268
    %v270 = vsel %vm260, nan, %v269
    %v271 = vand.u32 2147483647, %v111
    %vm272 = vcmp.le.f32.partialorder %v271, 0.7853982
    %vm273 = vcmp.lt.s32.totalorder %v111, 0
    %v274 = vand.u32 %v111, 2139095040
    %v275 = vshrl.u32 %v274, 23
    %v276 = vsub.s32 %v275, 127
    %v277 = vand.u32 2147483647, %v111
    %v278 = vand.u32 %v277, 8388607
    %v279 = vor.u32 %v278, 8388608
    %v280 = vsub.s32 0, %v279
    %v281 = vadd.s32 %v276, 1
    %vm282 = vcmp.gt.s32.totalorder %v281, 0
    %v283 = vsel %vm282, %v281, 0
    %v284 = vshrl.u32 %v283, 5
    %v285 = vand.u32 %v283, 31
    %v286 = vsub.s32 32, %v285
    %v287 = vshrl.u32 683565275, %v286
    %v288 = vshll.u32 683565275, %v285
    %v289 = vshrl.u32 2475754826, %v286
    %v290 = vor.u32 %v288, %v289
    %v291 = vshll.u32 2475754826, %v285
    %v292 = vshrl.u32 2131351028, %v286
    %v293 = vor.u32 %v291, %v292
    %v294 = vshll.u32 2131351028, %v285
    %v295 = vshrl.u32 2102212464, %v286
    %v296 = vor.u32 %v294, %v295
    %v297 = vshll.u32 2102212464, %v285
    %v298 = vshrl.u32 920167782, %v286
    %v299 = vor.u32 %v297, %v298
    %v300 = vshll.u32 920167782, %v285
    %v301 = vshrl.u32 1326507024, %v286
    %v302 = vor.u32 %v300, %v301
    %vm303 = vcmp.lt.s32.totalorder %v284, 1
    %vm304 = vcmp.lt.s32.totalorder %v284, 2
    %vm305 = vcmp.lt.s32.totalorder %v284, 3
    %vm306 = vcmp.lt.s32.totalorder %v284, 4
    %v307 = vsel %vm303, %v287, %v290
    %v308 = vsel %vm306, %v296, 2102212464
    %v309 = vsel %vm305, %v293, %v308
    %v310 = vsel %vm304, %v307, %v309
    %v311 = vsel %vm303, %v290, %v293
    %v312 = vsel %vm306, %v299, 920167782
    %v313 = vsel %vm305, %v296, %v312
    %v314 = vsel %vm304, %v311, %v313
    %v315 = vsel %vm303, %v293, %v296
    %v316 = vsel %vm306, %v302, 1326507024
    %v317 = vsel %vm305, %v299, %v316
    %v318 = vsel %vm304, %v315, %v317
    %v319 = vshll.u32 %v279, 8
    %v320 = vand.u32 %v319, 65535
    %v321 = vshrl.u32 %v319, 16
    %v322 = vand.u32 %v318, 65535
    %v323 = vshrl.u32 %v318, 16
    %v324 = vmul.u32 %v320, %v322
    %v325 = vmul.u32 %v320, %v323
    %v326 = vmul.u32 %v321, %v322
    %v327 = vmul.u32 %v321, %v323
    %v328 = vshll.u32 %v325, 16
    %v329 = vshrl.u32 %v325, 16
    %v330 = vshll.u32 %v326, 16
    %v331 = vshrl.u32 %v326, 16
    %vm332 = vc.u32 %v324, %v328
    %v333 = vsel %vm332, 1, 0
    %v334 = vadd.s32 %v324, %v328
    %v335 = vadd.s32 %v327, %v333
    %vm336 = vc.u32 %v334, %v330
    %v337 = vsel %vm336, 1, 0
    %v338 = vadd.s32 %v334, %v330
    %v339 = vadd.s32 %v335, %v337
    %v340 = vadd.s32 %v339, %v329
    %v341 = vadd.s32 %v340, %v331
    %v342 = vand.u32 %v319, 65535
    %v343 = vshrl.u32 %v319, 16
    %v344 = vand.u32 %v314, 65535
    %v345 = vshrl.u32 %v314, 16
    %v346 = vmul.u32 %v342, %v344
    %v347 = vmul.u32 %v342, %v345
    %v348 = vmul.u32 %v343, %v344
    %v349 = vmul.u32 %v343, %v345
    %v350 = vshll.u32 %v347, 16
    %v351 = vshrl.u32 %v347, 16
    %v352 = vshll.u32 %v348, 16
    %v353 = vshrl.u32 %v348, 16
    %vm354 = vc.u32 %v346, %v350
    %v355 = vsel %vm354, 1, 0
    %v356 = vadd.s32 %v346, %v350
    %v357 = vadd.s32 %v349, %v355
    %vm358 = vc.u32 %v356, %v352
    %v359 = vsel %vm358, 1, 0
    %v360 = vadd.s32 %v356, %v352
    %v361 = vadd.s32 %v357, %v359
    %v362 = vadd.s32 %v361, %v351
    %v363 = vadd.s32 %v362, %v353
    %v364 = vmul.u32 %v319, %v310
    %v365 = vadd.s32 %v341, %v360
    %vm366 = vc.u32 %v341, %v360
    %v367 = vadd.s32 %v363, 1
    %v368 = vsel %vm366, %v367, %v363
    %v369 = vadd.s32 %v364, %v368
    %v370 = vadd.s32 %v369, 536870912
    %v371 = vshrl.u32 %v370, 30
    %v372 = vshll.u32 %v371, 30
    %v373 = vsub.s32 %v369, %v372
    %vm374 = vcmp.lt.s32.totalorder %v373, 0
    %v375 = vsub.s32 0, %v373
    %v376 = vsel %vm374, %v375, %v373
    %v377 = vclz %v376
    %v378 = vsub.s32 %v377, 2
    %vm379 = vcmp.gt.s32.totalorder 0, %v378
    %v380 = vsel %vm379, 0, %v378
    %v381 = vsub.s32 32, %v380
    %v382 = vshll.u32 %v373, %v380
    %v383 = vshrl.u32 %v365, %v381
    %v384 = vor.u32 %v382, %v383
    %v385 = vsub.s32 4294967266, %v380
    %v386 = vadd.s32 %v385, 127
    %v387 = vshll.u32 %v386, 23
    %v388 = vor.u32 4788187, %v387
    %v389 = vand.u32 2147483647, %v388
    %v391 = vcvt.s32.f32 %v384
    %v392 = vmul.f32 %v391, %v389
    %v393 = vxor.u32 %v392, 2147483648
    %v394 = vsel %vm273, %v393, %v392
    %v395 = vsub.s32 4, %v371
    %v396 = vsel %vm273, %v395, %v371
    %v397 = vsel %vm272, %v111, %v394
    %v398 = vsel %vm272, 0, %v396
    %v399 = vmul.f32 %v397, %v397
    %v400 = vmul.f32 %v399, -0.001358992
    %v401 = vadd.f32 %v400, 0.041655596
    %v402 = vmul.f32 %v399, %v401
    %v403 = vadd.f32 %v402, -0.4999988
    %v404 = vmul.f32 %v399, %v403
    %v405 = vadd.f32 1.0, %v404
    %v406 = vmul.f32 %v397, %v397
    %v407 = vmul.f32 %v406, -0.00019511016
    %v408 = vadd.f32 %v407, 0.008332121
    %v409 = vmul.f32 %v406, %v408
    %v410 = vadd.f32 %v409, -0.16666654
    %v411 = vmul.f32 %v406, %v410
    %v412 = vadd.f32 %v411, 1.0
    %v413 = vmul.f32 %v412, %v397
    %vm414 = vweird.f32 %v111
    %v415 = vand.u32 %v398, 3
    %vm416 = vcmp.lt.s32.totalorder %v415, 2
    %vm417 = vcmp.eq.s32.totalorder %v415, 0
    %v418 = vxor.u32 %v413, 2147483648
    %v419 = vsel %vm417, %v405, %v418
    %vm420 = vcmp.eq.s32.totalorder %v415, 2
    %v421 = vxor.u32 %v405, 2147483648
    %v422 = vsel %vm420, %v421, %v413
    %v423 = vsel %vm416, %v419, %v422
    %v424 = vsel %vm414, nan, %v423
    %v425 = vand.u32 2147483647, %v112
    %vm426 = vcmp.le.f32.partialorder %v425, 0.7853982
    %vm427 = vcmp.lt.s32.totalorder %v112, 0
    %v428 = vand.u32 %v112, 2139095040
    %v429 = vshrl.u32 %v428, 23
    %v430 = vsub.s32 %v429, 127
    %v431 = vand.u32 2147483647, %v112
    %v432 = vand.u32 %v431, 8388607
    %v433 = vor.u32 %v432, 8388608
    %v434 = vsub.s32 0, %v433
    %v435 = vadd.s32 %v430, 1
    %vm436 = vcmp.gt.s32.totalorder %v435, 0
    %v437 = vsel %vm436, %v435, 0
    %v438 = vshrl.u32 %v437, 5
    %v439 = vand.u32 %v437, 31
    %v440 = vsub.s32 32, %v439
    %v441 = vshrl.u32 683565275, %v440
    %v442 = vshll.u32 683565275, %v439
    %v443 = vshrl.u32 2475754826, %v440
    %v444 = vor.u32 %v442, %v443
    %v445 = vshll.u32 2475754826, %v439
    %v446 = vshrl.u32 2131351028, %v440
    %v447 = vor.u32 %v445, %v446
    %v448 = vshll.u32 2131351028, %v439
    %v449 = vshrl.u32 2102212464, %v440
    %v450 = vor.u32 %v448, %v449
    %v451 = vshll.u32 2102212464, %v439
    %v452 = vshrl.u32 920167782, %v440
    %v453 = vor.u32 %v451, %v452
    %v454 = vshll.u32 920167782, %v439
    %v455 = vshrl.u32 1326507024, %v440
    %v456 = vor.u32 %v454, %v455
    %vm457 = vcmp.lt.s32.totalorder %v438, 1
    %vm458 = vcmp.lt.s32.totalorder %v438, 2
    %vm459 = vcmp.lt.s32.totalorder %v438, 3
    %vm460 = vcmp.lt.s32.totalorder %v438, 4
    %v461 = vsel %vm457, %v441, %v444
    %v462 = vsel %vm460, %v450, 2102212464
    %v463 = vsel %vm459, %v447, %v462
    %v464 = vsel %vm458, %v461, %v463
    %v465 = vsel %vm457, %v444, %v447
    %v466 = vsel %vm460, %v453, 920167782
    %v467 = vsel %vm459, %v450, %v466
    %v468 = vsel %vm458, %v465, %v467
    %v469 = vsel %vm457, %v447, %v450
    %v470 = vsel %vm460, %v456, 1326507024
    %v471 = vsel %vm459, %v453, %v470
    %v472 = vsel %vm458, %v469, %v471
    %v473 = vshll.u32 %v433, 8
    %v474 = vand.u32 %v473, 65535
    %v475 = vshrl.u32 %v473, 16
    %v476 = vand.u32 %v472, 65535
    %v477 = vshrl.u32 %v472, 16
    %v478 = vmul.u32 %v474, %v476
    %v479 = vmul.u32 %v474, %v477
    %v480 = vmul.u32 %v475, %v476
    %v481 = vmul.u32 %v475, %v477
    %v482 = vshll.u32 %v479, 16
    %v483 = vshrl.u32 %v479, 16
    %v484 = vshll.u32 %v480, 16
    %v485 = vshrl.u32 %v480, 16
    %vm486 = vc.u32 %v478, %v482
    %v487 = vsel %vm486, 1, 0
    %v488 = vadd.s32 %v478, %v482
    %v489 = vadd.s32 %v481, %v487
    %vm490 = vc.u32 %v488, %v484
    %v491 = vsel %vm490, 1, 0
    %v492 = vadd.s32 %v488, %v484
    %v493 = vadd.s32 %v489, %v491
    %v494 = vadd.s32 %v493, %v483
    %v495 = vadd.s32 %v494, %v485
    %v496 = vand.u32 %v473, 65535
    %v497 = vshrl.u32 %v473, 16
    %v498 = vand.u32 %v468, 65535
    %v499 = vshrl.u32 %v468, 16
    %v500 = vmul.u32 %v496, %v498
    %v501 = vmul.u32 %v496, %v499
    %v502 = vmul.u32 %v497, %v498
    %v503 = vmul.u32 %v497, %v499
    %v504 = vshll.u32 %v501, 16
    %v505 = vshrl.u32 %v501, 16
    %v506 = vshll.u32 %v502, 16
    %v507 = vshrl.u32 %v502, 16
    %vm508 = vc.u32 %v500, %v504
    %v509 = vsel %vm508, 1, 0
    %v510 = vadd.s32 %v500, %v504
    %v511 = vadd.s32 %v503, %v509
    %vm512 = vc.u32 %v510, %v506
    %v513 = vsel %vm512, 1, 0
    %v514 = vadd.s32 %v510, %v506
    %v515 = vadd.s32 %v511, %v513
    %v516 = vadd.s32 %v515, %v505
    %v517 = vadd.s32 %v516, %v507
    %v518 = vmul.u32 %v473, %v464
    %v519 = vadd.s32 %v495, %v514
    %vm520 = vc.u32 %v495, %v514
    %v521 = vadd.s32 %v517, 1
    %v522 = vsel %vm520, %v521, %v517
    %v523 = vadd.s32 %v518, %v522
    %v524 = vadd.s32 %v523, 536870912
    %v525 = vshrl.u32 %v524, 30
    %v526 = vshll.u32 %v525, 30
    %v527 = vsub.s32 %v523, %v526
    %vm528 = vcmp.lt.s32.totalorder %v527, 0
    %v529 = vsub.s32 0, %v527
    %v530 = vsel %vm528, %v529, %v527
    %v531 = vclz %v530
    %v532 = vsub.s32 %v531, 2
    %vm533 = vcmp.gt.s32.totalorder 0, %v532
    %v534 = vsel %vm533, 0, %v532
    %v535 = vsub.s32 32, %v534
    %v536 = vshll.u32 %v527, %v534
    %v537 = vshrl.u32 %v519, %v535
    %v538 = vor.u32 %v536, %v537
    %v539 = vsub.s32 4294967266, %v534
    %v540 = vadd.s32 %v539, 127
    %v541 = vshll.u32 %v540, 23
    %v542 = vor.u32 4788187, %v541
    %v543 = vand.u32 2147483647, %v542
    %v545 = vcvt.s32.f32 %v538
    %v546 = vmul.f32 %v545, %v543
    %v547 = vxor.u32 %v546, 2147483648
    %v548 = vsel %vm427, %v547, %v546
    %v549 = vsub.s32 4, %v525
    %v550 = vsel %vm427, %v549, %v525
    %v551 = vsel %vm426, %v112, %v548
    %v552 = vsel %vm426, 0, %v550
    %v553 = vmul.f32 %v551, %v551
    %v554 = vmul.f32 %v553, -0.001358992
    %v555 = vadd.f32 %v554, 0.041655596
    %v556 = vmul.f32 %v553, %v555
    %v557 = vadd.f32 %v556, -0.4999988
    %v558 = vmul.f32 %v553, %v557
    %v559 = vadd.f32 1.0, %v558
    %v560 = vmul.f32 %v551, %v551
    %v561 = vmul.f32 %v560, -0.00019511016
    %v562 = vadd.f32 %v561, 0.008332121
    %v563 = vmul.f32 %v560, %v562
    %v564 = vadd.f32 %v563, -0.16666654
    %v565 = vmul.f32 %v560, %v564
    %v566 = vadd.f32 %v565, 1.0
    %v567 = vmul.f32 %v566, %v551
    %vm568 = vweird.f32 %v112
    %v569 = vand.u32 %v552, 3
    %vm570 = vcmp.lt.s32.totalorder %v569, 2
    %vm571 = vcmp.eq.s32.totalorder %v569, 0
    %v572 = vxor.u32 %v567, 2147483648
    %v573 = vsel %vm571, %v559, %v572
    %vm574 = vcmp.eq.s32.totalorder %v569, 2
    %v575 = vxor.u32 %v559, 2147483648
    %v576 = vsel %vm574, %v575, %v567
    %v577 = vsel %vm570, %v573, %v576
    %v578 = vsel %vm568, nan, %v577
    %v579 = vand.u32 2147483647, %v113
    %vm580 = vcmp.le.f32.partialorder %v579, 0.7853982
    %vm581 = vcmp.lt.s32.totalorder %v113, 0
    %v582 = vand.u32 %v113, 2139095040
    %v583 = vshrl.u32 %v582, 23
    %v584 = vsub.s32 %v583, 127
    %v585 = vand.u32 2147483647, %v113
    %v586 = vand.u32 %v585, 8388607
    %v587 = vor.u32 %v586, 8388608
    %v588 = vsub.s32 0, %v587
    %v589 = vadd.s32 %v584, 1
    %vm590 = vcmp.gt.s32.totalorder %v589, 0
    %v591 = vsel %vm590, %v589, 0
    %v592 = vshrl.u32 %v591, 5
    %v593 = vand.u32 %v591, 31
    %v594 = vsub.s32 32, %v593
    %v595 = vshrl.u32 683565275, %v594
    %v596 = vshll.u32 683565275, %v593
    %v597 = vshrl.u32 2475754826, %v594
    %v598 = vor.u32 %v596, %v597
    %v599 = vshll.u32 2475754826, %v593
    %v600 = vshrl.u32 2131351028, %v594
    %v601 = vor.u32 %v599, %v600
    %v602 = vshll.u32 2131351028, %v593
    %v603 = vshrl.u32 2102212464, %v594
    %v604 = vor.u32 %v602, %v603
    %v605 = vshll.u32 2102212464, %v593
    %v606 = vshrl.u32 920167782, %v594
    %v607 = vor.u32 %v605, %v606
    %v608 = vshll.u32 920167782, %v593
    %v609 = vshrl.u32 1326507024, %v594
    %v610 = vor.u32 %v608, %v609
    %vm611 = vcmp.lt.s32.totalorder %v592, 1
    %vm612 = vcmp.lt.s32.totalorder %v592, 2
    %vm613 = vcmp.lt.s32.totalorder %v592, 3
    %vm614 = vcmp.lt.s32.totalorder %v592, 4
    %v615 = vsel %vm611, %v595, %v598
    %v616 = vsel %vm614, %v604, 2102212464
    %v617 = vsel %vm613, %v601, %v616
    %v618 = vsel %vm612, %v615, %v617
    %v619 = vsel %vm611, %v598, %v601
    %v620 = vsel %vm614, %v607, 920167782
    %v621 = vsel %vm613, %v604, %v620
    %v622 = vsel %vm612, %v619, %v621
    %v623 = vsel %vm611, %v601, %v604
    %v624 = vsel %vm614, %v610, 1326507024
    %v625 = vsel %vm613, %v607, %v624
    %v626 = vsel %vm612, %v623, %v625
    %v627 = vshll.u32 %v587, 8
    %v628 = vand.u32 %v627, 65535
    %v629 = vshrl.u32 %v627, 16
    %v630 = vand.u32 %v626, 65535
    %v631 = vshrl.u32 %v626, 16
    %v632 = vmul.u32 %v628, %v630
    %v633 = vmul.u32 %v628, %v631
    %v634 = vmul.u32 %v629, %v630
    %v635 = vmul.u32 %v629, %v631
    %v636 = vshll.u32 %v633, 16
    %v637 = vshrl.u32 %v633, 16
    %v638 = vshll.u32 %v634, 16
    %v639 = vshrl.u32 %v634, 16
    %vm640 = vc.u32 %v632, %v636
    %v641 = vsel %vm640, 1, 0
    %v642 = vadd.s32 %v632, %v636
    %v643 = vadd.s32 %v635, %v641
    %vm644 = vc.u32 %v642, %v638
    %v645 = vsel %vm644, 1, 0
    %v646 = vadd.s32 %v642, %v638
    %v647 = vadd.s32 %v643, %v645
    %v648 = vadd.s32 %v647, %v637
    %v649 = vadd.s32 %v648, %v639
    %v650 = vand.u32 %v627, 65535
    %v651 = vshrl.u32 %v627, 16
    %v652 = vand.u32 %v622, 65535
    %v653 = vshrl.u32 %v622, 16
    %v654 = vmul.u32 %v650, %v652
    %v655 = vmul.u32 %v650, %v653
    %v656 = vmul.u32 %v651, %v652
    %v657 = vmul.u32 %v651, %v653
    %v658 = vshll.u32 %v655, 16
    %v659 = vshrl.u32 %v655, 16
    %v660 = vshll.u32 %v656, 16
    %v661 = vshrl.u32 %v656, 16
    %vm662 = vc.u32 %v654, %v658
    %v663 = vsel %vm662, 1, 0
    %v664 = vadd.s32 %v654, %v658
    %v665 = vadd.s32 %v657, %v663
    %vm666 = vc.u32 %v664, %v660
    %v667 = vsel %vm666, 1, 0
    %v668 = vadd.s32 %v664, %v660
    %v669 = vadd.s32 %v665, %v667
    %v670 = vadd.s32 %v669, %v659
    %v671 = vadd.s32 %v670, %v661
    %v672 = vmul.u32 %v627, %v618
    %v673 = vadd.s32 %v649, %v668
    %vm674 = vc.u32 %v649, %v668
    %v675 = vadd.s32 %v671, 1
    %v676 = vsel %vm674, %v675, %v671
    %v677 = vadd.s32 %v672, %v676
    %v678 = vadd.s32 %v677, 536870912
    %v679 = vshrl.u32 %v678, 30
    %v680 = vshll.u32 %v679, 30
    %v681 = vsub.s32 %v677, %v680
    %vm682 = vcmp.lt.s32.totalorder %v681, 0
    %v683 = vsub.s32 0, %v681
    %v684 = vsel %vm682, %v683, %v681
    %v685 = vclz %v684
    %v686 = vsub.s32 %v685, 2
    %vm687 = vcmp.gt.s32.totalorder 0, %v686
    %v688 = vsel %vm687, 0, %v686
    %v689 = vsub.s32 32, %v688
    %v690 = vshll.u32 %v681, %v688
    %v691 = vshrl.u32 %v673, %v689
    %v692 = vor.u32 %v690, %v691
    %v693 = vsub.s32 4294967266, %v688
    %v694 = vadd.s32 %v693, 127
    %v695 = vshll.u32 %v694, 23
    %v696 = vor.u32 4788187, %v695
    %v697 = vand.u32 2147483647, %v696
    %v699 = vcvt.s32.f32 %v692
    %v700 = vmul.f32 %v699, %v697
    %v701 = vxor.u32 %v700, 2147483648
    %v702 = vsel %vm581, %v701, %v700
    %v703 = vsub.s32 4, %v679
    %v704 = vsel %vm581, %v703, %v679
    %v705 = vsel %vm580, %v113, %v702
    %v706 = vsel %vm580, 0, %v704
    %v707 = vmul.f32 %v705, %v705
    %v708 = vmul.f32 %v707, -0.001358992
    %v709 = vadd.f32 %v708, 0.041655596
    %v710 = vmul.f32 %v707, %v709
    %v711 = vadd.f32 %v710, -0.4999988
    %v712 = vmul.f32 %v707, %v711
    %v713 = vadd.f32 1.0, %v712
    %v714 = vmul.f32 %v705, %v705
    %v715 = vmul.f32 %v714, -0.00019511016
    %v716 = vadd.f32 %v715, 0.008332121
    %v717 = vmul.f32 %v714, %v716
    %v718 = vadd.f32 %v717, -0.16666654
    %v719 = vmul.f32 %v714, %v718
    %v720 = vadd.f32 %v719, 1.0
    %v721 = vmul.f32 %v720, %v705
    %vm722 = vweird.f32 %v113
    %v723 = vand.u32 %v706, 3
    %vm724 = vcmp.lt.s32.totalorder %v723, 2
    %vm725 = vcmp.eq.s32.totalorder %v723, 0
    %v726 = vxor.u32 %v721, 2147483648
    %v727 = vsel %vm725, %v713, %v726
    %vm728 = vcmp.eq.s32.totalorder %v723, 2
    %v729 = vxor.u32 %v713, 2147483648
    %v730 = vsel %vm728, %v729, %v721
    %v731 = vsel %vm724, %v727, %v730
    %v732 = vsel %vm722, nan, %v731
    %v733 = vand.u32 2147483647, %v114
    %vm734 = vcmp.le.f32.partialorder %v733, 0.7853982
    %vm735 = vcmp.lt.s32.totalorder %v114, 0
    %v736 = vand.u32 %v114, 2139095040
    %v737 = vshrl.u32 %v736, 23
    %v738 = vsub.s32 %v737, 127
    %v739 = vand.u32 2147483647, %v114
    %v740 = vand.u32 %v739, 8388607
    %v741 = vor.u32 %v740, 8388608
    %v742 = vsub.s32 0, %v741
    %v743 = vadd.s32 %v738, 1
    %vm744 = vcmp.gt.s32.totalorder %v743, 0
    %v745 = vsel %vm744, %v743, 0
    %v746 = vshrl.u32 %v745, 5
    %v747 = vand.u32 %v745, 31
    %v748 = vsub.s32 32, %v747
    %v749 = vshrl.u32 683565275, %v748
    %v750 = vshll.u32 683565275, %v747
    %v751 = vshrl.u32 2475754826, %v748
    %v752 = vor.u32 %v750, %v751
    %v753 = vshll.u32 2475754826, %v747
    %v754 = vshrl.u32 2131351028, %v748
    %v755 = vor.u32 %v753, %v754
    %v756 = vshll.u32 2131351028, %v747
    %v757 = vshrl.u32 2102212464, %v748
    %v758 = vor.u32 %v756, %v757
    %v759 = vshll.u32 2102212464, %v747
    %v760 = vshrl.u32 920167782, %v748
    %v761 = vor.u32 %v759, %v760
    %v762 = vshll.u32 920167782, %v747
    %v763 = vshrl.u32 1326507024, %v748
    %v764 = vor.u32 %v762, %v763
    %vm765 = vcmp.lt.s32.totalorder %v746, 1
    %vm766 = vcmp.lt.s32.totalorder %v746, 2
    %vm767 = vcmp.lt.s32.totalorder %v746, 3
    %vm768 = vcmp.lt.s32.totalorder %v746, 4
    %v769 = vsel %vm765, %v749, %v752
    %v770 = vsel %vm768, %v758, 2102212464
    %v771 = vsel %vm767, %v755, %v770
    %v772 = vsel %vm766, %v769, %v771
    %v773 = vsel %vm765, %v752, %v755
    %v774 = vsel %vm768, %v761, 920167782
    %v775 = vsel %vm767, %v758, %v774
    %v776 = vsel %vm766, %v773, %v775
    %v777 = vsel %vm765, %v755, %v758
    %v778 = vsel %vm768, %v764, 1326507024
    %v779 = vsel %vm767, %v761, %v778
    %v780 = vsel %vm766, %v777, %v779
    %v781 = vshll.u32 %v741, 8
    %v782 = vand.u32 %v781, 65535
    %v783 = vshrl.u32 %v781, 16
    %v784 = vand.u32 %v780, 65535
    %v785 = vshrl.u32 %v780, 16
    %v786 = vmul.u32 %v782, %v784
    %v787 = vmul.u32 %v782, %v785
    %v788 = vmul.u32 %v783, %v784
    %v789 = vmul.u32 %v783, %v785
    %v790 = vshll.u32 %v787, 16
    %v791 = vshrl.u32 %v787, 16
    %v792 = vshll.u32 %v788, 16
    %v793 = vshrl.u32 %v788, 16
    %vm794 = vc.u32 %v786, %v790
    %v795 = vsel %vm794, 1, 0
    %v796 = vadd.s32 %v786, %v790
    %v797 = vadd.s32 %v789, %v795
    %vm798 = vc.u32 %v796, %v792
    %v799 = vsel %vm798, 1, 0
    %v800 = vadd.s32 %v796, %v792
    %v801 = vadd.s32 %v797, %v799
    %v802 = vadd.s32 %v801, %v791
    %v803 = vadd.s32 %v802, %v793
    %v804 = vand.u32 %v781, 65535
    %v805 = vshrl.u32 %v781, 16
    %v806 = vand.u32 %v776, 65535
    %v807 = vshrl.u32 %v776, 16
    %v808 = vmul.u32 %v804, %v806
    %v809 = vmul.u32 %v804, %v807
    %v810 = vmul.u32 %v805, %v806
    %v811 = vmul.u32 %v805, %v807
    %v812 = vshll.u32 %v809, 16
    %v813 = vshrl.u32 %v809, 16
    %v814 = vshll.u32 %v810, 16
    %v815 = vshrl.u32 %v810, 16
    %vm816 = vc.u32 %v808, %v812
    %v817 = vsel %vm816, 1, 0
    %v818 = vadd.s32 %v808, %v812
    %v819 = vadd.s32 %v811, %v817
    %vm820 = vc.u32 %v818, %v814
    %v821 = vsel %vm820, 1, 0
    %v822 = vadd.s32 %v818, %v814
    %v823 = vadd.s32 %v819, %v821
    %v824 = vadd.s32 %v823, %v813
    %v825 = vadd.s32 %v824, %v815
    %v826 = vmul.u32 %v781, %v772
    %v827 = vadd.s32 %v803, %v822
    %vm828 = vc.u32 %v803, %v822
    %v829 = vadd.s32 %v825, 1
    %v830 = vsel %vm828, %v829, %v825
    %v831 = vadd.s32 %v826, %v830
    %v832 = vadd.s32 %v831, 536870912
    %v833 = vshrl.u32 %v832, 30
    %v834 = vshll.u32 %v833, 30
    %v835 = vsub.s32 %v831, %v834
    %vm836 = vcmp.lt.s32.totalorder %v835, 0
    %v837 = vsub.s32 0, %v835
    %v838 = vsel %vm836, %v837, %v835
    %v839 = vclz %v838
    %v840 = vsub.s32 %v839, 2
    %vm841 = vcmp.gt.s32.totalorder 0, %v840
    %v842 = vsel %vm841, 0, %v840
    %v843 = vsub.s32 32, %v842
    %v844 = vshll.u32 %v835, %v842
    %v845 = vshrl.u32 %v827, %v843
    %v846 = vor.u32 %v844, %v845
    %v847 = vsub.s32 4294967266, %v842
    %v848 = vadd.s32 %v847, 127
    %v849 = vshll.u32 %v848, 23
    %v850 = vor.u32 4788187, %v849
    %v851 = vand.u32 2147483647, %v850
    %v853 = vcvt.s32.f32 %v846
    %v854 = vmul.f32 %v853, %v851
    %v855 = vxor.u32 %v854, 2147483648
    %v856 = vsel %vm735, %v855, %v854
    %v857 = vsub.s32 4, %v833
    %v858 = vsel %vm735, %v857, %v833
    %v859 = vsel %vm734, %v114, %v856
    %v860 = vsel %vm734, 0, %v858
    %v861 = vmul.f32 %v859, %v859
    %v862 = vmul.f32 %v861, -0.001358992
    %v863 = vadd.f32 %v862, 0.041655596
    %v864 = vmul.f32 %v861, %v863
    %v865 = vadd.f32 %v864, -0.4999988
    %v866 = vmul.f32 %v861, %v865
    %v867 = vadd.f32 1.0, %v866
    %v868 = vmul.f32 %v859, %v859
    %v869 = vmul.f32 %v868, -0.00019511016
    %v870 = vadd.f32 %v869, 0.008332121
    %v871 = vmul.f32 %v868, %v870
    %v872 = vadd.f32 %v871, -0.16666654
    %v873 = vmul.f32 %v868, %v872
    %v874 = vadd.f32 %v873, 1.0
    %v875 = vmul.f32 %v874, %v859
    %vm876 = vweird.f32 %v114
    %v877 = vand.u32 %v860, 3
    %vm878 = vcmp.lt.s32.totalorder %v877, 2
    %vm879 = vcmp.eq.s32.totalorder %v877, 0
    %v880 = vxor.u32 %v875, 2147483648
    %v881 = vsel %vm879, %v867, %v880
    %vm882 = vcmp.eq.s32.totalorder %v877, 2
    %v883 = vxor.u32 %v867, 2147483648
    %v884 = vsel %vm882, %v883, %v875
    %v885 = vsel %vm878, %v881, %v884
    %v886 = vsel %vm876, nan, %v885
    %v887 = vand.u32 2147483647, %v115
    %vm888 = vcmp.le.f32.partialorder %v887, 0.7853982
    %vm889 = vcmp.lt.s32.totalorder %v115, 0
    %v890 = vand.u32 %v115, 2139095040
    %v891 = vshrl.u32 %v890, 23
    %v892 = vsub.s32 %v891, 127
    %v893 = vand.u32 2147483647, %v115
    %v894 = vand.u32 %v893, 8388607
    %v895 = vor.u32 %v894, 8388608
    %v896 = vsub.s32 0, %v895
    %v897 = vadd.s32 %v892, 1
    %vm898 = vcmp.gt.s32.totalorder %v897, 0
    %v899 = vsel %vm898, %v897, 0
    %v900 = vshrl.u32 %v899, 5
    %v901 = vand.u32 %v899, 31
    %v902 = vsub.s32 32, %v901
    %v903 = vshrl.u32 683565275, %v902
    %v904 = vshll.u32 683565275, %v901
    %v905 = vshrl.u32 2475754826, %v902
    %v906 = vor.u32 %v904, %v905
    %v907 = vshll.u32 2475754826, %v901
    %v908 = vshrl.u32 2131351028, %v902
    %v909 = vor.u32 %v907, %v908
    %v910 = vshll.u32 2131351028, %v901
    %v911 = vshrl.u32 2102212464, %v902
    %v912 = vor.u32 %v910, %v911
    %v913 = vshll.u32 2102212464, %v901
    %v914 = vshrl.u32 920167782, %v902
    %v915 = vor.u32 %v913, %v914
    %v916 = vshll.u32 920167782, %v901
    %v917 = vshrl.u32 1326507024, %v902
    %v918 = vor.u32 %v916, %v917
    %vm919 = vcmp.lt.s32.totalorder %v900, 1
    %vm920 = vcmp.lt.s32.totalorder %v900, 2
    %vm921 = vcmp.lt.s32.totalorder %v900, 3
    %vm922 = vcmp.lt.s32.totalorder %v900, 4
    %v923 = vsel %vm919, %v903, %v906
    %v924 = vsel %vm922, %v912, 2102212464
    %v925 = vsel %vm921, %v909, %v924
    %v926 = vsel %vm920, %v923, %v925
    %v927 = vsel %vm919, %v906, %v909
    %v928 = vsel %vm922, %v915, 920167782
    %v929 = vsel %vm921, %v912, %v928
    %v930 = vsel %vm920, %v927, %v929
    %v931 = vsel %vm919, %v909, %v912
    %v932 = vsel %vm922, %v918, 1326507024
    %v933 = vsel %vm921, %v915, %v932
    %v934 = vsel %vm920, %v931, %v933
    %v935 = vshll.u32 %v895, 8
    %v936 = vand.u32 %v935, 65535
    %v937 = vshrl.u32 %v935, 16
    %v938 = vand.u32 %v934, 65535
    %v939 = vshrl.u32 %v934, 16
    %v940 = vmul.u32 %v936, %v938
    %v941 = vmul.u32 %v936, %v939
    %v942 = vmul.u32 %v937, %v938
    %v943 = vmul.u32 %v937, %v939
    %v944 = vshll.u32 %v941, 16
    %v945 = vshrl.u32 %v941, 16
    %v946 = vshll.u32 %v942, 16
    %v947 = vshrl.u32 %v942, 16
    %vm948 = vc.u32 %v940, %v944
    %v949 = vsel %vm948, 1, 0
    %v950 = vadd.s32 %v940, %v944
    %v951 = vadd.s32 %v943, %v949
    %vm952 = vc.u32 %v950, %v946
    %v953 = vsel %vm952, 1, 0
    %v954 = vadd.s32 %v950, %v946
    %v955 = vadd.s32 %v951, %v953
    %v956 = vadd.s32 %v955, %v945
    %v957 = vadd.s32 %v956, %v947
    %v958 = vand.u32 %v935, 65535
    %v959 = vshrl.u32 %v935, 16
    %v960 = vand.u32 %v930, 65535
    %v961 = vshrl.u32 %v930, 16
    %v962 = vmul.u32 %v958, %v960
    %v963 = vmul.u32 %v958, %v961
    %v964 = vmul.u32 %v959, %v960
    %v965 = vmul.u32 %v959, %v961
    %v966 = vshll.u32 %v963, 16
    %v967 = vshrl.u32 %v963, 16
    %v968 = vshll.u32 %v964, 16
    %v969 = vshrl.u32 %v964, 16
    %vm970 = vc.u32 %v962, %v966
    %v971 = vsel %vm970, 1, 0
    %v972 = vadd.s32 %v962, %v966
    %v973 = vadd.s32 %v965, %v971
    %vm974 = vc.u32 %v972, %v968
    %v975 = vsel %vm974, 1, 0
    %v976 = vadd.s32 %v972, %v968
    %v977 = vadd.s32 %v973, %v975
    %v978 = vadd.s32 %v977, %v967
    %v979 = vadd.s32 %v978, %v969
    %v980 = vmul.u32 %v935, %v926
    %v981 = vadd.s32 %v957, %v976
    %vm982 = vc.u32 %v957, %v976
    %v983 = vadd.s32 %v979, 1
    %v984 = vsel %vm982, %v983, %v979
    %v985 = vadd.s32 %v980, %v984
    %v986 = vadd.s32 %v985, 536870912
    %v987 = vshrl.u32 %v986, 30
    %v988 = vshll.u32 %v987, 30
    %v989 = vsub.s32 %v985, %v988
    %vm990 = vcmp.lt.s32.totalorder %v989, 0
    %v991 = vsub.s32 0, %v989
    %v992 = vsel %vm990, %v991, %v989
    %v993 = vclz %v992
    %v994 = vsub.s32 %v993, 2
    %vm995 = vcmp.gt.s32.totalorder 0, %v994
    %v996 = vsel %vm995, 0, %v994
    %v997 = vsub.s32 32, %v996
    %v998 = vshll.u32 %v989, %v996
    %v999 = vshrl.u32 %v981, %v997
    %v1000 = vor.u32 %v998, %v999
    %v1001 = vsub.s32 4294967266, %v996
    %v1002 = vadd.s32 %v1001, 127
    %v1003 = vshll.u32 %v1002, 23
    %v1004 = vor.u32 4788187, %v1003
    %v1005 = vand.u32 2147483647, %v1004
    %v1007 = vcvt.s32.f32 %v1000
    %v1008 = vmul.f32 %v1007, %v1005
    %v1009 = vxor.u32 %v1008, 2147483648
    %v1010 = vsel %vm889, %v1009, %v1008
    %v1011 = vsub.s32 4, %v987
    %v1012 = vsel %vm889, %v1011, %v987
    %v1013 = vsel %vm888, %v115, %v1010
    %v1014 = vsel %vm888, 0, %v1012
    %v1015 = vmul.f32 %v1013, %v1013
    %v1016 = vmul.f32 %v1015, -0.001358992
    %v1017 = vadd.f32 %v1016, 0.041655596
    %v1018 = vmul.f32 %v1015, %v1017
    %v1019 = vadd.f32 %v1018, -0.4999988
    %v1020 = vmul.f32 %v1015, %v1019
    %v1021 = vadd.f32 1.0, %v1020
    %v1022 = vmul.f32 %v1013, %v1013
    %v1023 = vmul.f32 %v1022, -0.00019511016
    %v1024 = vadd.f32 %v1023, 0.008332121
    %v1025 = vmul.f32 %v1022, %v1024
    %v1026 = vadd.f32 %v1025, -0.16666654
    %v1027 = vmul.f32 %v1022, %v1026
    %v1028 = vadd.f32 %v1027, 1.0
    %v1029 = vmul.f32 %v1028, %v1013
    %vm1030 = vweird.f32 %v115
    %v1031 = vand.u32 %v1014, 3
    %vm1032 = vcmp.lt.s32.totalorder %v1031, 2
    %vm1033 = vcmp.eq.s32.totalorder %v1031, 0
    %v1034 = vxor.u32 %v1029, 2147483648
    %v1035 = vsel %vm1033, %v1021, %v1034
    %vm1036 = vcmp.eq.s32.totalorder %v1031, 2
    %v1037 = vxor.u32 %v1021, 2147483648
    %v1038 = vsel %vm1036, %v1037, %v1029
    %v1039 = vsel %vm1032, %v1035, %v1038
    %v1040 = vsel %vm1030, nan, %v1039
    %v1041 = vand.u32 2147483647, %v116
    %vm1042 = vcmp.le.f32.partialorder %v1041, 0.7853982
    %vm1043 = vcmp.lt.s32.totalorder %v116, 0
    %v1044 = vand.u32 %v116, 2139095040
    %v1045 = vshrl.u32 %v1044, 23
    %v1046 = vsub.s32 %v1045, 127
    %v1047 = vand.u32 2147483647, %v116
    %v1048 = vand.u32 %v1047, 8388607
    %v1049 = vor.u32 %v1048, 8388608
    %v1050 = vsub.s32 0, %v1049
    %v1051 = vadd.s32 %v1046, 1
    %vm1052 = vcmp.gt.s32.totalorder %v1051, 0
    %v1053 = vsel %vm1052, %v1051, 0
    %v1054 = vshrl.u32 %v1053, 5
    %v1055 = vand.u32 %v1053, 31
    %v1056 = vsub.s32 32, %v1055
    %v1057 = vshrl.u32 683565275, %v1056
    %v1058 = vshll.u32 683565275, %v1055
    %v1059 = vshrl.u32 2475754826, %v1056
    %v1060 = vor.u32 %v1058, %v1059
    %v1061 = vshll.u32 2475754826, %v1055
    %v1062 = vshrl.u32 2131351028, %v1056
    %v1063 = vor.u32 %v1061, %v1062
    %v1064 = vshll.u32 2131351028, %v1055
    %v1065 = vshrl.u32 2102212464, %v1056
    %v1066 = vor.u32 %v1064, %v1065
    %v1067 = vshll.u32 2102212464, %v1055
    %v1068 = vshrl.u32 920167782, %v1056
    %v1069 = vor.u32 %v1067, %v1068
    %v1070 = vshll.u32 920167782, %v1055
    %v1071 = vshrl.u32 1326507024, %v1056
    %v1072 = vor.u32 %v1070, %v1071
    %vm1073 = vcmp.lt.s32.totalorder %v1054, 1
    %vm1074 = vcmp.lt.s32.totalorder %v1054, 2
    %vm1075 = vcmp.lt.s32.totalorder %v1054, 3
    %vm1076 = vcmp.lt.s32.totalorder %v1054, 4
    %v1077 = vsel %vm1073, %v1057, %v1060
    %v1078 = vsel %vm1076, %v1066, 2102212464
    %v1079 = vsel %vm1075, %v1063, %v1078
    %v1080 = vsel %vm1074, %v1077, %v1079
    %v1081 = vsel %vm1073, %v1060, %v1063
    %v1082 = vsel %vm1076, %v1069, 920167782
    %v1083 = vsel %vm1075, %v1066, %v1082
    %v1084 = vsel %vm1074, %v1081, %v1083
    %v1085 = vsel %vm1073, %v1063, %v1066
    %v1086 = vsel %vm1076, %v1072, 1326507024
    %v1087 = vsel %vm1075, %v1069, %v1086
    %v1088 = vsel %vm1074, %v1085, %v1087
    %v1089 = vshll.u32 %v1049, 8
    %v1090 = vand.u32 %v1089, 65535
    %v1091 = vshrl.u32 %v1089, 16
    %v1092 = vand.u32 %v1088, 65535
    %v1093 = vshrl.u32 %v1088, 16
    %v1094 = vmul.u32 %v1090, %v1092
    %v1095 = vmul.u32 %v1090, %v1093
    %v1096 = vmul.u32 %v1091, %v1092
    %v1097 = vmul.u32 %v1091, %v1093
    %v1098 = vshll.u32 %v1095, 16
    %v1099 = vshrl.u32 %v1095, 16
    %v1100 = vshll.u32 %v1096, 16
    %v1101 = vshrl.u32 %v1096, 16
    %vm1102 = vc.u32 %v1094, %v1098
    %v1103 = vsel %vm1102, 1, 0
    %v1104 = vadd.s32 %v1094, %v1098
    %v1105 = vadd.s32 %v1097, %v1103
    %vm1106 = vc.u32 %v1104, %v1100
    %v1107 = vsel %vm1106, 1, 0
    %v1108 = vadd.s32 %v1104, %v1100
    %v1109 = vadd.s32 %v1105, %v1107
    %v1110 = vadd.s32 %v1109, %v1099
    %v1111 = vadd.s32 %v1110, %v1101
    %v1112 = vand.u32 %v1089, 65535
    %v1113 = vshrl.u32 %v1089, 16
    %v1114 = vand.u32 %v1084, 65535
    %v1115 = vshrl.u32 %v1084, 16
    %v1116 = vmul.u32 %v1112, %v1114
    %v1117 = vmul.u32 %v1112, %v1115
    %v1118 = vmul.u32 %v1113, %v1114
    %v1119 = vmul.u32 %v1113, %v1115
    %v1120 = vshll.u32 %v1117, 16
    %v1121 = vshrl.u32 %v1117, 16
    %v1122 = vshll.u32 %v1118, 16
    %v1123 = vshrl.u32 %v1118, 16
    %vm1124 = vc.u32 %v1116, %v1120
    %v1125 = vsel %vm1124, 1, 0
    %v1126 = vadd.s32 %v1116, %v1120
    %v1127 = vadd.s32 %v1119, %v1125
    %vm1128 = vc.u32 %v1126, %v1122
    %v1129 = vsel %vm1128, 1, 0
    %v1130 = vadd.s32 %v1126, %v1122
    %v1131 = vadd.s32 %v1127, %v1129
    %v1132 = vadd.s32 %v1131, %v1121
    %v1133 = vadd.s32 %v1132, %v1123
    %v1134 = vmul.u32 %v1089, %v1080
    %v1135 = vadd.s32 %v1111, %v1130
    %vm1136 = vc.u32 %v1111, %v1130
    %v1137 = vadd.s32 %v1133, 1
    %v1138 = vsel %vm1136, %v1137, %v1133
    %v1139 = vadd.s32 %v1134, %v1138
    %v1140 = vadd.s32 %v1139, 536870912
    %v1141 = vshrl.u32 %v1140, 30
    %v1142 = vshll.u32 %v1141, 30
    %v1143 = vsub.s32 %v1139, %v1142
    %vm1144 = vcmp.lt.s32.totalorder %v1143, 0
    %v1145 = vsub.s32 0, %v1143
    %v1146 = vsel %vm1144, %v1145, %v1143
    %v1147 = vclz %v1146
    %v1148 = vsub.s32 %v1147, 2
    %vm1149 = vcmp.gt.s32.totalorder 0, %v1148
    %v1150 = vsel %vm1149, 0, %v1148
    %v1151 = vsub.s32 32, %v1150
    %v1152 = vshll.u32 %v1143, %v1150
    %v1153 = vshrl.u32 %v1135, %v1151
    %v1154 = vor.u32 %v1152, %v1153
    %v1155 = vsub.s32 4294967266, %v1150
    %v1156 = vadd.s32 %v1155, 127
    %v1157 = vshll.u32 %v1156, 23
    %v1158 = vor.u32 4788187, %v1157
    %v1159 = vand.u32 2147483647, %v1158
    %v1161 = vcvt.s32.f32 %v1154
    %v1162 = vmul.f32 %v1161, %v1159
    %v1163 = vxor.u32 %v1162, 2147483648
    %v1164 = vsel %vm1043, %v1163, %v1162
    %v1165 = vsub.s32 4, %v1141
    %v1166 = vsel %vm1043, %v1165, %v1141
    %v1167 = vsel %vm1042, %v116, %v1164
    %v1168 = vsel %vm1042, 0, %v1166
    %v1169 = vmul.f32 %v1167, %v1167
    %v1170 = vmul.f32 %v1169, -0.001358992
    %v1171 = vadd.f32 %v1170, 0.041655596
    %v1172 = vmul.f32 %v1169, %v1171
    %v1173 = vadd.f32 %v1172, -0.4999988
    %v1174 = vmul.f32 %v1169, %v1173
    %v1175 = vadd.f32 1.0, %v1174
    %v1176 = vmul.f32 %v1167, %v1167
    %v1177 = vmul.f32 %v1176, -0.00019511016
    %v1178 = vadd.f32 %v1177, 0.008332121
    %v1179 = vmul.f32 %v1176, %v1178
    %v1180 = vadd.f32 %v1179, -0.16666654
    %v1181 = vmul.f32 %v1176, %v1180
    %v1182 = vadd.f32 %v1181, 1.0
    %v1183 = vmul.f32 %v1182, %v1167
    %vm1184 = vweird.f32 %v116
    %v1185 = vand.u32 %v1168, 3
    %vm1186 = vcmp.lt.s32.totalorder %v1185, 2
    %vm1187 = vcmp.eq.s32.totalorder %v1185, 0
    %v1188 = vxor.u32 %v1183, 2147483648
    %v1189 = vsel %vm1187, %v1175, %v1188
    %vm1190 = vcmp.eq.s32.totalorder %v1185, 2
    %v1191 = vxor.u32 %v1175, 2147483648
    %v1192 = vsel %vm1190, %v1191, %v1183
    %v1193 = vsel %vm1186, %v1189, %v1192
    %v1194 = vsel %vm1184, nan, %v1193
    %v1195 = vsub.f32 1.0, %v270
    %v1196 = vsub.f32 1.0, %v424
    %v1197 = vsub.f32 1.0, %v578
    %v1198 = vsub.f32 1.0, %v732
    %v1199 = vsub.f32 1.0, %v886
    %v1200 = vsub.f32 1.0, %v1040
    %v1201 = vsub.f32 1.0, %v1194
    %1208 = vrot.lane.b32.xlu0 %v1195, 127
    %v1209 = vpop.permute.xlu0 %1208
    %1210 = vrot.lane.b32.xlu0 %v1196, 127
    %v1211 = vpop.permute.xlu0 %1210
    %1212 = vrot.lane.b32.xlu0 %v1197, 127
    %v1213 = vpop.permute.xlu0 %1212
    %1214 = vrot.lane.b32.xlu0 %v1198, 127
    %v1215 = vpop.permute.xlu0 %1214
    %1216 = vrot.lane.b32.xlu0 %v1199, 127
    %v1217 = vpop.permute.xlu0 %1216
    %1218 = vrot.lane.b32.xlu0 %v1200, 127
    %v1219 = vpop.permute.xlu0 %1218
    %vm1220 = vcmask 1039360
    %v1221 = vsel %vm1220, %v1209, %v1211
    %v1222 = vsel %vm1220, %v1211, %v1213
    %v1223 = vsel %vm1220, %v1213, %v1215
    %v1224 = vsel %vm1220, %v1215, %v1217
    %v1225 = vsel %vm1220, %v1217, %v1219
    %v1232 = vmul.f32 %v1195, %v1221
    %v1233 = vmul.f32 %v1196, %v1222
    %v1234 = vmul.f32 %v1197, %v1223
    %v1235 = vmul.f32 %v1198, %v1224
    %v1236 = vmul.f32 %v1199, %v1225
    %v1237 = vmul.f32 %v1200, %v1219
    %1239 = vrot.lane.b32.xlu0 %v1195, 100
    %v1240 = vpop.permute.xlu0 %1239
    %1241 = vrot.lane.b32.xlu0 %v1196, 100
    %v1242 = vpop.permute.xlu0 %1241
    %1243 = vrot.lane.b32.xlu0 %v1197, 100
    %v1244 = vpop.permute.xlu0 %1243
    %1245 = vrot.lane.b32.xlu0 %v1198, 100
    %v1246 = vpop.permute.xlu0 %1245
    %1247 = vrot.lane.b32.xlu0 %v1199, 100
    %v1248 = vpop.permute.xlu0 %1247
    %1249 = vrot.lane.b32.xlu0 %v1200, 100
    %v1250 = vpop.permute.xlu0 %1249
    %1251 = vrot.lane.b32.xlu0 %v1201, 100
    %v1252 = vpop.permute.xlu0 %1251
    %vm1253 = vcmask 818176
    %v1254 = vsel %vm1253, %v1240, %v1242
    %v1255 = vsel %vm1253, %v1242, %v1244
    %v1256 = vsel %vm1253, %v1244, %v1246
    %v1257 = vsel %vm1253, %v1246, %v1248
    %v1258 = vsel %vm1253, %v1248, %v1250
    %v1259 = vsel %vm1253, %v1250, %v1252
    %v1266 = vmul.f32 %v1232, %v1254
    %v1267 = vmul.f32 %v1233, %v1255
    %v1268 = vmul.f32 %v1234, %v1256
    %v1269 = vmul.f32 %v1235, %v1257
    %v1270 = vmul.f32 %v1236, %v1258
    %v1271 = vmul.f32 %v1237, %v1259
    %v1272 = vmul.f32 %v1266, 0.25
    %v1273 = vmul.f32 %v1267, 0.25
    %v1274 = vmul.f32 %v1268, 0.25
    %v1275 = vmul.f32 %v1269, 0.25
    %v1276 = vmul.f32 %v1270, 0.25
    %v1277 = vmul.f32 %v1271, 0.25
    %v1278 = vsub.f32 1.0, %v1272
    %v1279 = vsub.f32 1.0, %v1273
    %v1280 = vsub.f32 1.0, %v1274
    %v1281 = vsub.f32 1.0, %v1275
    %v1282 = vsub.f32 1.0, %v1276
    %v1283 = vsub.f32 1.0, %v1277
    %1290 = vrot.lane.b32.xlu0 %v1278, 29
    %v1291 = vpop.permute.xlu0 %1290
    %1292 = vrot.lane.b32.xlu0 %v1279, 29
    %v1293 = vpop.permute.xlu0 %1292
    %1294 = vrot.lane.b32.xlu0 %v1280, 29
    %v1295 = vpop.permute.xlu0 %1294
    %1296 = vrot.lane.b32.xlu0 %v1281, 29
    %v1297 = vpop.permute.xlu0 %1296
    %1298 = vrot.lane.b32.xlu0 %v1282, 29
    %v1299 = vpop.permute.xlu0 %1298
    %1300 = vrot.lane.b32.xlu0 %v1283, 29
    %v1301 = vpop.permute.xlu0 %1300
    %vm1302 = vcmask 236544
    %v1303 = vsel %vm1302, %v1291, %v1293
    %v1304 = vsel %vm1302, %v1293, %v1295
    %v1305 = vsel %vm1302, %v1295, %v1297
    %v1306 = vsel %vm1302, %v1297, %v1299
    %v1307 = vsel %vm1302, %v1299, %v1301
    %v1315 = vmul.f32 %v270, %v1291
    %v1316 = vmul.f32 %v424, %v1303
    %v1317 = vmul.f32 %v578, %v1304
    %v1318 = vmul.f32 %v732, %v1305
    %v1319 = vmul.f32 %v886, %v1306
    %v1320 = vmul.f32 %v1040, %v1307
    %v1321 = vmul.f32 %v1194, %v1301
    %v1322 = vpack.c.bf16 %v1315, %v1315
    %v1323 = vpack.c.bf16 %v1316, %v1316
    %v1324 = vpack.c.bf16 %v1317, %v1317
    %v1325 = vpack.c.bf16 %v1318, %v1318
    %v1326 = vpack.c.bf16 %v1319, %v1319
    %v1327 = vpack.c.bf16 %v1320, %v1320
    %v1328 = vpack.c.bf16 %v1321, %v1321
    %v1329 = vld [vmem:[#allocation7] sm:$0xf]
    %v1330 = vld [vmem:[#allocation7 + $0x4] sm:$0xf]
    %v1331 = vld [vmem:[#allocation7 + $0x8] sm:$0xf]
    %v1332 = vld [vmem:[#allocation7 + $0xc] sm:$0xf]
    %v1333 = vld [vmem:[#allocation7 + $0x10] sm:$0xf]
    %v1334 = vld [vmem:[#allocation7 + $0x14] sm:$0xf]
    %v1335 = vld [vmem:[#allocation7 + $0x18] sm:$0xf]
    %v1336 = vld [vmem:[#allocation7 + $0x1c] sm:$0xf]
    %v1337 = vld [vmem:[#allocation7 + $0x20] sm:$0xf]
    %v1338 = vld [vmem:[#allocation7 + $0x24] sm:$0xf]
    %v1339 = vld [vmem:[#allocation7 + $0x28] sm:$0xf]
    %v1340 = vld [vmem:[#allocation7 + $0x2c] sm:$0xf]
    %v1341 = vld [vmem:[#allocation7 + $0x30] sm:$0xf]
    %v1342 = vld [vmem:[#allocation7 + $0x34] sm:$0xf]
    %v1343 = vld [vmem:[#allocation7 + $0x38] sm:$0xf]
    %v1344 = vld [vmem:[#allocation7 + $0x3c] sm:$0xf]
    %v1345 = vld [vmem:[#allocation7 + $0x40] sm:$0xf]
    %v1346 = vld [vmem:[#allocation7 + $0x44] sm:$0xf]
    %v1347 = vld [vmem:[#allocation7 + $0x48] sm:$0xf]
    %v1348 = vld [vmem:[#allocation7 + $0x4c] sm:$0xf]
    %v1349 = vld [vmem:[#allocation7 + $0x50] sm:$0xf]
    %v1350 = vld [vmem:[#allocation7 + $0x54] sm:$0xf]
    %v1351 = vld [vmem:[#allocation7 + $0x58] sm:$0xf]
    %v1352 = vld [vmem:[#allocation7 + $0x5c] sm:$0xf]
    %v1353 = vld [vmem:[#allocation7 + $0x60] sm:$0xf]
    %v1354 = vld [vmem:[#allocation7 + $0x64] sm:$0xf]
    %v1355 = vld [vmem:[#allocation7 + $0x68] sm:$0xf]
    %v1356 = vld [vmem:[#allocation7 + $0x6c] sm:$0xf]
    %v1357 = vld [vmem:[#allocation7 + $0x70] sm:$0xf]
    %v1358 = vld [vmem:[#allocation7 + $0x74] sm:$0xf]
    %v1359 = vld [vmem:[#allocation7 + $0x78] sm:$0xf]
    %v1360 = vld [vmem:[#allocation7 + $0x7c] sm:$0xf]
    %v1361 = vld [vmem:[#allocation7 + $0x80] sm:$0xf]
    %v1362 = vld [vmem:[#allocation7 + $0x84] sm:$0xf]
    %v1363 = vld [vmem:[#allocation7 + $0x88] sm:$0xf]
    %v1364 = vld [vmem:[#allocation7 + $0x8c] sm:$0xf]
    %v1365 = vld [vmem:[#allocation7 + $0x90] sm:$0xf]
    %v1366 = vld [vmem:[#allocation7 + $0x94] sm:$0xf]
    %v1367 = vld [vmem:[#allocation7 + $0x98] sm:$0xf]
    %v1368 = vld [vmem:[#allocation7 + $0x9c] sm:$0xf]
    %v1369 = vld [vmem:[#allocation7 + $0xa0] sm:$0xf]
    %v1370 = vld [vmem:[#allocation7 + $0xa4] sm:$0xf]
    %v1371 = vld [vmem:[#allocation7 + $0xa8] sm:$0xf]
    %v1372 = vld [vmem:[#allocation7 + $0xac] sm:$0xf]
    %v1373 = vld [vmem:[#allocation7 + $0xb0] sm:$0xf]
    %v1374 = vld [vmem:[#allocation7 + $0xb4] sm:$0xf]
    %v1375 = vld [vmem:[#allocation7 + $0xb8] sm:$0xf]
    %v1376 = vld [vmem:[#allocation7 + $0xbc] sm:$0xf]
    %v1377 = vld [vmem:[#allocation7 + $0xc0] sm:$0xf]
    %v1378 = vld [vmem:[#allocation7 + $0xc4] sm:$0xf]
    %v1379 = vld [vmem:[#allocation7 + $0xc8] sm:$0xf]
    %v1380 = vld [vmem:[#allocation7 + $0xcc] sm:$0xf]
    %v1381 = vld [vmem:[#allocation7 + $0xd0] sm:$0xf]
    %v1382 = vld [vmem:[#allocation7 + $0xd4] sm:$0xf]
    %v1383 = vld [vmem:[#allocation7 + $0xd8] sm:$0xf]
    %v1384 = vld [vmem:[#allocation7 + $0xdc] sm:$0xf]
    %v1385 = vld [vmem:[#allocation7 + $0xe0] sm:$0xf]
    %v1386 = vld [vmem:[#allocation7 + $0xe4] sm:$0xf]
    %v1387 = vld [vmem:[#allocation7 + $0xe8] sm:$0xf]
    %v1388 = vld [vmem:[#allocation7 + $0xec] sm:$0xf]
    %v1389 = vld [vmem:[#allocation7 + $0xf0] sm:$0xf]
    %v1390 = vld [vmem:[#allocation7 + $0xf4] sm:$0xf]
    %v1391 = vld [vmem:[#allocation7 + $0xf8] sm:$0xf]
    %v1392 = vld [vmem:[#allocation7 + $0xfc] sm:$0xf]
    %v1393 = vld [vmem:[#allocation7 + $0x100] sm:$0xf]
    %v1394 = vld [vmem:[#allocation7 + $0x104] sm:$0xf]
    %v1395 = vld [vmem:[#allocation7 + $0x108] sm:$0xf]
    %v1396 = vld [vmem:[#allocation7 + $0x10c] sm:$0xf]
    %v1397 = vld [vmem:[#allocation7 + $0x110] sm:$0xf]
    %v1398 = vld [vmem:[#allocation7 + $0x114] sm:$0xf]
    %v1399 = vld [vmem:[#allocation7 + $0x118] sm:$0xf]
    %v1400 = vld [vmem:[#allocation7 + $0x11c] sm:$0xf]
    %v1401 = vld [vmem:[#allocation7 + $0x120] sm:$0xf]
    %v1402 = vld [vmem:[#allocation7 + $0x124] sm:$0xf]
    %v1403 = vld [vmem:[#allocation7 + $0x128] sm:$0xf]
    %v1404 = vld [vmem:[#allocation7 + $0x12c] sm:$0xf]
    %v1405 = vld [vmem:[#allocation7 + $0x130] sm:$0xf]
    %v1406 = vld [vmem:[#allocation7 + $0x134] sm:$0xf]
    %v1407 = vld [vmem:[#allocation7 + $0x138] sm:$0xf]
    %v1408 = vld [vmem:[#allocation7 + $0x13c] sm:$0xf]
    %v1409 = vld [vmem:[#allocation7 + $0x140] sm:$0xf]
    %v1410 = vld [vmem:[#allocation7 + $0x144] sm:$0xf]
    %v1411 = vld [vmem:[#allocation7 + $0x148] sm:$0xf]
    %v1412 = vld [vmem:[#allocation7 + $0x14c] sm:$0xf]
    %v1413 = vld [vmem:[#allocation7 + $0x150] sm:$0xf]
    %v1414 = vld [vmem:[#allocation7 + $0x154] sm:$0xf]
    %v1415 = vld [vmem:[#allocation7 + $0x158] sm:$0xf]
    %v1416 = vld [vmem:[#allocation7 + $0x15c] sm:$0xf]
    %v1417 = vld [vmem:[#allocation7 + $0x160] sm:$0xf]
    %v1418 = vld [vmem:[#allocation7 + $0x164] sm:$0xf]
    %v1419 = vld [vmem:[#allocation7 + $0x168] sm:$0xf]
    %v1420 = vld [vmem:[#allocation7 + $0x16c] sm:$0xf]
    %v1421 = vld [vmem:[#allocation7 + $0x170] sm:$0xf]
    %v1422 = vld [vmem:[#allocation7 + $0x174] sm:$0xf]
    %v1423 = vld [vmem:[#allocation7 + $0x178] sm:$0x3]
    %v1424 = vld [vmem:[%s3] sm:$0x1]
    %v1426 = vperm.slane %v1424, 0
    %1435 = vrot.lane.b32.xlu0 %v1322, 99
    %v1436 = vpop.permute.xlu0 %1435
    %1437 = vrot.lane.b32.xlu0 %v1323, 99
    %v1438 = vpop.permute.xlu0 %1437
    %1439 = vrot.lane.b32.xlu0 %v1324, 99
    %v1440 = vpop.permute.xlu0 %1439
    %1441 = vrot.lane.b32.xlu0 %v1325, 99
    %v1442 = vpop.permute.xlu0 %1441
    %1443 = vrot.lane.b32.xlu0 %v1326, 99
    %v1444 = vpop.permute.xlu0 %1443
    %1445 = vrot.lane.b32.xlu0 %v1327, 99
    %v1446 = vpop.permute.xlu0 %1445
    %1447 = vrot.lane.b32.xlu0 %v1328, 99
    %v1448 = vpop.permute.xlu0 %1447
    %vm1449 = vcmask 809984
    %v1450 = vsel %vm1449, %v1436, %v1438
    %v1451 = vsel %vm1449, %v1438, %v1440
    %v1452 = vsel %vm1449, %v1440, %v1442
    %v1453 = vsel %vm1449, %v1442, %v1444
    %v1454 = vsel %vm1449, %v1444, %v1446
    %v1455 = vsel %vm1449, %v1446, %v1448
    %v1556 = vunpack.c.l.b16 %v1329
    %v1557 = vunpack.c.l.b16 %v1330
    %v1558 = vunpack.c.l.b16 %v1331
    %v1559 = vunpack.c.l.b16 %v1332
    %v1560 = vunpack.c.l.b16 %v1333
    %v1561 = vunpack.c.l.b16 %v1334
    %v1562 = vunpack.c.l.b16 %v1335
    %v1563 = vunpack.c.l.b16 %v1336
    %v1564 = vunpack.c.l.b16 %v1337
    %v1565 = vunpack.c.l.b16 %v1338
    %v1566 = vunpack.c.l.b16 %v1339
    %v1567 = vunpack.c.l.b16 %v1340
    %v1568 = vunpack.c.l.b16 %v1341
    %v1569 = vunpack.c.l.b16 %v1342
    %v1570 = vunpack.c.l.b16 %v1343
    %v1571 = vunpack.c.l.b16 %v1344
    %v1572 = vunpack.c.l.b16 %v1345
    %v1573 = vunpack.c.l.b16 %v1346
    %v1574 = vunpack.c.l.b16 %v1347
    %v1575 = vunpack.c.l.b16 %v1348
    %v1576 = vunpack.c.l.b16 %v1349
    %v1577 = vunpack.c.l.b16 %v1350
    %v1578 = vunpack.c.l.b16 %v1351
    %v1579 = vunpack.c.l.b16 %v1352
    %v1580 = vunpack.c.l.b16 %v1353
    %v1581 = vunpack.c.l.b16 %v1354
    %v1582 = vunpack.c.l.b16 %v1355
    %v1583 = vunpack.c.l.b16 %v1356
    %v1584 = vunpack.c.l.b16 %v1357
    %v1585 = vunpack.c.l.b16 %v1358
    %v1586 = vunpack.c.l.b16 %v1359
    %v1587 = vunpack.c.l.b16 %v1360
    %v1588 = vunpack.c.l.b16 %v1361
    %v1589 = vunpack.c.l.b16 %v1362
    %v1590 = vunpack.c.l.b16 %v1363
    %v1591 = vunpack.c.l.b16 %v1364
    %v1592 = vunpack.c.l.b16 %v1365
    %v1593 = vunpack.c.l.b16 %v1366
    %v1594 = vunpack.c.l.b16 %v1367
    %v1595 = vunpack.c.l.b16 %v1368
    %v1596 = vunpack.c.l.b16 %v1369
    %v1597 = vunpack.c.l.b16 %v1370
    %v1598 = vunpack.c.l.b16 %v1371
    %v1599 = vunpack.c.l.b16 %v1372
    %v1600 = vunpack.c.l.b16 %v1373
    %v1601 = vunpack.c.l.b16 %v1374
    %v1602 = vunpack.c.l.b16 %v1375
    %v1603 = vunpack.c.l.b16 %v1376
    %v1604 = vunpack.c.l.b16 %v1377
    %v1605 = vunpack.c.l.b16 %v1378
    %v1606 = vunpack.c.l.b16 %v1379
    %v1607 = vunpack.c.l.b16 %v1380
    %v1608 = vunpack.c.l.b16 %v1381
    %v1609 = vunpack.c.l.b16 %v1382
    %v1610 = vunpack.c.l.b16 %v1383
    %v1611 = vunpack.c.l.b16 %v1384
    %v1612 = vunpack.c.l.b16 %v1385
    %v1613 = vunpack.c.l.b16 %v1386
    %v1614 = vunpack.c.l.b16 %v1387
    %v1615 = vunpack.c.l.b16 %v1388
    %v1616 = vunpack.c.l.b16 %v1389
    %v1617 = vunpack.c.l.b16 %v1390
    %v1618 = vunpack.c.l.b16 %v1391
    %v1619 = vunpack.c.l.b16 %v1392
    %v1620 = vunpack.c.l.b16 %v1393
    %v1621 = vunpack.c.l.b16 %v1394
    %v1622 = vunpack.c.l.b16 %v1395
    %v1623 = vunpack.c.l.b16 %v1396
    %v1624 = vunpack.c.l.b16 %v1397
    %v1625 = vunpack.c.l.b16 %v1398
    %v1626 = vunpack.c.l.b16 %v1399
    %v1627 = vunpack.c.l.b16 %v1400
    %v1628 = vunpack.c.l.b16 %v1401
    %v1629 = vunpack.c.l.b16 %v1402
    %v1630 = vunpack.c.l.b16 %v1403
    %v1631 = vunpack.c.l.b16 %v1404
    %v1632 = vunpack.c.l.b16 %v1405
    %v1633 = vunpack.c.l.b16 %v1406
    %v1634 = vunpack.c.l.b16 %v1407
    %v1635 = vunpack.c.l.b16 %v1408
    %v1636 = vunpack.c.l.b16 %v1409
    %v1637 = vunpack.c.l.b16 %v1410
    %v1638 = vunpack.c.l.b16 %v1411
    %v1639 = vunpack.c.l.b16 %v1412
    %v1640 = vunpack.c.l.b16 %v1413
    %v1641 = vunpack.c.l.b16 %v1414
    %v1642 = vunpack.c.l.b16 %v1415
    %v1643 = vunpack.c.l.b16 %v1416
    %v1644 = vunpack.c.l.b16 %v1417
    %v1645 = vunpack.c.l.b16 %v1418
    %v1646 = vunpack.c.l.b16 %v1419
    %v1647 = vunpack.c.l.b16 %v1420
    %v1648 = vunpack.c.l.b16 %v1421
    %v1649 = vunpack.c.l.b16 %v1422
    %v1650 = vunpack.c.l.b16 %v1423
    %v1651 = vpack.c.b16 %v1557, %v1556
    %v1652 = vpack.c.b16 %v1559, %v1558
    %v1653 = vpack.c.b16 %v1561, %v1560
    %v1654 = vpack.c.b16 %v1563, %v1562
    %v1655 = vpack.c.b16 %v1565, %v1564
    %v1656 = vpack.c.b16 %v1567, %v1566
    %v1657 = vpack.c.b16 %v1569, %v1568
    %v1658 = vpack.c.b16 %v1571, %v1570
    %v1659 = vpack.c.b16 %v1573, %v1572
    %v1660 = vpack.c.b16 %v1575, %v1574
    %v1661 = vpack.c.b16 %v1577, %v1576
    %v1662 = vpack.c.b16 %v1579, %v1578
    %v1663 = vpack.c.b16 %v1581, %v1580
    %v1664 = vpack.c.b16 %v1583, %v1582
    %v1665 = vpack.c.b16 %v1585, %v1584
    %v1666 = vpack.c.b16 %v1587, %v1586
    %v1667 = vpack.c.b16 %v1589, %v1588
    %v1668 = vpack.c.b16 %v1591, %v1590
    %v1669 = vpack.c.b16 %v1593, %v1592
    %v1670 = vpack.c.b16 %v1595, %v1594
    %v1671 = vpack.c.b16 %v1597, %v1596
    %v1672 = vpack.c.b16 %v1599, %v1598
    %v1673 = vpack.c.b16 %v1601, %v1600
    %v1674 = vpack.c.b16 %v1603, %v1602
    %v1675 = vpack.c.b16 %v1605, %v1604
    %v1676 = vpack.c.b16 %v1607, %v1606
    %v1677 = vpack.c.b16 %v1609, %v1608
    %v1678 = vpack.c.b16 %v1611, %v1610
    %v1679 = vpack.c.b16 %v1613, %v1612
    %v1680 = vpack.c.b16 %v1615, %v1614
    %v1681 = vpack.c.b16 %v1617, %v1616
    %v1682 = vpack.c.b16 %v1619, %v1618
    %v1683 = vpack.c.b16 %v1621, %v1620
    %v1684 = vpack.c.b16 %v1623, %v1622
    %v1685 = vpack.c.b16 %v1625, %v1624
    %v1686 = vpack.c.b16 %v1627, %v1626
    %v1687 = vpack.c.b16 %v1629, %v1628
    %v1688 = vpack.c.b16 %v1631, %v1630
    %v1689 = vpack.c.b16 %v1633, %v1632
    %v1690 = vpack.c.b16 %v1635, %v1634
    %v1691 = vpack.c.b16 %v1637, %v1636
    %v1692 = vpack.c.b16 %v1639, %v1638
    %v1693 = vpack.c.b16 %v1641, %v1640
    %v1694 = vpack.c.b16 %v1643, %v1642
    %v1695 = vpack.c.b16 %v1645, %v1644
    %v1696 = vpack.c.b16 %v1647, %v1646
    %v1697 = vpack.c.b16 %v1649, %v1648
    %v1698 = vpack.c.b16 %v1650, %v1650
    %vm1746 = vcmask 941056
    %v1748 = vsel %vm1746, %v1455, 0
    %vm1750 = vcmask 1040384
    %vm1751 = vcmask 1041408
    %v1752 = vsel %vm1750, 4294967295, 65535
    %v1753 = vsel %vm1751, %v1752, 0
    %v1755 = vand.u32 %v1698, %v1753
    %1757 = vmatpush.bf16.msra.mxu0 %v1658
    %1758 = vmatpush.bf16.msra.mxu0 %v1657
    %1759 = vmatpush.bf16.msra.mxu0 %v1656
    %1760 = vmatpush.bf16.msra.mxu0 %v1655
    %1761 = vmatpush.bf16.msra.mxu0 %v1654
    %1762 = vmatpush.bf16.msra.mxu0 %v1653
    %1763 = vmatpush.bf16.msra.mxu0 %v1652
    %1764 = vmatpush.bf16.msra.mxu0 %v1651
    %1765 = vmatmul.bf16.gmra.mxu0 %v1450
    %v1766 = vpop.f32.mrf.mxu0
    %v1767 = vadd.f32 %v1426, %v1766
    %v1768 = vpop.f32.mrf.mxu0
    %1769 = vdwg.mxu0
    %1770 = vmatpush.bf16.msra.mxu0 %v1666
    %1771 = vmatpush.bf16.msra.mxu0 %v1665
    %1772 = vmatpush.bf16.msra.mxu0 %v1664
    %1773 = vmatpush.bf16.msra.mxu0 %v1663
    %1774 = vmatpush.bf16.msra.mxu0 %v1662
    %1775 = vmatpush.bf16.msra.mxu0 %v1661
    %1776 = vmatpush.bf16.msra.mxu0 %v1660
    %1777 = vmatpush.bf16.msra.mxu0 %v1659
    %1778 = vmatmul.bf16.gmra.mxu0 %v1451
    %v1779 = vpop.f32.mrf.mxu0
    %v1780 = vadd.f32 %v1767, %v1779
    %v1781 = vpop.f32.mrf.mxu0
    %1782 = vdwg.mxu0
    %1783 = vmatpush.bf16.msra.mxu0 %v1674
    %1784 = vmatpush.bf16.msra.mxu0 %v1673
    %1785 = vmatpush.bf16.msra.mxu0 %v1672
    %1786 = vmatpush.bf16.msra.mxu0 %v1671
    %1787 = vmatpush.bf16.msra.mxu0 %v1670
    %1788 = vmatpush.bf16.msra.mxu0 %v1669
    %1789 = vmatpush.bf16.msra.mxu0 %v1668
    %1790 = vmatpush.bf16.msra.mxu0 %v1667
    %1791 = vmatmul.bf16.gmra.mxu0 %v1452
    %v1792 = vpop.f32.mrf.mxu0
    %v1793 = vadd.f32 %v1780, %v1792
    %v1794 = vpop.f32.mrf.mxu0
    %1795 = vdwg.mxu0
    %1796 = vmatpush.bf16.msra.mxu0 %v1682
    %1797 = vmatpush.bf16.msra.mxu0 %v1681
    %1798 = vmatpush.bf16.msra.mxu0 %v1680
    %1799 = vmatpush.bf16.msra.mxu0 %v1679
    %1800 = vmatpush.bf16.msra.mxu0 %v1678
    %1801 = vmatpush.bf16.msra.mxu0 %v1677
    %1802 = vmatpush.bf16.msra.mxu0 %v1676
    %1803 = vmatpush.bf16.msra.mxu0 %v1675
    %1804 = vmatmul.bf16.gmra.mxu0 %v1453
    %v1805 = vpop.f32.mrf.mxu0
    %v1806 = vadd.f32 %v1793, %v1805
    %v1807 = vpop.f32.mrf.mxu0
    %1808 = vdwg.mxu0
    %1809 = vmatpush.bf16.msra.mxu0 %v1690
    %1810 = vmatpush.bf16.msra.mxu0 %v1689
    %1811 = vmatpush.bf16.msra.mxu0 %v1688
    %1812 = vmatpush.bf16.msra.mxu0 %v1687
    %1813 = vmatpush.bf16.msra.mxu0 %v1686
    %1814 = vmatpush.bf16.msra.mxu0 %v1685
    %1815 = vmatpush.bf16.msra.mxu0 %v1684
    %1816 = vmatpush.bf16.msra.mxu0 %v1683
    %1817 = vmatmul.bf16.gmra.mxu0 %v1454
    %v1818 = vpop.f32.mrf.mxu0
    %v1819 = vadd.f32 %v1806, %v1818
    %v1820 = vpop.f32.mrf.mxu0
    %1821 = vdwg.mxu0
    %1822 = vmatpush.bf16.msra.mxu0 %v1755
    %1823 = vmatpush.bf16.msra.mxu0 %v1697
    %1824 = vmatpush.bf16.msra.mxu0 %v1696
    %1825 = vmatpush.bf16.msra.mxu0 %v1695
    %1826 = vmatpush.bf16.msra.mxu0 %v1694
    %1827 = vmatpush.bf16.msra.mxu0 %v1693
    %1828 = vmatpush.bf16.msra.mxu0 %v1692
    %1829 = vmatpush.bf16.msra.mxu0 %v1691
    %1830 = vmatmul.bf16.gmra.mxu0 %v1748
    %v1831 = vpop.f32.mrf.mxu0
    %v1832 = vadd.f32 %v1819, %v1831
    %v1833 = vpop.f32.mrf.mxu0
    %1834 = vdwg.mxu0
    %v1835 = vmax.f32 %v1832, 0.0
    %v1836 = vpack.c.bf16 %v1835, %v1835
    %v1837 = vld [vmem:[#allocation8] sm:$0xf]
    %v1838 = vld [vmem:[#allocation8 + $0x4] sm:$0xf]
    %v1839 = vld [vmem:[#allocation8 + $0x8] sm:$0xf]
    %v1840 = vld [vmem:[#allocation8 + $0xc] sm:$0xf]
    %v1841 = vld [vmem:[#allocation8 + $0x10] sm:$0xf]
    %v1842 = vld [vmem:[#allocation8 + $0x14] sm:$0xf]
    %v1843 = vld [vmem:[#allocation8 + $0x18] sm:$0xf]
    %v1844 = vld [vmem:[#allocation8 + $0x1c] sm:$0xf]
    %v1845 = vld [vmem:[#allocation8 + $0x20] sm:$0xf]
    %v1846 = vld [vmem:[#allocation8 + $0x24] sm:$0xf]
    %v1847 = vld [vmem:[#allocation8 + $0x28] sm:$0xf]
    %v1848 = vld [vmem:[#allocation8 + $0x2c] sm:$0xf]
    %v1849 = vld [vmem:[#allocation8 + $0x30] sm:$0xf]
    %v1850 = vld [vmem:[#allocation8 + $0x34] sm:$0xf]
    %v1851 = vld [vmem:[#allocation8 + $0x38] sm:$0xf]
    %v1852 = vld [vmem:[#allocation8 + $0x3c] sm:$0xf]
    %v1853 = vld [vmem:[%s5] sm:$0x1]
    %v1855 = vperm.slane %v1853, 0
    %v1873 = vunpack.c.l.b16 %v1837
    %v1874 = vunpack.c.l.b16 %v1838
    %v1875 = vunpack.c.l.b16 %v1839
    %v1876 = vunpack.c.l.b16 %v1840
    %v1877 = vunpack.c.l.b16 %v1841
    %v1878 = vunpack.c.l.b16 %v1842
    %v1879 = vunpack.c.l.b16 %v1843
    %v1880 = vunpack.c.l.b16 %v1844
    %v1881 = vunpack.c.l.b16 %v1845
    %v1882 = vunpack.c.l.b16 %v1846
    %v1883 = vunpack.c.l.b16 %v1847
    %v1884 = vunpack.c.l.b16 %v1848
    %v1885 = vunpack.c.l.b16 %v1849
    %v1886 = vunpack.c.l.b16 %v1850
    %v1887 = vunpack.c.l.b16 %v1851
    %v1888 = vunpack.c.l.b16 %v1852
    %v1889 = vpack.c.b16 %v1874, %v1873
    %v1890 = vpack.c.b16 %v1876, %v1875
    %v1891 = vpack.c.b16 %v1878, %v1877
    %v1892 = vpack.c.b16 %v1880, %v1879
    %v1893 = vpack.c.b16 %v1882, %v1881
    %v1894 = vpack.c.b16 %v1884, %v1883
    %v1895 = vpack.c.b16 %v1886, %v1885
    %v1896 = vpack.c.b16 %v1888, %v1887
    %1905 = vmatpush.bf16.msra.mxu0 %v1896
    %1906 = vmatpush.bf16.msra.mxu0 %v1895
    %1907 = vmatpush.bf16.msra.mxu0 %v1894
    %1908 = vmatpush.bf16.msra.mxu0 %v1893
    %1909 = vmatpush.bf16.msra.mxu0 %v1892
    %1910 = vmatpush.bf16.msra.mxu0 %v1891
    %1911 = vmatpush.bf16.msra.mxu0 %v1890
    %1912 = vmatpush.bf16.msra.mxu0 %v1889
    %1913 = vmatmul.bf16.gmra.mxu0 %v1836
    %v1914 = vpop.f32.mrf.mxu0
    %v1915 = vadd.f32 %v1855, %v1914
    %v1916 = vpop.f32.mrf.mxu0
    %1917 = vdwg.mxu0
    %v1918 = vpack.c.bf16 %v1915, %v1915
    %1919 = vst [vmem:[#allocation10] sm:$0xf] %v1918
    // Predicated region
    $region42: #{tpu_custom_call.1} parent=1 // pred_check
      _
    $region43: #{tpu_custom_call.1} parent=1 // pred_check_branch
      %1921 = sbr.rel (0) target = $region45
    $region44: #{tpu_custom_call.1} parent=1 // pred_region
      %1923 = vsyncadd [#allocation4], 0
      %s1925 = sshll.u32 [#allocation10], 4
      %s1926 = int_to_ptr.vmem [resolvable:$true] %s1925
      %s1927 = sshll.u32 %s6, 4
      %s1928 = int_to_ptr.hbm [resolvable:$true] %s1927
      %1930 = dma.vmem_to_hbm [thread:$0]  %s1926, 64, %s1928, [#allocation4]
    $region45: #{tpu_custom_call.1} parent=1 // pred_fallthru
      _
    // Predicated region
    $region46: #{tpu_custom_call.1} parent=1 // pred_check
      _
    $region47: #{tpu_custom_call.1} parent=1 // pred_check_branch
      %1932 = sbr.rel (0) target = $region49
    $region48: #{tpu_custom_call.1} parent=1 // pred_region
      %1934 = dma.done [#allocation4], 64
    $region49: #{tpu_custom_call.1} parent=1 // pred_fallthru
      _
    %1935 = vsyncpa [#allocation3], 1
    %1936 = vsyncpa [#allocation6], 1
    %1937 = vsyncpa [#allocation9], 1
    %1938 = vsyncpa [#allocation4], 1

</llo_original>
